<compile_context>
chip_gen: v5e
topology: v5e:2x2
jax: 0.10.0
libtpu: 0.0.40
codegen_flags: <defaults>
</compile_context>

<pallas_src>
import math

import jax
import jax.numpy as jnp
from jax.experimental import pallas as pl
from jax.experimental.pallas import tpu as pltpu

NEG_SLOPE = 0.8664262

C_IN, C_OUT = 30, 30
KH, KW = 8, 4
SH, SW = 2, 1
PH, PW = 4, 2

CP = 32                  # C_IN padded 30 -> 32 so one kh tap spans KW*CP = 128 columns
COUT_PAD = 128           # C_OUT padded 30 -> 128: lane-dense output stores
K_TAP = KW * CP          # 128
K_TOTAL = KH * K_TAP     # 1024 (128-aligned fused-K layout)


def _make_kernel(toh, ow_pad):
    """Kernel for one (batch sample, block of `toh` output rows)."""
    m = toh * ow_pad   # matmul rows per grid step; ow_pad % 8 == 0 -> m % 8 == 0

    def kernel(xe_ref, xo_ref, w_ref, b_ref, o_ref, patch_ref):
        # xe_ref/xo_ref: (HP, WP, CP) even/odd input-row planes (resident per sample)
        # w_ref: (K_TOTAL, COUT_PAD) packed conv weight (resident)
        # b_ref: (1, COUT_PAD)
        # o_ref: (toh, ow_pad, COUT_PAD)
        # patch_ref: (m, K_TOTAL) VMEM scratch -- the fused-im2col patch tile
        j = pl.program_id(1)
        row0 = j * toh                      # first output row of this block

        # ---- fused im2col: build the patch tile in VMEM with static slices ----
        for kh in range(KH):
            plane = xe_ref if (kh % 2 == 0) else xo_ref
            r0 = row0 + (kh // 2)           # stride-2 rows are contiguous in the parity plane
            for kw in range(KW):
                piece = plane[pl.ds(r0, toh), pl.ds(kw, ow_pad), :]   # (toh, ow_pad, CP)
                c0 = kh * K_TAP + kw * CP
                patch_ref[:, c0:c0 + CP] = piece.reshape(m, CP)

        # ---- single MXU matmul + bias + leaky-relu-like where ----
        acc = jnp.dot(patch_ref[...], w_ref[...], preferred_element_type=jnp.float32)
        acc = acc + b_ref[...]
        acc = jnp.where(acc > 0, acc, acc * NEG_SLOPE)
        o_ref[...] = acc.reshape(toh, ow_pad, COUT_PAD)

    return kernel


def conv_leakyrelu(x, weight, bias, target_rows=512):
    """x: (N, 30, H, W); weight: (30, 30, 8, 4); bias: (30,) -> (N, 30, OH, OW)."""
    n, cin, h, w = x.shape
    assert cin == C_IN
    oh = (h + 2 * PH - KH) // SH + 1
    ow = (w + 2 * PW - KW) // SW + 1

    ow_pad = ((ow + 7) // 8) * 8                  # 8-aligned output width
    wp = ow_pad + (KW - 1)                        # padded input width seen by kernel
    toh = max(1, min(oh, math.ceil(target_rows / ow_pad)))   # output rows per grid step
    jb = math.ceil(oh / toh)
    oh_pad = jb * toh
    hp = oh_pad + (KH - SH) // 2                  # rows per parity plane
    h_need = 2 * hp                               # padded input rows the kernel touches

    # NCHW -> NHWC, embed into zero canvas (spatial pad + channel pad 30->32),
    # then split into even/odd H planes (stride-2 rows -> contiguous slices in-kernel).
    x_nhwc = jnp.transpose(x.astype(jnp.float32), (0, 2, 3, 1))
    canvas = jnp.zeros((n, h_need, wp, CP), jnp.float32)
    canvas = canvas.at[:, PH:PH + h, PW:PW + w, :C_IN].set(x_nhwc)
    x_even = canvas[:, 0::2]                      # (n, hp, wp, CP)
    x_odd = canvas[:, 1::2]                       # (n, hp, wp, CP)

    # Pack weights once: (C_OUT, C_IN, KH, KW) -> (KH*KW*CP, COUT_PAD), columns (kh, kw, ci).
    w_t = jnp.transpose(weight.astype(jnp.float32), (2, 3, 1, 0))   # (KH, KW, C_IN, C_OUT)
    w_t = jnp.pad(w_t, ((0, 0), (0, 0), (0, CP - C_IN), (0, COUT_PAD - C_OUT)))
    w_packed = w_t.reshape(K_TOTAL, COUT_PAD)
    b_packed = jnp.pad(bias.astype(jnp.float32), (0, COUT_PAD - C_OUT)).reshape(1, COUT_PAD)

    m = toh * ow_pad
    out = pl.pallas_call(
        _make_kernel(toh, ow_pad),
        out_shape=jax.ShapeDtypeStruct((n, oh_pad, ow_pad, COUT_PAD), jnp.float32),
        grid_spec=pltpu.PrefetchScalarGridSpec(
            num_scalar_prefetch=0,
            grid=(n, jb),
            in_specs=[
                # Full (even/odd) plane of the current sample; index ignores j, so it is
                # DMA'd once per sample and stays resident across the row-tile loop.
                pl.BlockSpec((None, hp, wp, CP), lambda b, j: (b, 0, 0, 0)),
                pl.BlockSpec((None, hp, wp, CP), lambda b, j: (b, 0, 0, 0)),
                pl.BlockSpec((K_TOTAL, COUT_PAD), lambda b, j: (0, 0)),
                pl.BlockSpec((1, COUT_PAD), lambda b, j: (0, 0)),
            ],
            out_specs=pl.BlockSpec((None, toh, ow_pad, COUT_PAD), lambda b, j: (b, j, 0, 0)),
            scratch_shapes=[pltpu.VMEM((m, K_TOTAL), jnp.float32)],
        ),
        compiler_params=pltpu.CompilerParams(
            dimension_semantics=("parallel", "parallel")),
    )(x_even, x_odd, w_packed, b_packed)

    out = out[:, :oh, :ow, :C_OUT]            # drop padded rows / cols / channels
    return jnp.transpose(out, (0, 3, 1, 2))   # back to NCHW to match PyTorch


def _reference(x, weight, bias):
    """Pure-JAX reference using lax.conv_general_dilated (NCHW / OIHW)."""
    y = jax.lax.conv_general_dilated(
        x.astype(jnp.float32), weight.astype(jnp.float32),
        window_strides=(SH, SW), padding=((PH, PH), (PW, PW)),
        dimension_numbers=("NCHW", "OIHW", "NCHW"))
    y = y + bias.reshape(1, C_OUT, 1, 1)
    return jnp.where(y > 0, y, y * NEG_SLOPE)


if __name__ == "__main__":
    key = jax.random.PRNGKey(0)
    kx, kw_, kb = jax.random.split(key, 3)

    N, H, W = 2, 16, 16
    x = jax.random.normal(kx, (N, C_IN, H, W), dtype=jnp.float32)

    fan_in = C_IN * KH * KW
    bound = 1.0 / (fan_in ** 0.5)
    weight = jax.random.uniform(kw_, (C_OUT, C_IN, KH, KW),
                                minval=-bound, maxval=bound, dtype=jnp.float32)
    bias = jax.random.uniform(kb, (C_OUT,), minval=-bound, maxval=bound,
                              dtype=jnp.float32)

    out = jax.block_until_ready(conv_leakyrelu(x, weight, bias))
    ref = jax.block_until_ready(_reference(x, weight, bias))
    assert out.shape == ref.shape, (out.shape, ref.shape)
    assert jnp.allclose(out, ref, atol=1e-4, rtol=1e-4), \
        float(jnp.max(jnp.abs(out - ref)))

    print("KERNEL_OK")
</pallas_src>

<mosaic_0001>
module attributes {stable_mosaic.version = 11 : i64} {
  func.func @kernel(%arg0: i32, %arg1: i32, %arg2: memref<1x12x27x32xf32, #tpu.memory_space<vmem>>, %arg3: memref<1x12x27x32xf32, #tpu.memory_space<vmem>>, %arg4: memref<1024x128xf32, #tpu.memory_space<vmem>>, %arg5: memref<1x128xf32, #tpu.memory_space<vmem>>, %arg6: memref<1x9x24x128xf32, #tpu.memory_space<vmem>>, %arg7: memref<216x1024xf32, #tpu.memory_space<vmem>>) attributes {dimension_semantics = [#tpu.dimension_semantics<parallel>, #tpu.dimension_semantics<parallel>], iteration_bounds = array<i64: 2, 1>, scalar_prefetch = 0 : i64, scratch_operands = 1 : i64, tpu.core_type = #tpu.core_type<tc>, window_params = [{transform_indices = @transform_0, window_bounds = array<i64: 1, 12, 27, 32>}, {transform_indices = @transform_1, window_bounds = array<i64: 1, 12, 27, 32>}, {pipeline_mode = #tpu.pipeline_mode<synchronous>, transform_indices = @transform_2, window_bounds = array<i64: 1024, 128>}, {pipeline_mode = #tpu.pipeline_mode<synchronous>, transform_indices = @transform_3, window_bounds = array<i64: 1, 128>}, {transform_indices = @transform_4, window_bounds = array<i64: 1, 9, 24, 128>}]} {
    %c9_i32 = arith.constant 9 : i32
    %0 = arith.muli %arg1, %c9_i32 : i32
    %c0_i32 = arith.constant 0 : i32
    %1 = arith.addi %0, %c0_i32 : i32
    %c0 = arith.constant 0 : index
    %2 = arith.index_cast %1 : i32 to index
    %c0_0 = arith.constant 0 : index
    %c0_1 = arith.constant 0 : index
    %3 = vector.load %arg2[%c0, %2, %c0_0, %c0_1] : memref<1x12x27x32xf32, #tpu.memory_space<vmem>>, vector<1x9x24x32xf32>
    %4 = vector.shape_cast %3 : vector<1x9x24x32xf32> to vector<9x24x32xf32>
    %5 = vector.shape_cast %4 : vector<9x24x32xf32> to vector<216x32xf32>
    %c0_2 = arith.constant 0 : index
    %c0_3 = arith.constant 0 : index
    %6 = vector.load %arg7[%c0_2, %c0_3] : memref<216x1024xf32, #tpu.memory_space<vmem>>, vector<216x32xf32>
    tpu.vector_store %arg7[%c0_2, %c0_3], %5 {strides = array<i32>} : memref<216x1024xf32, #tpu.memory_space<vmem>>, vector<216x32xf32>,
    %c0_4 = arith.constant 0 : index
    %7 = arith.index_cast %1 : i32 to index
    %c1 = arith.constant 1 : index
    %c0_5 = arith.constant 0 : index
    %8 = vector.load %arg2[%c0_4, %7, %c1, %c0_5] : memref<1x12x27x32xf32, #tpu.memory_space<vmem>>, vector<1x9x24x32xf32>
    %9 = vector.shape_cast %8 : vector<1x9x24x32xf32> to vector<9x24x32xf32>
    %10 = vector.shape_cast %9 : vector<9x24x32xf32> to vector<216x32xf32>
    %c0_6 = arith.constant 0 : index
    %c32 = arith.constant 32 : index
    %11 = vector.load %arg7[%c0_6, %c32] : memref<216x1024xf32, #tpu.memory_space<vmem>>, vector<216x32xf32>
    tpu.vector_store %arg7[%c0_6, %c32], %10 {strides = array<i32>} : memref<216x1024xf32, #tpu.memory_space<vmem>>, vector<216x32xf32>,
    %c0_7 = arith.constant 0 : index
    %12 = arith.index_cast %1 : i32 to index
    %c2 = arith.constant 2 : index
    %c0_8 = arith.constant 0 : index
    %13 = vector.load %arg2[%c0_7, %12, %c2, %c0_8] : memref<1x12x27x32xf32, #tpu.memory_space<vmem>>, vector<1x9x24x32xf32>
    %14 = vector.shape_cast %13 : vector<1x9x24x32xf32> to vector<9x24x32xf32>
    %15 = vector.shape_cast %14 : vector<9x24x32xf32> to vector<216x32xf32>
    %c0_9 = arith.constant 0 : index
    %c64 = arith.constant 64 : index
    %16 = vector.load %arg7[%c0_9, %c64] : memref<216x1024xf32, #tpu.memory_space<vmem>>, vector<216x32xf32>
    tpu.vector_store %arg7[%c0_9, %c64], %15 {strides = array<i32>} : memref<216x1024xf32, #tpu.memory_space<vmem>>, vector<216x32xf32>,
    %c0_10 = arith.constant 0 : index
    %17 = arith.index_cast %1 : i32 to index
    %c3 = arith.constant 3 : index
    %c0_11 = arith.constant 0 : index
    %18 = vector.load %arg2[%c0_10, %17, %c3, %c0_11] : memref<1x12x27x32xf32, #tpu.memory_space<vmem>>, vector<1x9x24x32xf32>
    %19 = vector.shape_cast %18 : vector<1x9x24x32xf32> to vector<9x24x32xf32>
    %20 = vector.shape_cast %19 : vector<9x24x32xf32> to vector<216x32xf32>
    %c0_12 = arith.constant 0 : index
    %c96 = arith.constant 96 : index
    %21 = vector.load %arg7[%c0_12, %c96] : memref<216x1024xf32, #tpu.memory_space<vmem>>, vector<216x32xf32>
    tpu.vector_store %arg7[%c0_12, %c96], %20 {strides = array<i32>} : memref<216x1024xf32, #tpu.memory_space<vmem>>, vector<216x32xf32>,
    %c0_i32_13 = arith.constant 0 : i32
    %22 = arith.addi %0, %c0_i32_13 : i32
    %c0_14 = arith.constant 0 : index
    %23 = arith.index_cast %22 : i32 to index
    %c0_15 = arith.constant 0 : index
    %c0_16 = arith.constant 0 : index
    %24 = vector.load %arg3[%c0_14, %23, %c0_15, %c0_16] : memref<1x12x27x32xf32, #tpu.memory_space<vmem>>, vector<1x9x24x32xf32>
    %25 = vector.shape_cast %24 : vector<1x9x24x32xf32> to vector<9x24x32xf32>
    %26 = vector.shape_cast %25 : vector<9x24x32xf32> to vector<216x32xf32>
    %c0_17 = arith.constant 0 : index
    %c128 = arith.constant 128 : index
    %27 = vector.load %arg7[%c0_17, %c128] : memref<216x1024xf32, #tpu.memory_space<vmem>>, vector<216x32xf32>
    tpu.vector_store %arg7[%c0_17, %c128], %26 {strides = array<i32>} : memref<216x1024xf32, #tpu.memory_space<vmem>>, vector<216x32xf32>,
    %c0_18 = arith.constant 0 : index
    %28 = arith.index_cast %22 : i32 to index
    %c1_19 = arith.constant 1 : index
    %c0_20 = arith.constant 0 : index
    %29 = vector.load %arg3[%c0_18, %28, %c1_19, %c0_20] : memref<1x12x27x32xf32, #tpu.memory_space<vmem>>, vector<1x9x24x32xf32>
    %30 = vector.shape_cast %29 : vector<1x9x24x32xf32> to vector<9x24x32xf32>
    %31 = vector.shape_cast %30 : vector<9x24x32xf32> to vector<216x32xf32>
    %c0_21 = arith.constant 0 : index
    %c160 = arith.constant 160 : index
    %32 = vector.load %arg7[%c0_21, %c160] : memref<216x1024xf32, #tpu.memory_space<vmem>>, vector<216x32xf32>
    tpu.vector_store %arg7[%c0_21, %c160], %31 {strides = array<i32>} : memref<216x1024xf32, #tpu.memory_space<vmem>>, vector<216x32xf32>,
    %c0_22 = arith.constant 0 : index
    %33 = arith.index_cast %22 : i32 to index
    %c2_23 = arith.constant 2 : index
    %c0_24 = arith.constant 0 : index
    %34 = vector.load %arg3[%c0_22, %33, %c2_23, %c0_24] : memref<1x12x27x32xf32, #tpu.memory_space<vmem>>, vector<1x9x24x32xf32>
    %35 = vector.shape_cast %34 : vector<1x9x24x32xf32> to vector<9x24x32xf32>
    %36 = vector.shape_cast %35 : vector<9x24x32xf32> to vector<216x32xf32>
    %c0_25 = arith.constant 0 : index
    %c192 = arith.constant 192 : index
    %37 = vector.load %arg7[%c0_25, %c192] : memref<216x1024xf32, #tpu.memory_space<vmem>>, vector<216x32xf32>
    tpu.vector_store %arg7[%c0_25, %c192], %36 {strides = array<i32>} : memref<216x1024xf32, #tpu.memory_space<vmem>>, vector<216x32xf32>,
    %c0_26 = arith.constant 0 : index
    %38 = arith.index_cast %22 : i32 to index
    %c3_27 = arith.constant 3 : index
    %c0_28 = arith.constant 0 : index
    %39 = vector.load %arg3[%c0_26, %38, %c3_27, %c0_28] : memref<1x12x27x32xf32, #tpu.memory_space<vmem>>, vector<1x9x24x32xf32>
    %40 = vector.shape_cast %39 : vector<1x9x24x32xf32> to vector<9x24x32xf32>
    %41 = vector.shape_cast %40 : vector<9x24x32xf32> to vector<216x32xf32>
    %c0_29 = arith.constant 0 : index
    %c224 = arith.constant 224 : index
    %42 = vector.load %arg7[%c0_29, %c224] : memref<216x1024xf32, #tpu.memory_space<vmem>>, vector<216x32xf32>
    tpu.vector_store %arg7[%c0_29, %c224], %41 {strides = array<i32>} : memref<216x1024xf32, #tpu.memory_space<vmem>>, vector<216x32xf32>,
    %c1_i32 = arith.constant 1 : i32
    %43 = arith.addi %0, %c1_i32 : i32
    %c0_30 = arith.constant 0 : index
    %44 = arith.index_cast %43 : i32 to index
    %c0_31 = arith.constant 0 : index
    %c0_32 = arith.constant 0 : index
    %45 = vector.load %arg2[%c0_30, %44, %c0_31, %c0_32] : memref<1x12x27x32xf32, #tpu.memory_space<vmem>>, vector<1x9x24x32xf32>
    %46 = vector.shape_cast %45 : vector<1x9x24x32xf32> to vector<9x24x32xf32>
    %47 = vector.shape_cast %46 : vector<9x24x32xf32> to vector<216x32xf32>
    %c0_33 = arith.constant 0 : index
    %c256 = arith.constant 256 : index
    %48 = vector.load %arg7[%c0_33, %c256] : memref<216x1024xf32, #tpu.memory_space<vmem>>, vector<216x32xf32>
    tpu.vector_store %arg7[%c0_33, %c256], %47 {strides = array<i32>} : memref<216x1024xf32, #tpu.memory_space<vmem>>, vector<216x32xf32>,
    %c0_34 = arith.constant 0 : index
    %49 = arith.index_cast %43 : i32 to index
    %c1_35 = arith.constant 1 : index
    %c0_36 = arith.constant 0 : index
    %50 = vector.load %arg2[%c0_34, %49, %c1_35, %c0_36] : memref<1x12x27x32xf32, #tpu.memory_space<vmem>>, vector<1x9x24x32xf32>
    %51 = vector.shape_cast %50 : vector<1x9x24x32xf32> to vector<9x24x32xf32>
    %52 = vector.shape_cast %51 : vector<9x24x32xf32> to vector<216x32xf32>
    %c0_37 = arith.constant 0 : index
    %c288 = arith.constant 288 : index
    %53 = vector.load %arg7[%c0_37, %c288] : memref<216x1024xf32, #tpu.memory_space<vmem>>, vector<216x32xf32>
    tpu.vector_store %arg7[%c0_37, %c288], %52 {strides = array<i32>} : memref<216x1024xf32, #tpu.memory_space<vmem>>, vector<216x32xf32>,
    %c0_38 = arith.constant 0 : index
    %54 = arith.index_cast %43 : i32 to index
    %c2_39 = arith.constant 2 : index
    %c0_40 = arith.constant 0 : index
    %55 = vector.load %arg2[%c0_38, %54, %c2_39, %c0_40] : memref<1x12x27x32xf32, #tpu.memory_space<vmem>>, vector<1x9x24x32xf32>
    %56 = vector.shape_cast %55 : vector<1x9x24x32xf32> to vector<9x24x32xf32>
    %57 = vector.shape_cast %56 : vector<9x24x32xf32> to vector<216x32xf32>
    %c0_41 = arith.constant 0 : index
    %c320 = arith.constant 320 : index
    %58 = vector.load %arg7[%c0_41, %c320] : memref<216x1024xf32, #tpu.memory_space<vmem>>, vector<216x32xf32>
    tpu.vector_store %arg7[%c0_41, %c320], %57 {strides = array<i32>} : memref<216x1024xf32, #tpu.memory_space<vmem>>, vector<216x32xf32>,
    %c0_42 = arith.constant 0 : index
    %59 = arith.index_cast %43 : i32 to index
    %c3_43 = arith.constant 3 : index
    %c0_44 = arith.constant 0 : index
    %60 = vector.load %arg2[%c0_42, %59, %c3_43, %c0_44] : memref<1x12x27x32xf32, #tpu.memory_space<vmem>>, vector<1x9x24x32xf32>
    %61 = vector.shape_cast %60 : vector<1x9x24x32xf32> to vector<9x24x32xf32>
    %62 = vector.shape_cast %61 : vector<9x24x32xf32> to vector<216x32xf32>
    %c0_45 = arith.constant 0 : index
    %c352 = arith.constant 352 : index
    %63 = vector.load %arg7[%c0_45, %c352] : memref<216x1024xf32, #tpu.memory_space<vmem>>, vector<216x32xf32>
    tpu.vector_store %arg7[%c0_45, %c352], %62 {strides = array<i32>} : memref<216x1024xf32, #tpu.memory_space<vmem>>, vector<216x32xf32>,
    %c1_i32_46 = arith.constant 1 : i32
    %64 = arith.addi %0, %c1_i32_46 : i32
    %c0_47 = arith.constant 0 : index
    %65 = arith.index_cast %64 : i32 to index
    %c0_48 = arith.constant 0 : index
    %c0_49 = arith.constant 0 : index
    %66 = vector.load %arg3[%c0_47, %65, %c0_48, %c0_49] : memref<1x12x27x32xf32, #tpu.memory_space<vmem>>, vector<1x9x24x32xf32>
    %67 = vector.shape_cast %66 : vector<1x9x24x32xf32> to vector<9x24x32xf32>
    %68 = vector.shape_cast %67 : vector<9x24x32xf32> to vector<216x32xf32>
    %c0_50 = arith.constant 0 : index
    %c384 = arith.constant 384 : index
    %69 = vector.load %arg7[%c0_50, %c384] : memref<216x1024xf32, #tpu.memory_space<vmem>>, vector<216x32xf32>
    tpu.vector_store %arg7[%c0_50, %c384], %68 {strides = array<i32>} : memref<216x1024xf32, #tpu.memory_space<vmem>>, vector<216x32xf32>,
    %c0_51 = arith.constant 0 : index
    %70 = arith.index_cast %64 : i32 to index
    %c1_52 = arith.constant 1 : index
    %c0_53 = arith.constant 0 : index
    %71 = vector.load %arg3[%c0_51, %70, %c1_52, %c0_53] : memref<1x12x27x32xf32, #tpu.memory_space<vmem>>, vector<1x9x24x32xf32>
    %72 = vector.shape_cast %71 : vector<1x9x24x32xf32> to vector<9x24x32xf32>
    %73 = vector.shape_cast %72 : vector<9x24x32xf32> to vector<216x32xf32>
    %c0_54 = arith.constant 0 : index
    %c416 = arith.constant 416 : index
    %74 = vector.load %arg7[%c0_54, %c416] : memref<216x1024xf32, #tpu.memory_space<vmem>>, vector<216x32xf32>
    tpu.vector_store %arg7[%c0_54, %c416], %73 {strides = array<i32>} : memref<216x1024xf32, #tpu.memory_space<vmem>>, vector<216x32xf32>,
    %c0_55 = arith.constant 0 : index
    %75 = arith.index_cast %64 : i32 to index
    %c2_56 = arith.constant 2 : index
    %c0_57 = arith.constant 0 : index
    %76 = vector.load %arg3[%c0_55, %75, %c2_56, %c0_57] : memref<1x12x27x32xf32, #tpu.memory_space<vmem>>, vector<1x9x24x32xf32>
    %77 = vector.shape_cast %76 : vector<1x9x24x32xf32> to vector<9x24x32xf32>
    %78 = vector.shape_cast %77 : vector<9x24x32xf32> to vector<216x32xf32>
    %c0_58 = arith.constant 0 : index
    %c448 = arith.constant 448 : index
    %79 = vector.load %arg7[%c0_58, %c448] : memref<216x1024xf32, #tpu.memory_space<vmem>>, vector<216x32xf32>
    tpu.vector_store %arg7[%c0_58, %c448], %78 {strides = array<i32>} : memref<216x1024xf32, #tpu.memory_space<vmem>>, vector<216x32xf32>,
    %c0_59 = arith.constant 0 : index
    %80 = arith.index_cast %64 : i32 to index
    %c3_60 = arith.constant 3 : index
    %c0_61 = arith.constant 0 : index
    %81 = vector.load %arg3[%c0_59, %80, %c3_60, %c0_61] : memref<1x12x27x32xf32, #tpu.memory_space<vmem>>, vector<1x9x24x32xf32>
    %82 = vector.shape_cast %81 : vector<1x9x24x32xf32> to vector<9x24x32xf32>
    %83 = vector.shape_cast %82 : vector<9x24x32xf32> to vector<216x32xf32>
    %c0_62 = arith.constant 0 : index
    %c480 = arith.constant 480 : index
    %84 = vector.load %arg7[%c0_62, %c480] : memref<216x1024xf32, #tpu.memory_space<vmem>>, vector<216x32xf32>
    tpu.vector_store %arg7[%c0_62, %c480], %83 {strides = array<i32>} : memref<216x1024xf32, #tpu.memory_space<vmem>>, vector<216x32xf32>,
    %c2_i32 = arith.constant 2 : i32
    %85 = arith.addi %0, %c2_i32 : i32
    %c0_63 = arith.constant 0 : index
    %86 = arith.index_cast %85 : i32 to index
    %c0_64 = arith.constant 0 : index
    %c0_65 = arith.constant 0 : index
    %87 = vector.load %arg2[%c0_63, %86, %c0_64, %c0_65] : memref<1x12x27x32xf32, #tpu.memory_space<vmem>>, vector<1x9x24x32xf32>
    %88 = vector.shape_cast %87 : vector<1x9x24x32xf32> to vector<9x24x32xf32>
    %89 = vector.shape_cast %88 : vector<9x24x32xf32> to vector<216x32xf32>
    %c0_66 = arith.constant 0 : index
    %c512 = arith.constant 512 : index
    %90 = vector.load %arg7[%c0_66, %c512] : memref<216x1024xf32, #tpu.memory_space<vmem>>, vector<216x32xf32>
    tpu.vector_store %arg7[%c0_66, %c512], %89 {strides = array<i32>} : memref<216x1024xf32, #tpu.memory_space<vmem>>, vector<216x32xf32>,
    %c0_67 = arith.constant 0 : index
    %91 = arith.index_cast %85 : i32 to index
    %c1_68 = arith.constant 1 : index
    %c0_69 = arith.constant 0 : index
    %92 = vector.load %arg2[%c0_67, %91, %c1_68, %c0_69] : memref<1x12x27x32xf32, #tpu.memory_space<vmem>>, vector<1x9x24x32xf32>
    %93 = vector.shape_cast %92 : vector<1x9x24x32xf32> to vector<9x24x32xf32>
    %94 = vector.shape_cast %93 : vector<9x24x32xf32> to vector<216x32xf32>
    %c0_70 = arith.constant 0 : index
    %c544 = arith.constant 544 : index
    %95 = vector.load %arg7[%c0_70, %c544] : memref<216x1024xf32, #tpu.memory_space<vmem>>, vector<216x32xf32>
    tpu.vector_store %arg7[%c0_70, %c544], %94 {strides = array<i32>} : memref<216x1024xf32, #tpu.memory_space<vmem>>, vector<216x32xf32>,
    %c0_71 = arith.constant 0 : index
    %96 = arith.index_cast %85 : i32 to index
    %c2_72 = arith.constant 2 : index
    %c0_73 = arith.constant 0 : index
    %97 = vector.load %arg2[%c0_71, %96, %c2_72, %c0_73] : memref<1x12x27x32xf32, #tpu.memory_space<vmem>>, vector<1x9x24x32xf32>
    %98 = vector.shape_cast %97 : vector<1x9x24x32xf32> to vector<9x24x32xf32>
    %99 = vector.shape_cast %98 : vector<9x24x32xf32> to vector<216x32xf32>
    %c0_74 = arith.constant 0 : index
    %c576 = arith.constant 576 : index
    %100 = vector.load %arg7[%c0_74, %c576] : memref<216x1024xf32, #tpu.memory_space<vmem>>, vector<216x32xf32>
    tpu.vector_store %arg7[%c0_74, %c576], %99 {strides = array<i32>} : memref<216x1024xf32, #tpu.memory_space<vmem>>, vector<216x32xf32>,
    %c0_75 = arith.constant 0 : index
    %101 = arith.index_cast %85 : i32 to index
    %c3_76 = arith.constant 3 : index
    %c0_77 = arith.constant 0 : index
    %102 = vector.load %arg2[%c0_75, %101, %c3_76, %c0_77] : memref<1x12x27x32xf32, #tpu.memory_space<vmem>>, vector<1x9x24x32xf32>
    %103 = vector.shape_cast %102 : vector<1x9x24x32xf32> to vector<9x24x32xf32>
    %104 = vector.shape_cast %103 : vector<9x24x32xf32> to vector<216x32xf32>
    %c0_78 = arith.constant 0 : index
    %c608 = arith.constant 608 : index
    %105 = vector.load %arg7[%c0_78, %c608] : memref<216x1024xf32, #tpu.memory_space<vmem>>, vector<216x32xf32>
    tpu.vector_store %arg7[%c0_78, %c608], %104 {strides = array<i32>} : memref<216x1024xf32, #tpu.memory_space<vmem>>, vector<216x32xf32>,
    %c2_i32_79 = arith.constant 2 : i32
    %106 = arith.addi %0, %c2_i32_79 : i32
    %c0_80 = arith.constant 0 : index
    %107 = arith.index_cast %106 : i32 to index
    %c0_81 = arith.constant 0 : index
    %c0_82 = arith.constant 0 : index
    %108 = vector.load %arg3[%c0_80, %107, %c0_81, %c0_82] : memref<1x12x27x32xf32, #tpu.memory_space<vmem>>, vector<1x9x24x32xf32>
    %109 = vector.shape_cast %108 : vector<1x9x24x32xf32> to vector<9x24x32xf32>
    %110 = vector.shape_cast %109 : vector<9x24x32xf32> to vector<216x32xf32>
    %c0_83 = arith.constant 0 : index
    %c640 = arith.constant 640 : index
    %111 = vector.load %arg7[%c0_83, %c640] : memref<216x1024xf32, #tpu.memory_space<vmem>>, vector<216x32xf32>
    tpu.vector_store %arg7[%c0_83, %c640], %110 {strides = array<i32>} : memref<216x1024xf32, #tpu.memory_space<vmem>>, vector<216x32xf32>,
    %c0_84 = arith.constant 0 : index
    %112 = arith.index_cast %106 : i32 to index
    %c1_85 = arith.constant 1 : index
    %c0_86 = arith.constant 0 : index
    %113 = vector.load %arg3[%c0_84, %112, %c1_85, %c0_86] : memref<1x12x27x32xf32, #tpu.memory_space<vmem>>, vector<1x9x24x32xf32>
    %114 = vector.shape_cast %113 : vector<1x9x24x32xf32> to vector<9x24x32xf32>
    %115 = vector.shape_cast %114 : vector<9x24x32xf32> to vector<216x32xf32>
    %c0_87 = arith.constant 0 : index
    %c672 = arith.constant 672 : index
    %116 = vector.load %arg7[%c0_87, %c672] : memref<216x1024xf32, #tpu.memory_space<vmem>>, vector<216x32xf32>
    tpu.vector_store %arg7[%c0_87, %c672], %115 {strides = array<i32>} : memref<216x1024xf32, #tpu.memory_space<vmem>>, vector<216x32xf32>,
    %c0_88 = arith.constant 0 : index
    %117 = arith.index_cast %106 : i32 to index
    %c2_89 = arith.constant 2 : index
    %c0_90 = arith.constant 0 : index
    %118 = vector.load %arg3[%c0_88, %117, %c2_89, %c0_90] : memref<1x12x27x32xf32, #tpu.memory_space<vmem>>, vector<1x9x24x32xf32>
    %119 = vector.shape_cast %118 : vector<1x9x24x32xf32> to vector<9x24x32xf32>
    %120 = vector.shape_cast %119 : vector<9x24x32xf32> to vector<216x32xf32>
    %c0_91 = arith.constant 0 : index
    %c704 = arith.constant 704 : index
    %121 = vector.load %arg7[%c0_91, %c704] : memref<216x1024xf32, #tpu.memory_space<vmem>>, vector<216x32xf32>
    tpu.vector_store %arg7[%c0_91, %c704], %120 {strides = array<i32>} : memref<216x1024xf32, #tpu.memory_space<vmem>>, vector<216x32xf32>,
    %c0_92 = arith.constant 0 : index
    %122 = arith.index_cast %106 : i32 to index
    %c3_93 = arith.constant 3 : index
    %c0_94 = arith.constant 0 : index
    %123 = vector.load %arg3[%c0_92, %122, %c3_93, %c0_94] : memref<1x12x27x32xf32, #tpu.memory_space<vmem>>, vector<1x9x24x32xf32>
    %124 = vector.shape_cast %123 : vector<1x9x24x32xf32> to vector<9x24x32xf32>
    %125 = vector.shape_cast %124 : vector<9x24x32xf32> to vector<216x32xf32>
    %c0_95 = arith.constant 0 : index
    %c736 = arith.constant 736 : index
    %126 = vector.load %arg7[%c0_95, %c736] : memref<216x1024xf32, #tpu.memory_space<vmem>>, vector<216x32xf32>
    tpu.vector_store %arg7[%c0_95, %c736], %125 {strides = array<i32>} : memref<216x1024xf32, #tpu.memory_space<vmem>>, vector<216x32xf32>,
    %c3_i32 = arith.constant 3 : i32
    %127 = arith.addi %0, %c3_i32 : i32
    %c0_96 = arith.constant 0 : index
    %128 = arith.index_cast %127 : i32 to index
    %c0_97 = arith.constant 0 : index
    %c0_98 = arith.constant 0 : index
    %129 = vector.load %arg2[%c0_96, %128, %c0_97, %c0_98] : memref<1x12x27x32xf32, #tpu.memory_space<vmem>>, vector<1x9x24x32xf32>
    %130 = vector.shape_cast %129 : vector<1x9x24x32xf32> to vector<9x24x32xf32>
    %131 = vector.shape_cast %130 : vector<9x24x32xf32> to vector<216x32xf32>
    %c0_99 = arith.constant 0 : index
    %c768 = arith.constant 768 : index
    %132 = vector.load %arg7[%c0_99, %c768] : memref<216x1024xf32, #tpu.memory_space<vmem>>, vector<216x32xf32>
    tpu.vector_store %arg7[%c0_99, %c768], %131 {strides = array<i32>} : memref<216x1024xf32, #tpu.memory_space<vmem>>, vector<216x32xf32>,
    %c0_100 = arith.constant 0 : index
    %133 = arith.index_cast %127 : i32 to index
    %c1_101 = arith.constant 1 : index
    %c0_102 = arith.constant 0 : index
    %134 = vector.load %arg2[%c0_100, %133, %c1_101, %c0_102] : memref<1x12x27x32xf32, #tpu.memory_space<vmem>>, vector<1x9x24x32xf32>
    %135 = vector.shape_cast %134 : vector<1x9x24x32xf32> to vector<9x24x32xf32>
    %136 = vector.shape_cast %135 : vector<9x24x32xf32> to vector<216x32xf32>
    %c0_103 = arith.constant 0 : index
    %c800 = arith.constant 800 : index
    %137 = vector.load %arg7[%c0_103, %c800] : memref<216x1024xf32, #tpu.memory_space<vmem>>, vector<216x32xf32>
    tpu.vector_store %arg7[%c0_103, %c800], %136 {strides = array<i32>} : memref<216x1024xf32, #tpu.memory_space<vmem>>, vector<216x32xf32>,
    %c0_104 = arith.constant 0 : index
    %138 = arith.index_cast %127 : i32 to index
    %c2_105 = arith.constant 2 : index
    %c0_106 = arith.constant 0 : index
    %139 = vector.load %arg2[%c0_104, %138, %c2_105, %c0_106] : memref<1x12x27x32xf32, #tpu.memory_space<vmem>>, vector<1x9x24x32xf32>
    %140 = vector.shape_cast %139 : vector<1x9x24x32xf32> to vector<9x24x32xf32>
    %141 = vector.shape_cast %140 : vector<9x24x32xf32> to vector<216x32xf32>
    %c0_107 = arith.constant 0 : index
    %c832 = arith.constant 832 : index
    %142 = vector.load %arg7[%c0_107, %c832] : memref<216x1024xf32, #tpu.memory_space<vmem>>, vector<216x32xf32>
    tpu.vector_store %arg7[%c0_107, %c832], %141 {strides = array<i32>} : memref<216x1024xf32, #tpu.memory_space<vmem>>, vector<216x32xf32>,
    %c0_108 = arith.constant 0 : index
    %143 = arith.index_cast %127 : i32 to index
    %c3_109 = arith.constant 3 : index
    %c0_110 = arith.constant 0 : index
    %144 = vector.load %arg2[%c0_108, %143, %c3_109, %c0_110] : memref<1x12x27x32xf32, #tpu.memory_space<vmem>>, vector<1x9x24x32xf32>
    %145 = vector.shape_cast %144 : vector<1x9x24x32xf32> to vector<9x24x32xf32>
    %146 = vector.shape_cast %145 : vector<9x24x32xf32> to vector<216x32xf32>
    %c0_111 = arith.constant 0 : index
    %c864 = arith.constant 864 : index
    %147 = vector.load %arg7[%c0_111, %c864] : memref<216x1024xf32, #tpu.memory_space<vmem>>, vector<216x32xf32>
    tpu.vector_store %arg7[%c0_111, %c864], %146 {strides = array<i32>} : memref<216x1024xf32, #tpu.memory_space<vmem>>, vector<216x32xf32>,
    %c3_i32_112 = arith.constant 3 : i32
    %148 = arith.addi %0, %c3_i32_112 : i32
    %c0_113 = arith.constant 0 : index
    %149 = arith.index_cast %148 : i32 to index
    %c0_114 = arith.constant 0 : index
    %c0_115 = arith.constant 0 : index
    %150 = vector.load %arg3[%c0_113, %149, %c0_114, %c0_115] : memref<1x12x27x32xf32, #tpu.memory_space<vmem>>, vector<1x9x24x32xf32>
    %151 = vector.shape_cast %150 : vector<1x9x24x32xf32> to vector<9x24x32xf32>
    %152 = vector.shape_cast %151 : vector<9x24x32xf32> to vector<216x32xf32>
    %c0_116 = arith.constant 0 : index
    %c896 = arith.constant 896 : index
    %153 = vector.load %arg7[%c0_116, %c896] : memref<216x1024xf32, #tpu.memory_space<vmem>>, vector<216x32xf32>
    tpu.vector_store %arg7[%c0_116, %c896], %152 {strides = array<i32>} : memref<216x1024xf32, #tpu.memory_space<vmem>>, vector<216x32xf32>,
    %c0_117 = arith.constant 0 : index
    %154 = arith.index_cast %148 : i32 to index
    %c1_118 = arith.constant 1 : index
    %c0_119 = arith.constant 0 : index
    %155 = vector.load %arg3[%c0_117, %154, %c1_118, %c0_119] : memref<1x12x27x32xf32, #tpu.memory_space<vmem>>, vector<1x9x24x32xf32>
    %156 = vector.shape_cast %155 : vector<1x9x24x32xf32> to vector<9x24x32xf32>
    %157 = vector.shape_cast %156 : vector<9x24x32xf32> to vector<216x32xf32>
    %c0_120 = arith.constant 0 : index
    %c928 = arith.constant 928 : index
    %158 = vector.load %arg7[%c0_120, %c928] : memref<216x1024xf32, #tpu.memory_space<vmem>>, vector<216x32xf32>
    tpu.vector_store %arg7[%c0_120, %c928], %157 {strides = array<i32>} : memref<216x1024xf32, #tpu.memory_space<vmem>>, vector<216x32xf32>,
    %c0_121 = arith.constant 0 : index
    %159 = arith.index_cast %148 : i32 to index
    %c2_122 = arith.constant 2 : index
    %c0_123 = arith.constant 0 : index
    %160 = vector.load %arg3[%c0_121, %159, %c2_122, %c0_123] : memref<1x12x27x32xf32, #tpu.memory_space<vmem>>, vector<1x9x24x32xf32>
    %161 = vector.shape_cast %160 : vector<1x9x24x32xf32> to vector<9x24x32xf32>
    %162 = vector.shape_cast %161 : vector<9x24x32xf32> to vector<216x32xf32>
    %c0_124 = arith.constant 0 : index
    %c960 = arith.constant 960 : index
    %163 = vector.load %arg7[%c0_124, %c960] : memref<216x1024xf32, #tpu.memory_space<vmem>>, vector<216x32xf32>
    tpu.vector_store %arg7[%c0_124, %c960], %162 {strides = array<i32>} : memref<216x1024xf32, #tpu.memory_space<vmem>>, vector<216x32xf32>,
    %c0_125 = arith.constant 0 : index
    %164 = arith.index_cast %148 : i32 to index
    %c3_126 = arith.constant 3 : index
    %c0_127 = arith.constant 0 : index
    %165 = vector.load %arg3[%c0_125, %164, %c3_126, %c0_127] : memref<1x12x27x32xf32, #tpu.memory_space<vmem>>, vector<1x9x24x32xf32>
    %166 = vector.shape_cast %165 : vector<1x9x24x32xf32> to vector<9x24x32xf32>
    %167 = vector.shape_cast %166 : vector<9x24x32xf32> to vector<216x32xf32>
    %c0_128 = arith.constant 0 : index
    %c992 = arith.constant 992 : index
    %168 = vector.load %arg7[%c0_128, %c992] : memref<216x1024xf32, #tpu.memory_space<vmem>>, vector<216x32xf32>
    tpu.vector_store %arg7[%c0_128, %c992], %167 {strides = array<i32>} : memref<216x1024xf32, #tpu.memory_space<vmem>>, vector<216x32xf32>,
    %c0_129 = arith.constant 0 : index
    %c0_130 = arith.constant 0 : index
    %169 = vector.load %arg7[%c0_129, %c0_130] : memref<216x1024xf32, #tpu.memory_space<vmem>>, vector<216x1024xf32>
    %c0_131 = arith.constant 0 : index
    %c0_132 = arith.constant 0 : index
    %170 = vector.load %arg4[%c0_131, %c0_132] : memref<1024x128xf32, #tpu.memory_space<vmem>>, vector<1024x128xf32>
    %cst = arith.constant dense<0.000000e+00> : vector<216x128xf32>
    %171 = tpu.matmul %169, %170, %cst {dimension_numbers = #tpu.dot_dimension_numbers<[1], [0], [0], [1], [0, 0, 1, 1], [], []>} : vector<216x1024xf32>, vector<1024x128xf32>, vector<216x128xf32> -> vector<216x128xf32>
    %c0_133 = arith.constant 0 : index
    %c0_134 = arith.constant 0 : index
    %172 = vector.load %arg5[%c0_133, %c0_134] : memref<1x128xf32, #tpu.memory_space<vmem>>, vector<1x128xf32>
    %173 = vector.broadcast %172 : vector<1x128xf32> to vector<216x128xf32>
    %174 = arith.addf %171, %173 : vector<216x128xf32>
    %cst_135 = arith.constant 0.000000e+00 : f32
    %175 = vector.broadcast %cst_135 : f32 to vector<216x128xf32>
    %176 = arith.cmpf ogt, %174, %175 : vector<216x128xf32>
    %cst_136 = arith.constant 0.866426229 : f32
    %177 = vector.broadcast %cst_136 : f32 to vector<216x128xf32>
    %178 = arith.mulf %174, %177 : vector<216x128xf32>
    %179 = arith.select %176, %174, %178 : vector<216x128xi1>, vector<216x128xf32>
    %180 = vector.shape_cast %179 : vector<216x128xf32> to vector<9x24x128xf32>
    %c0_137 = arith.constant 0 : index
    %c0_138 = arith.constant 0 : index
    %c0_139 = arith.constant 0 : index
    %c0_140 = arith.constant 0 : index
    %181 = vector.load %arg6[%c0_137, %c0_138, %c0_139, %c0_140] : memref<1x9x24x128xf32, #tpu.memory_space<vmem>>, vector<1x9x24x128xf32>
    %182 = vector.shape_cast %181 : vector<1x9x24x128xf32> to vector<9x24x128xf32>
    %183 = vector.shape_cast %180 : vector<9x24x128xf32> to vector<1x9x24x128xf32>
    tpu.vector_store %arg6[%c0_137, %c0_138, %c0_139, %c0_140], %183 {strides = array<i32>} : memref<1x9x24x128xf32, #tpu.memory_space<vmem>>, vector<1x9x24x128xf32>,
    return
  }
  func.func @transform_0(%arg0: i32, %arg1: i32) -> (i32, i32, i32, i32) {
    %c0_i32 = arith.constant 0 : i32
    %c0_i32_0 = arith.constant 0 : i32
    %c0_i32_1 = arith.constant 0 : i32
    %c0_i32_2 = arith.constant 0 : i32
    return %arg0, %c0_i32, %c0_i32_0, %c0_i32_1 : i32, i32, i32, i32
  }
  func.func @transform_1(%arg0: i32, %arg1: i32) -> (i32, i32, i32, i32) {
    %c0_i32 = arith.constant 0 : i32
    %c0_i32_0 = arith.constant 0 : i32
    %c0_i32_1 = arith.constant 0 : i32
    %c0_i32_2 = arith.constant 0 : i32
    return %arg0, %c0_i32, %c0_i32_0, %c0_i32_1 : i32, i32, i32, i32
  }
  func.func @transform_2(%arg0: i32, %arg1: i32) -> (i32, i32) {
    %c0_i32 = arith.constant 0 : i32
    %c0_i32_0 = arith.constant 0 : i32
    %c0_i32_1 = arith.constant 0 : i32
    return %c0_i32, %c0_i32_0 : i32, i32
  }
  func.func @transform_3(%arg0: i32, %arg1: i32) -> (i32, i32) {
    %c0_i32 = arith.constant 0 : i32
    %c0_i32_0 = arith.constant 0 : i32
    %c0_i32_1 = arith.constant 0 : i32
    return %c0_i32, %c0_i32_0 : i32, i32
  }
  func.func @transform_4(%arg0: i32, %arg1: i32) -> (i32, i32, i32, i32) {
    %c0_i32 = arith.constant 0 : i32
    %c0_i32_0 = arith.constant 0 : i32
    %c0_i32_1 = arith.constant 0 : i32
    return %arg0, %arg1, %c0_i32, %c0_i32_0 : i32, i32, i32, i32
  }
}

</mosaic_0001>

<llo_original>
// kernel: tpu_custom_call.1
$region0: #{tpu_custom_call.1}
  #allocation0 [shape = 'u32[]', space=smem, size = 0x4, offset = 0x4, fixed_abs, tag = 'smem constant byte address 0x4 - core index']
  #allocation1 [shape = 'u32[72,128]{1,0:T(1,128)}', space=vmem, size = 0x9000, scoped, tag = 'internal scratch']
  #allocation2 [shape = 'f32[216,1024]{1,0:T(8,128)}', space=vmem, size = 0xd8000, scoped, tag = 'scratch operand']
  %s0 = inlined_call_operand.vmem [shape: f32[2,12,27,32], index: 0, kind: input, shape index: {}]
  %s1 = inlined_call_operand.vmem [shape: f32[2,12,27,32], index: 1, kind: input, shape index: {}]
  %s2 = inlined_call_operand.vmem [shape: f32[1024,128], index: 2, kind: input, shape index: {}]
  %s3 = inlined_call_operand.vmem [shape: f32[1,128], index: 3, kind: input, shape index: {}]
  %s4 = inlined_call_operand.hbm [shape: f32[2,9,24,128], index: 4, kind: output, shape index: {}]
  %s5 = sld [smem:[#allocation0]]
  $region49: #{tpu_custom_call.1} parent=0
    _
  %s7 = ssub.s32 1, %s5
  %s8 = scalar_select 0, %s7, %s5
  $region1: #{tpu_custom_call.1} parent=0
    #allocation3 [shape = 'u8[221184]{0}', space=vmem, size = 0x36000, scoped, tag = 'output window, operand 0']
    #allocation4 [shape = 's32[2]{0}', space=sflag, size = 0x8, scoped, tag = 'scoped memory for tpu_custom_call.1']
    %9 = vsyncpa [#allocation4], 0
    %s10 = scalar_lea.sflag [#allocation4], 1
    %11 = vsyncpa %s10, 0
    loop: start=0, step=1, limit=4
    $region2: #{tpu_custom_call.1} parent=1 // loop_pre_header
      _
    $region3: #{tpu_custom_call.1} parent=1 // loop_header
      %s13 = sphi 0, %s17
      %p14 = scmp.ge.s32.totalorder %s13, 4
      %s20 = sphi 0, %s32
      %s21 = sphi 0, %s28
      %s22 = sphi 0, %s20
      %s23 = sphi 0, %s21
      %s24 = sphi 0, %s22
      %s25 = sphi 0, %s23
      %s35 = sphi 0, %s37
      %s38 = sphi 0, %s35
      %s39 = sphi 0, %s38
      %s55 = sphi 0, %s39
      %s61 = sphi 0, %s63
      %s64 = sphi 0, %s61
      %s65 = sphi 0, %s64
      %s81 = sphi 0, %s65
      %s85 = sphi 0, %s85
      %s87 = sphi 0, %s85
      %s88 = sphi 0, %s87
      %s102 = sphi 0, %s88
      %s106 = sphi 0, %s106
      %s108 = sphi 0, %s106
      %s109 = sphi 0, %s108
      %s123 = sphi 0, %s109
      %s131 = sphi 0, %s133
      %s134 = sphi 0, %s131
      %s135 = sphi 0, %s134
      %s151 = sphi 0, %s135
    $region4: #{tpu_custom_call.1} parent=1 // loop_header_branch
      %16 = sbr.rel (%p14) target = $region8
    $region5: #{tpu_custom_call.1} parent=1 // loop_body
      %s18 = ssub.s32 %s13, 1
      %s19 = ssub.s32 %s13, 2
      %s26 = sadd.s32 1, %s21
      %p27 = scmp.ge.s32.totalorder %s26, 1
      %s28 = scalar_select %p27, 0, %s26
      %s29 = sadd.s32 1, %s20
      %s30 = scalar_select %p27, %s29, %s20
      %p31 = scmp.ge.s32.totalorder %s30, 2
      %s32 = scalar_select %p31, 0, %s30
      %s33 = ssub.s32 %s20, %s32
      %p34 = scmp.eq.s32.totalorder %s33, 0
      %s36 = sadd.s32 %s35, 1
      %s37 = scalar_select %p34, %s35, %s36
      %p40 = pneg %p34
      %p41 = scmp.eq.s32.totalorder %s13, 1
      %p42 = por %p40, %p41
      %p43 = scmp.ne.s32.totalorder %s35, %s38
      %p44 = scmp.eq.s32.totalorder %s13, 0
      %p45 = por %p43, %p44
      %p46 = scmp.ne.s32.totalorder %s35, %s38
      %p47 = scmp.eq.s32.totalorder %s18, 1
      %p48 = por %p46, %p47
      %p49 = scmp.ne.s32.totalorder %s38, %s39
      %p50 = scmp.eq.s32.totalorder %s18, 0
      %p51 = por %p49, %p50
      %p52 = scmp.ne.s32.totalorder %s38, %s39
      %p53 = scmp.eq.s32.totalorder %s19, 1
      %p54 = por %p52, %p53
      %p56 = scmp.ne.s32.totalorder %s39, %s55
      %p57 = scmp.eq.s32.totalorder %s19, 0
      %p58 = por %p56, %p57
      %s59 = ssub.s32 %s20, %s32
      %p60 = scmp.eq.s32.totalorder %s59, 0
      %s62 = sadd.s32 %s61, 1
      %s63 = scalar_select %p60, %s61, %s62
      %p66 = pneg %p60
      %p67 = scmp.eq.s32.totalorder %s13, 1
      %p68 = por %p66, %p67
      %p69 = scmp.ne.s32.totalorder %s61, %s64
      %p70 = scmp.eq.s32.totalorder %s13, 0
      %p71 = por %p69, %p70
      %p72 = scmp.ne.s32.totalorder %s61, %s64
      %p73 = scmp.eq.s32.totalorder %s18, 1
      %p74 = por %p72, %p73
      %p75 = scmp.ne.s32.totalorder %s64, %s65
      %p76 = scmp.eq.s32.totalorder %s18, 0
      %p77 = por %p75, %p76
      %p78 = scmp.ne.s32.totalorder %s64, %s65
      %p79 = scmp.eq.s32.totalorder %s19, 1
      %p80 = por %p78, %p79
      %p82 = scmp.ne.s32.totalorder %s65, %s81
      %p83 = scmp.eq.s32.totalorder %s19, 0
      %p84 = por %p82, %p83
      %s86 = sadd.s32 %s85, 1
      %p89 = scmp.eq.s32.totalorder %s13, 1
      %p90 = scmp.ne.s32.totalorder %s85, %s87
      %p91 = scmp.eq.s32.totalorder %s13, 0
      %p92 = por %p90, %p91
      %p93 = scmp.ne.s32.totalorder %s85, %s87
      %p94 = scmp.eq.s32.totalorder %s18, 1
      %p95 = por %p93, %p94
      %p96 = scmp.ne.s32.totalorder %s87, %s88
      %p97 = scmp.eq.s32.totalorder %s18, 0
      %p98 = por %p96, %p97
      %p99 = scmp.ne.s32.totalorder %s87, %s88
      %p100 = scmp.eq.s32.totalorder %s19, 1
      %p101 = por %p99, %p100
      %p103 = scmp.ne.s32.totalorder %s88, %s102
      %p104 = scmp.eq.s32.totalorder %s19, 0
      %p105 = por %p103, %p104
      %s107 = sadd.s32 %s106, 1
      %p110 = scmp.eq.s32.totalorder %s13, 1
      %p111 = scmp.ne.s32.totalorder %s106, %s108
      %p112 = scmp.eq.s32.totalorder %s13, 0
      %p113 = por %p111, %p112
      %p114 = scmp.ne.s32.totalorder %s106, %s108
      %p115 = scmp.eq.s32.totalorder %s18, 1
      %p116 = por %p114, %p115
      %p117 = scmp.ne.s32.totalorder %s108, %s109
      %p118 = scmp.eq.s32.totalorder %s18, 0
      %p119 = por %p117, %p118
      %p120 = scmp.ne.s32.totalorder %s108, %s109
      %p121 = scmp.eq.s32.totalorder %s19, 1
      %p122 = por %p120, %p121
      %p124 = scmp.ne.s32.totalorder %s109, %s123
      %p125 = scmp.eq.s32.totalorder %s19, 0
      %p126 = por %p124, %p125
      %s127 = ssub.s32 %s20, %s32
      %s128 = ssub.s32 %s21, %s28
      %s129 = sor.u32 %s127, %s128
      %p130 = scmp.eq.s32.totalorder %s129, 0
      %s132 = sadd.s32 %s131, 1
      %s133 = scalar_select %p130, %s131, %s132
      %p136 = pneg %p130
      %p137 = scmp.eq.s32.totalorder %s13, 1
      %p138 = por %p136, %p137
      %p139 = scmp.ne.s32.totalorder %s131, %s134
      %p140 = scmp.eq.s32.totalorder %s13, 0
      %p141 = por %p139, %p140
      %p142 = scmp.ne.s32.totalorder %s131, %s134
      %p143 = scmp.eq.s32.totalorder %s18, 1
      %p144 = por %p142, %p143
      %p145 = scmp.ne.s32.totalorder %s134, %s135
      %p146 = scmp.eq.s32.totalorder %s18, 0
      %p147 = por %p145, %p146
      %p148 = scmp.ne.s32.totalorder %s134, %s135
      %p149 = scmp.eq.s32.totalorder %s19, 1
      %p150 = por %p148, %p149
      %p152 = scmp.ne.s32.totalorder %s135, %s151
      %p153 = scmp.eq.s32.totalorder %s19, 0
      %p154 = por %p152, %p153
      %p155 = scmp.le.s32.totalorder 1, %s13
      %p156 = scmp.lt.s32.totalorder %s13, 3
      %p157 = pnand %p155, %p156
      %p158 = pneg %p157
      // Predicated region
      $region9: #{tpu_custom_call.1} parent=5 // pred_check
        _
      $region10: #{tpu_custom_call.1} parent=5 // pred_check_branch
        %160 = sbr.rel (%p157) target = $region12
      $region11: #{tpu_custom_call.1} parent=5 // pred_region
        %s161 = ssub.s32 %s13, 1
        // Predicated region
        $region13: #{tpu_custom_call.1} parent=11 // pred_check
          %p162 = pneg %p98
        $region14: #{tpu_custom_call.1} parent=11 // pred_check_branch
          %164 = sbr.rel (%p162) target = $region16
        $region15: #{tpu_custom_call.1} parent=11 // pred_region
          _
        $region16: #{tpu_custom_call.1} parent=11 // pred_fallthru
          _
        // Predicated region
        $region17: #{tpu_custom_call.1} parent=11 // pred_check
          %p165 = pneg %p119
        $region18: #{tpu_custom_call.1} parent=11 // pred_check_branch
          %167 = sbr.rel (%p165) target = $region20
        $region19: #{tpu_custom_call.1} parent=11 // pred_region
          _
        $region20: #{tpu_custom_call.1} parent=11 // pred_fallthru
          _
      $region12: #{tpu_custom_call.1} parent=5 // pred_fallthru
        _
      %p168 = scmp.lt.s32.totalorder %s13, 2
      // Predicated region
      $region21: #{tpu_custom_call.1} parent=5 // pred_check
        %p169 = pneg %p168
      $region22: #{tpu_custom_call.1} parent=5 // pred_check_branch
        %171 = sbr.rel (%p169) target = $region24
      $region23: #{tpu_custom_call.1} parent=5 // pred_region
        // Predicated region
        $region25: #{tpu_custom_call.1} parent=23 // pred_check
          %p172 = pneg %p45
        $region26: #{tpu_custom_call.1} parent=23 // pred_check_branch
          %174 = sbr.rel (%p172) target = $region28
        $region27: #{tpu_custom_call.1} parent=23 // pred_region
          %p175 = scmp.lt.s32.totalorder %s20, 1
          %s176 = scalar_select %p175, %s20, 1
          %s177 = smul.addr %s176, 48
          %s178 = smul.addr %s177, 8
          %s179 = scalar_lea.vmem %s0, %s178
        $region28: #{tpu_custom_call.1} parent=23 // pred_fallthru
          _
        // Predicated region
        $region29: #{tpu_custom_call.1} parent=23 // pred_check
          %p180 = pneg %p71
        $region30: #{tpu_custom_call.1} parent=23 // pred_check_branch
          %182 = sbr.rel (%p180) target = $region32
        $region31: #{tpu_custom_call.1} parent=23 // pred_region
          %p183 = scmp.lt.s32.totalorder %s20, 1
          %s184 = scalar_select %p183, %s20, 1
          %s185 = smul.addr %s184, 48
          %s186 = smul.addr %s185, 8
          %s187 = scalar_lea.vmem %s1, %s186
        $region32: #{tpu_custom_call.1} parent=23 // pred_fallthru
          _
      $region24: #{tpu_custom_call.1} parent=5 // pred_fallthru
        _
      %p188 = scmp.le.s32.totalorder 1, %s13
      %p189 = scmp.lt.s32.totalorder %s13, 3
      %p190 = pnand %p188, %p189
      %p191 = pneg %p190
      // Predicated region
      $region33: #{tpu_custom_call.1} parent=5 // pred_check
        _
      $region34: #{tpu_custom_call.1} parent=5 // pred_check_branch
        %193 = sbr.rel (%p190) target = $region36
      $region35: #{tpu_custom_call.1} parent=5 // pred_region
        %s194 = ssub.s32 %s13, 1
        %p195 = scmp.lt.s32.totalorder %s22, 1
        %s196 = scalar_select %p195, %s22, 1
        %s197 = smul.addr %s196, 48
        %s198 = smul.addr %s197, 8
        %s199 = scalar_lea.vmem %s0, %s198
        %p200 = pneg %p51
        %p201 = pneg %p48
        %p202 = scmp.lt.s32.totalorder %s22, 1
        %s203 = scalar_select %p202, %s22, 1
        %s204 = smul.addr %s203, 48
        %s205 = smul.addr %s204, 8
        %s206 = scalar_lea.vmem %s1, %s205
        %p207 = pneg %p77
        %p208 = pneg %p74
        %p209 = pneg %p98
        %p210 = pneg %p95
        %p211 = pneg %p119
        %p212 = pneg %p116
        %p213 = pneg %p147
        %p214 = pneg %p144
        %s215 = sand.u32 %s134, 1
        %s216 = scalar_lea.sflag [#allocation4], %s215
        %s217 = sand.u32 %s134, 1
        %s218 = smul.addr %s217, 216
        %s219 = scalar_lea.vmem [#allocation3], %s218
        %p220 = scmp.lt.s32.totalorder %s22, 1
        %s221 = scalar_select %p220, %s22, 1
        %s222 = smul.addr %s221, 48
        %s223 = smul.addr %s222, 8
        %s224 = scalar_lea.vmem %s0, %s223
        %p225 = scmp.lt.s32.totalorder %s22, 1
        %s226 = scalar_select %p225, %s22, 1
        %s227 = smul.addr %s226, 48
        %s228 = smul.addr %s227, 8
        %s229 = scalar_lea.vmem %s1, %s228
        %s230 = smul.u32 9, %s23
        %s231 = smul.u32 %s23, 9
        %s232 = smul.u32 %s231, 32
        %s233 = scalar_lea.vmem %s224, %s232
        %v234 = vld [vmem:[%s233] sm:$0xff]
        %v235 = vld [vmem:[%s233 + $0x8] sm:$0xff]
        %v236 = vld [vmem:[%s233 + $0x10] sm:$0xff]
        %v237 = vld [vmem:[%s233 + $0x20] sm:$0xff]
        %v238 = vld [vmem:[%s233 + $0x28] sm:$0xff]
        %v239 = vld [vmem:[%s233 + $0x30] sm:$0xff]
        %v240 = vld [vmem:[%s233 + $0x40] sm:$0xff]
        %v241 = vld [vmem:[%s233 + $0x48] sm:$0xff]
        %v242 = vld [vmem:[%s233 + $0x50] sm:$0xff]
        %v243 = vld [vmem:[%s233 + $0x60] sm:$0xff]
        %v244 = vld [vmem:[%s233 + $0x68] sm:$0xff]
        %v245 = vld [vmem:[%s233 + $0x70] sm:$0xff]
        %v246 = vld [vmem:[%s233 + $0x80] sm:$0xff]
        %v247 = vld [vmem:[%s233 + $0x88] sm:$0xff]
        %v248 = vld [vmem:[%s233 + $0x90] sm:$0xff]
        %v249 = vld [vmem:[%s233 + $0xa0] sm:$0xff]
        %v250 = vld [vmem:[%s233 + $0xa8] sm:$0xff]
        %v251 = vld [vmem:[%s233 + $0xb0] sm:$0xff]
        %v252 = vld [vmem:[%s233 + $0xc0] sm:$0xff]
        %v253 = vld [vmem:[%s233 + $0xc8] sm:$0xff]
        %v254 = vld [vmem:[%s233 + $0xd0] sm:$0xff]
        %v255 = vld [vmem:[%s233 + $0xe0] sm:$0xff]
        %v256 = vld [vmem:[%s233 + $0xe8] sm:$0xff]
        %v257 = vld [vmem:[%s233 + $0xf0] sm:$0xff]
        %v258 = vld [vmem:[%s233 + $0x100] sm:$0xff]
        %v259 = vld [vmem:[%s233 + $0x108] sm:$0xff]
        %v260 = vld [vmem:[%s233 + $0x110] sm:$0xff]
        %vm261 = vcmask 261120
        %262 = vst.msk [vmem:[#allocation2] sm:$0xff] %vm261, %v234
        %263 = vst.msk [vmem:[#allocation2 + $0x40] sm:$0xff] %vm261, %v235
        %264 = vst.msk [vmem:[#allocation2 + $0x80] sm:$0xff] %vm261, %v236
        %265 = vst.msk [vmem:[#allocation2 + $0xc0] sm:$0xff] %vm261, %v237
        %266 = vst.msk [vmem:[#allocation2 + $0x100] sm:$0xff] %vm261, %v238
        %267 = vst.msk [vmem:[#allocation2 + $0x140] sm:$0xff] %vm261, %v239
        %268 = vst.msk [vmem:[#allocation2 + $0x180] sm:$0xff] %vm261, %v240
        %269 = vst.msk [vmem:[#allocation2 + $0x1c0] sm:$0xff] %vm261, %v241
        %270 = vst.msk [vmem:[#allocation2 + $0x200] sm:$0xff] %vm261, %v242
        %271 = vst.msk [vmem:[#allocation2 + $0x240] sm:$0xff] %vm261, %v243
        %272 = vst.msk [vmem:[#allocation2 + $0x280] sm:$0xff] %vm261, %v244
        %273 = vst.msk [vmem:[#allocation2 + $0x2c0] sm:$0xff] %vm261, %v245
        %274 = vst.msk [vmem:[#allocation2 + $0x300] sm:$0xff] %vm261, %v246
        %275 = vst.msk [vmem:[#allocation2 + $0x340] sm:$0xff] %vm261, %v247
        %276 = vst.msk [vmem:[#allocation2 + $0x380] sm:$0xff] %vm261, %v248
        %277 = vst.msk [vmem:[#allocation2 + $0x3c0] sm:$0xff] %vm261, %v249
        %278 = vst.msk [vmem:[#allocation2 + $0x400] sm:$0xff] %vm261, %v250
        %279 = vst.msk [vmem:[#allocation2 + $0x440] sm:$0xff] %vm261, %v251
        %280 = vst.msk [vmem:[#allocation2 + $0x480] sm:$0xff] %vm261, %v252
        %281 = vst.msk [vmem:[#allocation2 + $0x4c0] sm:$0xff] %vm261, %v253
        %282 = vst.msk [vmem:[#allocation2 + $0x500] sm:$0xff] %vm261, %v254
        %283 = vst.msk [vmem:[#allocation2 + $0x540] sm:$0xff] %vm261, %v255
        %284 = vst.msk [vmem:[#allocation2 + $0x580] sm:$0xff] %vm261, %v256
        %285 = vst.msk [vmem:[#allocation2 + $0x5c0] sm:$0xff] %vm261, %v257
        %286 = vst.msk [vmem:[#allocation2 + $0x600] sm:$0xff] %vm261, %v258
        %287 = vst.msk [vmem:[#allocation2 + $0x640] sm:$0xff] %vm261, %v259
        %288 = vst.msk [vmem:[#allocation2 + $0x680] sm:$0xff] %vm261, %v260
        %v289 = vld [vmem:[%s233 + $0x1] sm:$0xff]
        %v290 = vld [vmem:[%s233 + $0x9] sm:$0xff]
        %v291 = vld [vmem:[%s233 + $0x11] sm:$0xff]
        %v292 = vld [vmem:[%s233 + $0x21] sm:$0xff]
        %v293 = vld [vmem:[%s233 + $0x29] sm:$0xff]
        %v294 = vld [vmem:[%s233 + $0x31] sm:$0xff]
        %v295 = vld [vmem:[%s233 + $0x41] sm:$0xff]
        %v296 = vld [vmem:[%s233 + $0x49] sm:$0xff]
        %v297 = vld [vmem:[%s233 + $0x51] sm:$0xff]
        %v298 = vld [vmem:[%s233 + $0x61] sm:$0xff]
        %v299 = vld [vmem:[%s233 + $0x69] sm:$0xff]
        %v300 = vld [vmem:[%s233 + $0x71] sm:$0xff]
        %v301 = vld [vmem:[%s233 + $0x81] sm:$0xff]
        %v302 = vld [vmem:[%s233 + $0x89] sm:$0xff]
        %v303 = vld [vmem:[%s233 + $0x91] sm:$0xff]
        %v304 = vld [vmem:[%s233 + $0xa1] sm:$0xff]
        %v305 = vld [vmem:[%s233 + $0xa9] sm:$0xff]
        %v306 = vld [vmem:[%s233 + $0xb1] sm:$0xff]
        %v307 = vld [vmem:[%s233 + $0xc1] sm:$0xff]
        %v308 = vld [vmem:[%s233 + $0xc9] sm:$0xff]
        %v309 = vld [vmem:[%s233 + $0xd1] sm:$0xff]
        %v310 = vld [vmem:[%s233 + $0xe1] sm:$0xff]
        %v311 = vld [vmem:[%s233 + $0xe9] sm:$0xff]
        %v312 = vld [vmem:[%s233 + $0xf1] sm:$0xff]
        %v313 = vld [vmem:[%s233 + $0x101] sm:$0xff]
        %v314 = vld [vmem:[%s233 + $0x109] sm:$0xff]
        %v315 = vld [vmem:[%s233 + $0x111] sm:$0xff]
        %343 = vrot.lane.b32.xlu0 %v289, 32
        %v344 = vpop.permute.xlu0 %343
        %345 = vrot.lane.b32.xlu0 %v290, 32
        %v346 = vpop.permute.xlu0 %345
        %347 = vrot.lane.b32.xlu0 %v291, 32
        %v348 = vpop.permute.xlu0 %347
        %349 = vrot.lane.b32.xlu0 %v292, 32
        %v350 = vpop.permute.xlu0 %349
        %351 = vrot.lane.b32.xlu0 %v293, 32
        %v352 = vpop.permute.xlu0 %351
        %353 = vrot.lane.b32.xlu0 %v294, 32
        %v354 = vpop.permute.xlu0 %353
        %355 = vrot.lane.b32.xlu0 %v295, 32
        %v356 = vpop.permute.xlu0 %355
        %357 = vrot.lane.b32.xlu0 %v296, 32
        %v358 = vpop.permute.xlu0 %357
        %359 = vrot.lane.b32.xlu0 %v297, 32
        %v360 = vpop.permute.xlu0 %359
        %361 = vrot.lane.b32.xlu0 %v298, 32
        %v362 = vpop.permute.xlu0 %361
        %363 = vrot.lane.b32.xlu0 %v299, 32
        %v364 = vpop.permute.xlu0 %363
        %365 = vrot.lane.b32.xlu0 %v300, 32
        %v366 = vpop.permute.xlu0 %365
        %367 = vrot.lane.b32.xlu0 %v301, 32
        %v368 = vpop.permute.xlu0 %367
        %369 = vrot.lane.b32.xlu0 %v302, 32
        %v370 = vpop.permute.xlu0 %369
        %371 = vrot.lane.b32.xlu0 %v303, 32
        %v372 = vpop.permute.xlu0 %371
        %373 = vrot.lane.b32.xlu0 %v304, 32
        %v374 = vpop.permute.xlu0 %373
        %375 = vrot.lane.b32.xlu0 %v305, 32
        %v376 = vpop.permute.xlu0 %375
        %377 = vrot.lane.b32.xlu0 %v306, 32
        %v378 = vpop.permute.xlu0 %377
        %379 = vrot.lane.b32.xlu0 %v307, 32
        %v380 = vpop.permute.xlu0 %379
        %381 = vrot.lane.b32.xlu0 %v308, 32
        %v382 = vpop.permute.xlu0 %381
        %383 = vrot.lane.b32.xlu0 %v309, 32
        %v384 = vpop.permute.xlu0 %383
        %385 = vrot.lane.b32.xlu0 %v310, 32
        %v386 = vpop.permute.xlu0 %385
        %387 = vrot.lane.b32.xlu0 %v311, 32
        %v388 = vpop.permute.xlu0 %387
        %389 = vrot.lane.b32.xlu0 %v312, 32
        %v390 = vpop.permute.xlu0 %389
        %391 = vrot.lane.b32.xlu0 %v313, 32
        %v392 = vpop.permute.xlu0 %391
        %393 = vrot.lane.b32.xlu0 %v314, 32
        %v394 = vpop.permute.xlu0 %393
        %395 = vrot.lane.b32.xlu0 %v315, 32
        %v396 = vpop.permute.xlu0 %395
        %vm424 = vcmask 523520
        %425 = vst.msk [vmem:[#allocation2] sm:$0xff] %vm424, %v344
        %426 = vst.msk [vmem:[#allocation2 + $0x40] sm:$0xff] %vm424, %v346
        %427 = vst.msk [vmem:[#allocation2 + $0x80] sm:$0xff] %vm424, %v348
        %428 = vst.msk [vmem:[#allocation2 + $0xc0] sm:$0xff] %vm424, %v350
        %429 = vst.msk [vmem:[#allocation2 + $0x100] sm:$0xff] %vm424, %v352
        %430 = vst.msk [vmem:[#allocation2 + $0x140] sm:$0xff] %vm424, %v354
        %431 = vst.msk [vmem:[#allocation2 + $0x180] sm:$0xff] %vm424, %v356
        %432 = vst.msk [vmem:[#allocation2 + $0x1c0] sm:$0xff] %vm424, %v358
        %433 = vst.msk [vmem:[#allocation2 + $0x200] sm:$0xff] %vm424, %v360
        %434 = vst.msk [vmem:[#allocation2 + $0x240] sm:$0xff] %vm424, %v362
        %435 = vst.msk [vmem:[#allocation2 + $0x280] sm:$0xff] %vm424, %v364
        %436 = vst.msk [vmem:[#allocation2 + $0x2c0] sm:$0xff] %vm424, %v366
        %437 = vst.msk [vmem:[#allocation2 + $0x300] sm:$0xff] %vm424, %v368
        %438 = vst.msk [vmem:[#allocation2 + $0x340] sm:$0xff] %vm424, %v370
        %439 = vst.msk [vmem:[#allocation2 + $0x380] sm:$0xff] %vm424, %v372
        %440 = vst.msk [vmem:[#allocation2 + $0x3c0] sm:$0xff] %vm424, %v374
        %441 = vst.msk [vmem:[#allocation2 + $0x400] sm:$0xff] %vm424, %v376
        %442 = vst.msk [vmem:[#allocation2 + $0x440] sm:$0xff] %vm424, %v378
        %443 = vst.msk [vmem:[#allocation2 + $0x480] sm:$0xff] %vm424, %v380
        %444 = vst.msk [vmem:[#allocation2 + $0x4c0] sm:$0xff] %vm424, %v382
        %445 = vst.msk [vmem:[#allocation2 + $0x500] sm:$0xff] %vm424, %v384
        %446 = vst.msk [vmem:[#allocation2 + $0x540] sm:$0xff] %vm424, %v386
        %447 = vst.msk [vmem:[#allocation2 + $0x580] sm:$0xff] %vm424, %v388
        %448 = vst.msk [vmem:[#allocation2 + $0x5c0] sm:$0xff] %vm424, %v390
        %449 = vst.msk [vmem:[#allocation2 + $0x600] sm:$0xff] %vm424, %v392
        %450 = vst.msk [vmem:[#allocation2 + $0x640] sm:$0xff] %vm424, %v394
        %451 = vst.msk [vmem:[#allocation2 + $0x680] sm:$0xff] %vm424, %v396
        %v452 = vld [vmem:[%s233 + $0x2] sm:$0xff]
        %v453 = vld [vmem:[%s233 + $0xa] sm:$0xff]
        %v454 = vld [vmem:[%s233 + $0x12] sm:$0xff]
        %v455 = vld [vmem:[%s233 + $0x22] sm:$0xff]
        %v456 = vld [vmem:[%s233 + $0x2a] sm:$0xff]
        %v457 = vld [vmem:[%s233 + $0x32] sm:$0xff]
        %v458 = vld [vmem:[%s233 + $0x42] sm:$0xff]
        %v459 = vld [vmem:[%s233 + $0x4a] sm:$0xff]
        %v460 = vld [vmem:[%s233 + $0x52] sm:$0xff]
        %v461 = vld [vmem:[%s233 + $0x62] sm:$0xff]
        %v462 = vld [vmem:[%s233 + $0x6a] sm:$0xff]
        %v463 = vld [vmem:[%s233 + $0x72] sm:$0xff]
        %v464 = vld [vmem:[%s233 + $0x82] sm:$0xff]
        %v465 = vld [vmem:[%s233 + $0x8a] sm:$0xff]
        %v466 = vld [vmem:[%s233 + $0x92] sm:$0xff]
        %v467 = vld [vmem:[%s233 + $0xa2] sm:$0xff]
        %v468 = vld [vmem:[%s233 + $0xaa] sm:$0xff]
        %v469 = vld [vmem:[%s233 + $0xb2] sm:$0xff]
        %v470 = vld [vmem:[%s233 + $0xc2] sm:$0xff]
        %v471 = vld [vmem:[%s233 + $0xca] sm:$0xff]
        %v472 = vld [vmem:[%s233 + $0xd2] sm:$0xff]
        %v473 = vld [vmem:[%s233 + $0xe2] sm:$0xff]
        %v474 = vld [vmem:[%s233 + $0xea] sm:$0xff]
        %v475 = vld [vmem:[%s233 + $0xf2] sm:$0xff]
        %v476 = vld [vmem:[%s233 + $0x102] sm:$0xff]
        %v477 = vld [vmem:[%s233 + $0x10a] sm:$0xff]
        %v478 = vld [vmem:[%s233 + $0x112] sm:$0xff]
        %506 = vrot.lane.b32.xlu0 %v452, 64
        %v507 = vpop.permute.xlu0 %506
        %508 = vrot.lane.b32.xlu0 %v453, 64
        %v509 = vpop.permute.xlu0 %508
        %510 = vrot.lane.b32.xlu0 %v454, 64
        %v511 = vpop.permute.xlu0 %510
        %512 = vrot.lane.b32.xlu0 %v455, 64
        %v513 = vpop.permute.xlu0 %512
        %514 = vrot.lane.b32.xlu0 %v456, 64
        %v515 = vpop.permute.xlu0 %514
        %516 = vrot.lane.b32.xlu0 %v457, 64
        %v517 = vpop.permute.xlu0 %516
        %518 = vrot.lane.b32.xlu0 %v458, 64
        %v519 = vpop.permute.xlu0 %518
        %520 = vrot.lane.b32.xlu0 %v459, 64
        %v521 = vpop.permute.xlu0 %520
        %522 = vrot.lane.b32.xlu0 %v460, 64
        %v523 = vpop.permute.xlu0 %522
        %524 = vrot.lane.b32.xlu0 %v461, 64
        %v525 = vpop.permute.xlu0 %524
        %526 = vrot.lane.b32.xlu0 %v462, 64
        %v527 = vpop.permute.xlu0 %526
        %528 = vrot.lane.b32.xlu0 %v463, 64
        %v529 = vpop.permute.xlu0 %528
        %530 = vrot.lane.b32.xlu0 %v464, 64
        %v531 = vpop.permute.xlu0 %530
        %532 = vrot.lane.b32.xlu0 %v465, 64
        %v533 = vpop.permute.xlu0 %532
        %534 = vrot.lane.b32.xlu0 %v466, 64
        %v535 = vpop.permute.xlu0 %534
        %536 = vrot.lane.b32.xlu0 %v467, 64
        %v537 = vpop.permute.xlu0 %536
        %538 = vrot.lane.b32.xlu0 %v468, 64
        %v539 = vpop.permute.xlu0 %538
        %540 = vrot.lane.b32.xlu0 %v469, 64
        %v541 = vpop.permute.xlu0 %540
        %542 = vrot.lane.b32.xlu0 %v470, 64
        %v543 = vpop.permute.xlu0 %542
        %544 = vrot.lane.b32.xlu0 %v471, 64
        %v545 = vpop.permute.xlu0 %544
        %546 = vrot.lane.b32.xlu0 %v472, 64
        %v547 = vpop.permute.xlu0 %546
        %548 = vrot.lane.b32.xlu0 %v473, 64
        %v549 = vpop.permute.xlu0 %548
        %550 = vrot.lane.b32.xlu0 %v474, 64
        %v551 = vpop.permute.xlu0 %550
        %552 = vrot.lane.b32.xlu0 %v475, 64
        %v553 = vpop.permute.xlu0 %552
        %554 = vrot.lane.b32.xlu0 %v476, 64
        %v555 = vpop.permute.xlu0 %554
        %556 = vrot.lane.b32.xlu0 %v477, 64
        %v557 = vpop.permute.xlu0 %556
        %558 = vrot.lane.b32.xlu0 %v478, 64
        %v559 = vpop.permute.xlu0 %558
        %vm587 = vcmask 785920
        %588 = vst.msk [vmem:[#allocation2] sm:$0xff] %vm587, %v507
        %589 = vst.msk [vmem:[#allocation2 + $0x40] sm:$0xff] %vm587, %v509
        %590 = vst.msk [vmem:[#allocation2 + $0x80] sm:$0xff] %vm587, %v511
        %591 = vst.msk [vmem:[#allocation2 + $0xc0] sm:$0xff] %vm587, %v513
        %592 = vst.msk [vmem:[#allocation2 + $0x100] sm:$0xff] %vm587, %v515
        %593 = vst.msk [vmem:[#allocation2 + $0x140] sm:$0xff] %vm587, %v517
        %594 = vst.msk [vmem:[#allocation2 + $0x180] sm:$0xff] %vm587, %v519
        %595 = vst.msk [vmem:[#allocation2 + $0x1c0] sm:$0xff] %vm587, %v521
        %596 = vst.msk [vmem:[#allocation2 + $0x200] sm:$0xff] %vm587, %v523
        %597 = vst.msk [vmem:[#allocation2 + $0x240] sm:$0xff] %vm587, %v525
        %598 = vst.msk [vmem:[#allocation2 + $0x280] sm:$0xff] %vm587, %v527
        %599 = vst.msk [vmem:[#allocation2 + $0x2c0] sm:$0xff] %vm587, %v529
        %600 = vst.msk [vmem:[#allocation2 + $0x300] sm:$0xff] %vm587, %v531
        %601 = vst.msk [vmem:[#allocation2 + $0x340] sm:$0xff] %vm587, %v533
        %602 = vst.msk [vmem:[#allocation2 + $0x380] sm:$0xff] %vm587, %v535
        %603 = vst.msk [vmem:[#allocation2 + $0x3c0] sm:$0xff] %vm587, %v537
        %604 = vst.msk [vmem:[#allocation2 + $0x400] sm:$0xff] %vm587, %v539
        %605 = vst.msk [vmem:[#allocation2 + $0x440] sm:$0xff] %vm587, %v541
        %606 = vst.msk [vmem:[#allocation2 + $0x480] sm:$0xff] %vm587, %v543
        %607 = vst.msk [vmem:[#allocation2 + $0x4c0] sm:$0xff] %vm587, %v545
        %608 = vst.msk [vmem:[#allocation2 + $0x500] sm:$0xff] %vm587, %v547
        %609 = vst.msk [vmem:[#allocation2 + $0x540] sm:$0xff] %vm587, %v549
        %610 = vst.msk [vmem:[#allocation2 + $0x580] sm:$0xff] %vm587, %v551
        %611 = vst.msk [vmem:[#allocation2 + $0x5c0] sm:$0xff] %vm587, %v553
        %612 = vst.msk [vmem:[#allocation2 + $0x600] sm:$0xff] %vm587, %v555
        %613 = vst.msk [vmem:[#allocation2 + $0x640] sm:$0xff] %vm587, %v557
        %614 = vst.msk [vmem:[#allocation2 + $0x680] sm:$0xff] %vm587, %v559
        %v615 = vld [vmem:[%s233 + $0x3] sm:$0xff]
        %v616 = vld [vmem:[%s233 + $0xb] sm:$0xff]
        %v617 = vld [vmem:[%s233 + $0x13] sm:$0xff]
        %v618 = vld [vmem:[%s233 + $0x23] sm:$0xff]
        %v619 = vld [vmem:[%s233 + $0x2b] sm:$0xff]
        %v620 = vld [vmem:[%s233 + $0x33] sm:$0xff]
        %v621 = vld [vmem:[%s233 + $0x43] sm:$0xff]
        %v622 = vld [vmem:[%s233 + $0x4b] sm:$0xff]
        %v623 = vld [vmem:[%s233 + $0x53] sm:$0xff]
        %v624 = vld [vmem:[%s233 + $0x63] sm:$0xff]
        %v625 = vld [vmem:[%s233 + $0x6b] sm:$0xff]
        %v626 = vld [vmem:[%s233 + $0x73] sm:$0xff]
        %v627 = vld [vmem:[%s233 + $0x83] sm:$0xff]
        %v628 = vld [vmem:[%s233 + $0x8b] sm:$0xff]
        %v629 = vld [vmem:[%s233 + $0x93] sm:$0xff]
        %v630 = vld [vmem:[%s233 + $0xa3] sm:$0xff]
        %v631 = vld [vmem:[%s233 + $0xab] sm:$0xff]
        %v632 = vld [vmem:[%s233 + $0xb3] sm:$0xff]
        %v633 = vld [vmem:[%s233 + $0xc3] sm:$0xff]
        %v634 = vld [vmem:[%s233 + $0xcb] sm:$0xff]
        %v635 = vld [vmem:[%s233 + $0xd3] sm:$0xff]
        %v636 = vld [vmem:[%s233 + $0xe3] sm:$0xff]
        %v637 = vld [vmem:[%s233 + $0xeb] sm:$0xff]
        %v638 = vld [vmem:[%s233 + $0xf3] sm:$0xff]
        %v639 = vld [vmem:[%s233 + $0x103] sm:$0xff]
        %v640 = vld [vmem:[%s233 + $0x10b] sm:$0xff]
        %v641 = vld [vmem:[%s233 + $0x113] sm:$0xff]
        %669 = vrot.lane.b32.xlu0 %v615, 96
        %v670 = vpop.permute.xlu0 %669
        %671 = vrot.lane.b32.xlu0 %v616, 96
        %v672 = vpop.permute.xlu0 %671
        %673 = vrot.lane.b32.xlu0 %v617, 96
        %v674 = vpop.permute.xlu0 %673
        %675 = vrot.lane.b32.xlu0 %v618, 96
        %v676 = vpop.permute.xlu0 %675
        %677 = vrot.lane.b32.xlu0 %v619, 96
        %v678 = vpop.permute.xlu0 %677
        %679 = vrot.lane.b32.xlu0 %v620, 96
        %v680 = vpop.permute.xlu0 %679
        %681 = vrot.lane.b32.xlu0 %v621, 96
        %v682 = vpop.permute.xlu0 %681
        %683 = vrot.lane.b32.xlu0 %v622, 96
        %v684 = vpop.permute.xlu0 %683
        %685 = vrot.lane.b32.xlu0 %v623, 96
        %v686 = vpop.permute.xlu0 %685
        %687 = vrot.lane.b32.xlu0 %v624, 96
        %v688 = vpop.permute.xlu0 %687
        %689 = vrot.lane.b32.xlu0 %v625, 96
        %v690 = vpop.permute.xlu0 %689
        %691 = vrot.lane.b32.xlu0 %v626, 96
        %v692 = vpop.permute.xlu0 %691
        %693 = vrot.lane.b32.xlu0 %v627, 96
        %v694 = vpop.permute.xlu0 %693
        %695 = vrot.lane.b32.xlu0 %v628, 96
        %v696 = vpop.permute.xlu0 %695
        %697 = vrot.lane.b32.xlu0 %v629, 96
        %v698 = vpop.permute.xlu0 %697
        %699 = vrot.lane.b32.xlu0 %v630, 96
        %v700 = vpop.permute.xlu0 %699
        %701 = vrot.lane.b32.xlu0 %v631, 96
        %v702 = vpop.permute.xlu0 %701
        %703 = vrot.lane.b32.xlu0 %v632, 96
        %v704 = vpop.permute.xlu0 %703
        %705 = vrot.lane.b32.xlu0 %v633, 96
        %v706 = vpop.permute.xlu0 %705
        %707 = vrot.lane.b32.xlu0 %v634, 96
        %v708 = vpop.permute.xlu0 %707
        %709 = vrot.lane.b32.xlu0 %v635, 96
        %v710 = vpop.permute.xlu0 %709
        %711 = vrot.lane.b32.xlu0 %v636, 96
        %v712 = vpop.permute.xlu0 %711
        %713 = vrot.lane.b32.xlu0 %v637, 96
        %v714 = vpop.permute.xlu0 %713
        %715 = vrot.lane.b32.xlu0 %v638, 96
        %v716 = vpop.permute.xlu0 %715
        %717 = vrot.lane.b32.xlu0 %v639, 96
        %v718 = vpop.permute.xlu0 %717
        %719 = vrot.lane.b32.xlu0 %v640, 96
        %v720 = vpop.permute.xlu0 %719
        %721 = vrot.lane.b32.xlu0 %v641, 96
        %v722 = vpop.permute.xlu0 %721
        %vm750 = vcmask 1048320
        %751 = vst.msk [vmem:[#allocation2] sm:$0xff] %vm750, %v670
        %752 = vst.msk [vmem:[#allocation2 + $0x40] sm:$0xff] %vm750, %v672
        %753 = vst.msk [vmem:[#allocation2 + $0x80] sm:$0xff] %vm750, %v674
        %754 = vst.msk [vmem:[#allocation2 + $0xc0] sm:$0xff] %vm750, %v676
        %755 = vst.msk [vmem:[#allocation2 + $0x100] sm:$0xff] %vm750, %v678
        %756 = vst.msk [vmem:[#allocation2 + $0x140] sm:$0xff] %vm750, %v680
        %757 = vst.msk [vmem:[#allocation2 + $0x180] sm:$0xff] %vm750, %v682
        %758 = vst.msk [vmem:[#allocation2 + $0x1c0] sm:$0xff] %vm750, %v684
        %759 = vst.msk [vmem:[#allocation2 + $0x200] sm:$0xff] %vm750, %v686
        %760 = vst.msk [vmem:[#allocation2 + $0x240] sm:$0xff] %vm750, %v688
        %761 = vst.msk [vmem:[#allocation2 + $0x280] sm:$0xff] %vm750, %v690
        %762 = vst.msk [vmem:[#allocation2 + $0x2c0] sm:$0xff] %vm750, %v692
        %763 = vst.msk [vmem:[#allocation2 + $0x300] sm:$0xff] %vm750, %v694
        %764 = vst.msk [vmem:[#allocation2 + $0x340] sm:$0xff] %vm750, %v696
        %765 = vst.msk [vmem:[#allocation2 + $0x380] sm:$0xff] %vm750, %v698
        %766 = vst.msk [vmem:[#allocation2 + $0x3c0] sm:$0xff] %vm750, %v700
        %767 = vst.msk [vmem:[#allocation2 + $0x400] sm:$0xff] %vm750, %v702
        %768 = vst.msk [vmem:[#allocation2 + $0x440] sm:$0xff] %vm750, %v704
        %769 = vst.msk [vmem:[#allocation2 + $0x480] sm:$0xff] %vm750, %v706
        %770 = vst.msk [vmem:[#allocation2 + $0x4c0] sm:$0xff] %vm750, %v708
        %771 = vst.msk [vmem:[#allocation2 + $0x500] sm:$0xff] %vm750, %v710
        %772 = vst.msk [vmem:[#allocation2 + $0x540] sm:$0xff] %vm750, %v712
        %773 = vst.msk [vmem:[#allocation2 + $0x580] sm:$0xff] %vm750, %v714
        %774 = vst.msk [vmem:[#allocation2 + $0x5c0] sm:$0xff] %vm750, %v716
        %775 = vst.msk [vmem:[#allocation2 + $0x600] sm:$0xff] %vm750, %v718
        %776 = vst.msk [vmem:[#allocation2 + $0x640] sm:$0xff] %vm750, %v720
        %777 = vst.msk [vmem:[#allocation2 + $0x680] sm:$0xff] %vm750, %v722
        %s778 = scalar_lea.vmem %s229, %s232
        %v779 = vld [vmem:[%s778] sm:$0xff]
        %v780 = vld [vmem:[%s778 + $0x8] sm:$0xff]
        %v781 = vld [vmem:[%s778 + $0x10] sm:$0xff]
        %v782 = vld [vmem:[%s778 + $0x20] sm:$0xff]
        %v783 = vld [vmem:[%s778 + $0x28] sm:$0xff]
        %v784 = vld [vmem:[%s778 + $0x30] sm:$0xff]
        %v785 = vld [vmem:[%s778 + $0x40] sm:$0xff]
        %v786 = vld [vmem:[%s778 + $0x48] sm:$0xff]
        %v787 = vld [vmem:[%s778 + $0x50] sm:$0xff]
        %v788 = vld [vmem:[%s778 + $0x60] sm:$0xff]
        %v789 = vld [vmem:[%s778 + $0x68] sm:$0xff]
        %v790 = vld [vmem:[%s778 + $0x70] sm:$0xff]
        %v791 = vld [vmem:[%s778 + $0x80] sm:$0xff]
        %v792 = vld [vmem:[%s778 + $0x88] sm:$0xff]
        %v793 = vld [vmem:[%s778 + $0x90] sm:$0xff]
        %v794 = vld [vmem:[%s778 + $0xa0] sm:$0xff]
        %v795 = vld [vmem:[%s778 + $0xa8] sm:$0xff]
        %v796 = vld [vmem:[%s778 + $0xb0] sm:$0xff]
        %v797 = vld [vmem:[%s778 + $0xc0] sm:$0xff]
        %v798 = vld [vmem:[%s778 + $0xc8] sm:$0xff]
        %v799 = vld [vmem:[%s778 + $0xd0] sm:$0xff]
        %v800 = vld [vmem:[%s778 + $0xe0] sm:$0xff]
        %v801 = vld [vmem:[%s778 + $0xe8] sm:$0xff]
        %v802 = vld [vmem:[%s778 + $0xf0] sm:$0xff]
        %v803 = vld [vmem:[%s778 + $0x100] sm:$0xff]
        %v804 = vld [vmem:[%s778 + $0x108] sm:$0xff]
        %v805 = vld [vmem:[%s778 + $0x110] sm:$0xff]
        %806 = vst.msk [vmem:[#allocation2 + $0x8] sm:$0xff] %vm261, %v779
        %807 = vst.msk [vmem:[#allocation2 + $0x48] sm:$0xff] %vm261, %v780
        %808 = vst.msk [vmem:[#allocation2 + $0x88] sm:$0xff] %vm261, %v781
        %809 = vst.msk [vmem:[#allocation2 + $0xc8] sm:$0xff] %vm261, %v782
        %810 = vst.msk [vmem:[#allocation2 + $0x108] sm:$0xff] %vm261, %v783
        %811 = vst.msk [vmem:[#allocation2 + $0x148] sm:$0xff] %vm261, %v784
        %812 = vst.msk [vmem:[#allocation2 + $0x188] sm:$0xff] %vm261, %v785
        %813 = vst.msk [vmem:[#allocation2 + $0x1c8] sm:$0xff] %vm261, %v786
        %814 = vst.msk [vmem:[#allocation2 + $0x208] sm:$0xff] %vm261, %v787
        %815 = vst.msk [vmem:[#allocation2 + $0x248] sm:$0xff] %vm261, %v788
        %816 = vst.msk [vmem:[#allocation2 + $0x288] sm:$0xff] %vm261, %v789
        %817 = vst.msk [vmem:[#allocation2 + $0x2c8] sm:$0xff] %vm261, %v790
        %818 = vst.msk [vmem:[#allocation2 + $0x308] sm:$0xff] %vm261, %v791
        %819 = vst.msk [vmem:[#allocation2 + $0x348] sm:$0xff] %vm261, %v792
        %820 = vst.msk [vmem:[#allocation2 + $0x388] sm:$0xff] %vm261, %v793
        %821 = vst.msk [vmem:[#allocation2 + $0x3c8] sm:$0xff] %vm261, %v794
        %822 = vst.msk [vmem:[#allocation2 + $0x408] sm:$0xff] %vm261, %v795
        %823 = vst.msk [vmem:[#allocation2 + $0x448] sm:$0xff] %vm261, %v796
        %824 = vst.msk [vmem:[#allocation2 + $0x488] sm:$0xff] %vm261, %v797
        %825 = vst.msk [vmem:[#allocation2 + $0x4c8] sm:$0xff] %vm261, %v798
        %826 = vst.msk [vmem:[#allocation2 + $0x508] sm:$0xff] %vm261, %v799
        %827 = vst.msk [vmem:[#allocation2 + $0x548] sm:$0xff] %vm261, %v800
        %828 = vst.msk [vmem:[#allocation2 + $0x588] sm:$0xff] %vm261, %v801
        %829 = vst.msk [vmem:[#allocation2 + $0x5c8] sm:$0xff] %vm261, %v802
        %830 = vst.msk [vmem:[#allocation2 + $0x608] sm:$0xff] %vm261, %v803
        %831 = vst.msk [vmem:[#allocation2 + $0x648] sm:$0xff] %vm261, %v804
        %832 = vst.msk [vmem:[#allocation2 + $0x688] sm:$0xff] %vm261, %v805
        %v833 = vld [vmem:[%s778 + $0x1] sm:$0xff]
        %v834 = vld [vmem:[%s778 + $0x9] sm:$0xff]
        %v835 = vld [vmem:[%s778 + $0x11] sm:$0xff]
        %v836 = vld [vmem:[%s778 + $0x21] sm:$0xff]
        %v837 = vld [vmem:[%s778 + $0x29] sm:$0xff]
        %v838 = vld [vmem:[%s778 + $0x31] sm:$0xff]
        %v839 = vld [vmem:[%s778 + $0x41] sm:$0xff]
        %v840 = vld [vmem:[%s778 + $0x49] sm:$0xff]
        %v841 = vld [vmem:[%s778 + $0x51] sm:$0xff]
        %v842 = vld [vmem:[%s778 + $0x61] sm:$0xff]
        %v843 = vld [vmem:[%s778 + $0x69] sm:$0xff]
        %v844 = vld [vmem:[%s778 + $0x71] sm:$0xff]
        %v845 = vld [vmem:[%s778 + $0x81] sm:$0xff]
        %v846 = vld [vmem:[%s778 + $0x89] sm:$0xff]
        %v847 = vld [vmem:[%s778 + $0x91] sm:$0xff]
        %v848 = vld [vmem:[%s778 + $0xa1] sm:$0xff]
        %v849 = vld [vmem:[%s778 + $0xa9] sm:$0xff]
        %v850 = vld [vmem:[%s778 + $0xb1] sm:$0xff]
        %v851 = vld [vmem:[%s778 + $0xc1] sm:$0xff]
        %v852 = vld [vmem:[%s778 + $0xc9] sm:$0xff]
        %v853 = vld [vmem:[%s778 + $0xd1] sm:$0xff]
        %v854 = vld [vmem:[%s778 + $0xe1] sm:$0xff]
        %v855 = vld [vmem:[%s778 + $0xe9] sm:$0xff]
        %v856 = vld [vmem:[%s778 + $0xf1] sm:$0xff]
        %v857 = vld [vmem:[%s778 + $0x101] sm:$0xff]
        %v858 = vld [vmem:[%s778 + $0x109] sm:$0xff]
        %v859 = vld [vmem:[%s778 + $0x111] sm:$0xff]
        %887 = vrot.lane.b32.xlu0 %v833, 32
        %v888 = vpop.permute.xlu0 %887
        %889 = vrot.lane.b32.xlu0 %v834, 32
        %v890 = vpop.permute.xlu0 %889
        %891 = vrot.lane.b32.xlu0 %v835, 32
        %v892 = vpop.permute.xlu0 %891
        %893 = vrot.lane.b32.xlu0 %v836, 32
        %v894 = vpop.permute.xlu0 %893
        %895 = vrot.lane.b32.xlu0 %v837, 32
        %v896 = vpop.permute.xlu0 %895
        %897 = vrot.lane.b32.xlu0 %v838, 32
        %v898 = vpop.permute.xlu0 %897
        %899 = vrot.lane.b32.xlu0 %v839, 32
        %v900 = vpop.permute.xlu0 %899
        %901 = vrot.lane.b32.xlu0 %v840, 32
        %v902 = vpop.permute.xlu0 %901
        %903 = vrot.lane.b32.xlu0 %v841, 32
        %v904 = vpop.permute.xlu0 %903
        %905 = vrot.lane.b32.xlu0 %v842, 32
        %v906 = vpop.permute.xlu0 %905
        %907 = vrot.lane.b32.xlu0 %v843, 32
        %v908 = vpop.permute.xlu0 %907
        %909 = vrot.lane.b32.xlu0 %v844, 32
        %v910 = vpop.permute.xlu0 %909
        %911 = vrot.lane.b32.xlu0 %v845, 32
        %v912 = vpop.permute.xlu0 %911
        %913 = vrot.lane.b32.xlu0 %v846, 32
        %v914 = vpop.permute.xlu0 %913
        %915 = vrot.lane.b32.xlu0 %v847, 32
        %v916 = vpop.permute.xlu0 %915
        %917 = vrot.lane.b32.xlu0 %v848, 32
        %v918 = vpop.permute.xlu0 %917
        %919 = vrot.lane.b32.xlu0 %v849, 32
        %v920 = vpop.permute.xlu0 %919
        %921 = vrot.lane.b32.xlu0 %v850, 32
        %v922 = vpop.permute.xlu0 %921
        %923 = vrot.lane.b32.xlu0 %v851, 32
        %v924 = vpop.permute.xlu0 %923
        %925 = vrot.lane.b32.xlu0 %v852, 32
        %v926 = vpop.permute.xlu0 %925
        %927 = vrot.lane.b32.xlu0 %v853, 32
        %v928 = vpop.permute.xlu0 %927
        %929 = vrot.lane.b32.xlu0 %v854, 32
        %v930 = vpop.permute.xlu0 %929
        %931 = vrot.lane.b32.xlu0 %v855, 32
        %v932 = vpop.permute.xlu0 %931
        %933 = vrot.lane.b32.xlu0 %v856, 32
        %v934 = vpop.permute.xlu0 %933
        %935 = vrot.lane.b32.xlu0 %v857, 32
        %v936 = vpop.permute.xlu0 %935
        %937 = vrot.lane.b32.xlu0 %v858, 32
        %v938 = vpop.permute.xlu0 %937
        %939 = vrot.lane.b32.xlu0 %v859, 32
        %v940 = vpop.permute.xlu0 %939
        %968 = vst.msk [vmem:[#allocation2 + $0x8] sm:$0xff] %vm424, %v888
        %969 = vst.msk [vmem:[#allocation2 + $0x48] sm:$0xff] %vm424, %v890
        %970 = vst.msk [vmem:[#allocation2 + $0x88] sm:$0xff] %vm424, %v892
        %971 = vst.msk [vmem:[#allocation2 + $0xc8] sm:$0xff] %vm424, %v894
        %972 = vst.msk [vmem:[#allocation2 + $0x108] sm:$0xff] %vm424, %v896
        %973 = vst.msk [vmem:[#allocation2 + $0x148] sm:$0xff] %vm424, %v898
        %974 = vst.msk [vmem:[#allocation2 + $0x188] sm:$0xff] %vm424, %v900
        %975 = vst.msk [vmem:[#allocation2 + $0x1c8] sm:$0xff] %vm424, %v902
        %976 = vst.msk [vmem:[#allocation2 + $0x208] sm:$0xff] %vm424, %v904
        %977 = vst.msk [vmem:[#allocation2 + $0x248] sm:$0xff] %vm424, %v906
        %978 = vst.msk [vmem:[#allocation2 + $0x288] sm:$0xff] %vm424, %v908
        %979 = vst.msk [vmem:[#allocation2 + $0x2c8] sm:$0xff] %vm424, %v910
        %980 = vst.msk [vmem:[#allocation2 + $0x308] sm:$0xff] %vm424, %v912
        %981 = vst.msk [vmem:[#allocation2 + $0x348] sm:$0xff] %vm424, %v914
        %982 = vst.msk [vmem:[#allocation2 + $0x388] sm:$0xff] %vm424, %v916
        %983 = vst.msk [vmem:[#allocation2 + $0x3c8] sm:$0xff] %vm424, %v918
        %984 = vst.msk [vmem:[#allocation2 + $0x408] sm:$0xff] %vm424, %v920
        %985 = vst.msk [vmem:[#allocation2 + $0x448] sm:$0xff] %vm424, %v922
        %986 = vst.msk [vmem:[#allocation2 + $0x488] sm:$0xff] %vm424, %v924
        %987 = vst.msk [vmem:[#allocation2 + $0x4c8] sm:$0xff] %vm424, %v926
        %988 = vst.msk [vmem:[#allocation2 + $0x508] sm:$0xff] %vm424, %v928
        %989 = vst.msk [vmem:[#allocation2 + $0x548] sm:$0xff] %vm424, %v930
        %990 = vst.msk [vmem:[#allocation2 + $0x588] sm:$0xff] %vm424, %v932
        %991 = vst.msk [vmem:[#allocation2 + $0x5c8] sm:$0xff] %vm424, %v934
        %992 = vst.msk [vmem:[#allocation2 + $0x608] sm:$0xff] %vm424, %v936
        %993 = vst.msk [vmem:[#allocation2 + $0x648] sm:$0xff] %vm424, %v938
        %994 = vst.msk [vmem:[#allocation2 + $0x688] sm:$0xff] %vm424, %v940
        %v995 = vld [vmem:[%s778 + $0x2] sm:$0xff]
        %v996 = vld [vmem:[%s778 + $0xa] sm:$0xff]
        %v997 = vld [vmem:[%s778 + $0x12] sm:$0xff]
        %v998 = vld [vmem:[%s778 + $0x22] sm:$0xff]
        %v999 = vld [vmem:[%s778 + $0x2a] sm:$0xff]
        %v1000 = vld [vmem:[%s778 + $0x32] sm:$0xff]
        %v1001 = vld [vmem:[%s778 + $0x42] sm:$0xff]
        %v1002 = vld [vmem:[%s778 + $0x4a] sm:$0xff]
        %v1003 = vld [vmem:[%s778 + $0x52] sm:$0xff]
        %v1004 = vld [vmem:[%s778 + $0x62] sm:$0xff]
        %v1005 = vld [vmem:[%s778 + $0x6a] sm:$0xff]
        %v1006 = vld [vmem:[%s778 + $0x72] sm:$0xff]
        %v1007 = vld [vmem:[%s778 + $0x82] sm:$0xff]
        %v1008 = vld [vmem:[%s778 + $0x8a] sm:$0xff]
        %v1009 = vld [vmem:[%s778 + $0x92] sm:$0xff]
        %v1010 = vld [vmem:[%s778 + $0xa2] sm:$0xff]
        %v1011 = vld [vmem:[%s778 + $0xaa] sm:$0xff]
        %v1012 = vld [vmem:[%s778 + $0xb2] sm:$0xff]
        %v1013 = vld [vmem:[%s778 + $0xc2] sm:$0xff]
        %v1014 = vld [vmem:[%s778 + $0xca] sm:$0xff]
        %v1015 = vld [vmem:[%s778 + $0xd2] sm:$0xff]
        %v1016 = vld [vmem:[%s778 + $0xe2] sm:$0xff]
        %v1017 = vld [vmem:[%s778 + $0xea] sm:$0xff]
        %v1018 = vld [vmem:[%s778 + $0xf2] sm:$0xff]
        %v1019 = vld [vmem:[%s778 + $0x102] sm:$0xff]
        %v1020 = vld [vmem:[%s778 + $0x10a] sm:$0xff]
        %v1021 = vld [vmem:[%s778 + $0x112] sm:$0xff]
        %1049 = vrot.lane.b32.xlu0 %v995, 64
        %v1050 = vpop.permute.xlu0 %1049
        %1051 = vrot.lane.b32.xlu0 %v996, 64
        %v1052 = vpop.permute.xlu0 %1051
        %1053 = vrot.lane.b32.xlu0 %v997, 64
        %v1054 = vpop.permute.xlu0 %1053
        %1055 = vrot.lane.b32.xlu0 %v998, 64
        %v1056 = vpop.permute.xlu0 %1055
        %1057 = vrot.lane.b32.xlu0 %v999, 64
        %v1058 = vpop.permute.xlu0 %1057
        %1059 = vrot.lane.b32.xlu0 %v1000, 64
        %v1060 = vpop.permute.xlu0 %1059
        %1061 = vrot.lane.b32.xlu0 %v1001, 64
        %v1062 = vpop.permute.xlu0 %1061
        %1063 = vrot.lane.b32.xlu0 %v1002, 64
        %v1064 = vpop.permute.xlu0 %1063
        %1065 = vrot.lane.b32.xlu0 %v1003, 64
        %v1066 = vpop.permute.xlu0 %1065
        %1067 = vrot.lane.b32.xlu0 %v1004, 64
        %v1068 = vpop.permute.xlu0 %1067
        %1069 = vrot.lane.b32.xlu0 %v1005, 64
        %v1070 = vpop.permute.xlu0 %1069
        %1071 = vrot.lane.b32.xlu0 %v1006, 64
        %v1072 = vpop.permute.xlu0 %1071
        %1073 = vrot.lane.b32.xlu0 %v1007, 64
        %v1074 = vpop.permute.xlu0 %1073
        %1075 = vrot.lane.b32.xlu0 %v1008, 64
        %v1076 = vpop.permute.xlu0 %1075
        %1077 = vrot.lane.b32.xlu0 %v1009, 64
        %v1078 = vpop.permute.xlu0 %1077
        %1079 = vrot.lane.b32.xlu0 %v1010, 64
        %v1080 = vpop.permute.xlu0 %1079
        %1081 = vrot.lane.b32.xlu0 %v1011, 64
        %v1082 = vpop.permute.xlu0 %1081
        %1083 = vrot.lane.b32.xlu0 %v1012, 64
        %v1084 = vpop.permute.xlu0 %1083
        %1085 = vrot.lane.b32.xlu0 %v1013, 64
        %v1086 = vpop.permute.xlu0 %1085
        %1087 = vrot.lane.b32.xlu0 %v1014, 64
        %v1088 = vpop.permute.xlu0 %1087
        %1089 = vrot.lane.b32.xlu0 %v1015, 64
        %v1090 = vpop.permute.xlu0 %1089
        %1091 = vrot.lane.b32.xlu0 %v1016, 64
        %v1092 = vpop.permute.xlu0 %1091
        %1093 = vrot.lane.b32.xlu0 %v1017, 64
        %v1094 = vpop.permute.xlu0 %1093
        %1095 = vrot.lane.b32.xlu0 %v1018, 64
        %v1096 = vpop.permute.xlu0 %1095
        %1097 = vrot.lane.b32.xlu0 %v1019, 64
        %v1098 = vpop.permute.xlu0 %1097
        %1099 = vrot.lane.b32.xlu0 %v1020, 64
        %v1100 = vpop.permute.xlu0 %1099
        %1101 = vrot.lane.b32.xlu0 %v1021, 64
        %v1102 = vpop.permute.xlu0 %1101
        %1130 = vst.msk [vmem:[#allocation2 + $0x8] sm:$0xff] %vm587, %v1050
        %1131 = vst.msk [vmem:[#allocation2 + $0x48] sm:$0xff] %vm587, %v1052
        %1132 = vst.msk [vmem:[#allocation2 + $0x88] sm:$0xff] %vm587, %v1054
        %1133 = vst.msk [vmem:[#allocation2 + $0xc8] sm:$0xff] %vm587, %v1056
        %1134 = vst.msk [vmem:[#allocation2 + $0x108] sm:$0xff] %vm587, %v1058
        %1135 = vst.msk [vmem:[#allocation2 + $0x148] sm:$0xff] %vm587, %v1060
        %1136 = vst.msk [vmem:[#allocation2 + $0x188] sm:$0xff] %vm587, %v1062
        %1137 = vst.msk [vmem:[#allocation2 + $0x1c8] sm:$0xff] %vm587, %v1064
        %1138 = vst.msk [vmem:[#allocation2 + $0x208] sm:$0xff] %vm587, %v1066
        %1139 = vst.msk [vmem:[#allocation2 + $0x248] sm:$0xff] %vm587, %v1068
        %1140 = vst.msk [vmem:[#allocation2 + $0x288] sm:$0xff] %vm587, %v1070
        %1141 = vst.msk [vmem:[#allocation2 + $0x2c8] sm:$0xff] %vm587, %v1072
        %1142 = vst.msk [vmem:[#allocation2 + $0x308] sm:$0xff] %vm587, %v1074
        %1143 = vst.msk [vmem:[#allocation2 + $0x348] sm:$0xff] %vm587, %v1076
        %1144 = vst.msk [vmem:[#allocation2 + $0x388] sm:$0xff] %vm587, %v1078
        %1145 = vst.msk [vmem:[#allocation2 + $0x3c8] sm:$0xff] %vm587, %v1080
        %1146 = vst.msk [vmem:[#allocation2 + $0x408] sm:$0xff] %vm587, %v1082
        %1147 = vst.msk [vmem:[#allocation2 + $0x448] sm:$0xff] %vm587, %v1084
        %1148 = vst.msk [vmem:[#allocation2 + $0x488] sm:$0xff] %vm587, %v1086
        %1149 = vst.msk [vmem:[#allocation2 + $0x4c8] sm:$0xff] %vm587, %v1088
        %1150 = vst.msk [vmem:[#allocation2 + $0x508] sm:$0xff] %vm587, %v1090
        %1151 = vst.msk [vmem:[#allocation2 + $0x548] sm:$0xff] %vm587, %v1092
        %1152 = vst.msk [vmem:[#allocation2 + $0x588] sm:$0xff] %vm587, %v1094
        %1153 = vst.msk [vmem:[#allocation2 + $0x5c8] sm:$0xff] %vm587, %v1096
        %1154 = vst.msk [vmem:[#allocation2 + $0x608] sm:$0xff] %vm587, %v1098
        %1155 = vst.msk [vmem:[#allocation2 + $0x648] sm:$0xff] %vm587, %v1100
        %1156 = vst.msk [vmem:[#allocation2 + $0x688] sm:$0xff] %vm587, %v1102
        %v1157 = vld [vmem:[%s778 + $0x3] sm:$0xff]
        %v1158 = vld [vmem:[%s778 + $0xb] sm:$0xff]
        %v1159 = vld [vmem:[%s778 + $0x13] sm:$0xff]
        %v1160 = vld [vmem:[%s778 + $0x23] sm:$0xff]
        %v1161 = vld [vmem:[%s778 + $0x2b] sm:$0xff]
        %v1162 = vld [vmem:[%s778 + $0x33] sm:$0xff]
        %v1163 = vld [vmem:[%s778 + $0x43] sm:$0xff]
        %v1164 = vld [vmem:[%s778 + $0x4b] sm:$0xff]
        %v1165 = vld [vmem:[%s778 + $0x53] sm:$0xff]
        %v1166 = vld [vmem:[%s778 + $0x63] sm:$0xff]
        %v1167 = vld [vmem:[%s778 + $0x6b] sm:$0xff]
        %v1168 = vld [vmem:[%s778 + $0x73] sm:$0xff]
        %v1169 = vld [vmem:[%s778 + $0x83] sm:$0xff]
        %v1170 = vld [vmem:[%s778 + $0x8b] sm:$0xff]
        %v1171 = vld [vmem:[%s778 + $0x93] sm:$0xff]
        %v1172 = vld [vmem:[%s778 + $0xa3] sm:$0xff]
        %v1173 = vld [vmem:[%s778 + $0xab] sm:$0xff]
        %v1174 = vld [vmem:[%s778 + $0xb3] sm:$0xff]
        %v1175 = vld [vmem:[%s778 + $0xc3] sm:$0xff]
        %v1176 = vld [vmem:[%s778 + $0xcb] sm:$0xff]
        %v1177 = vld [vmem:[%s778 + $0xd3] sm:$0xff]
        %v1178 = vld [vmem:[%s778 + $0xe3] sm:$0xff]
        %v1179 = vld [vmem:[%s778 + $0xeb] sm:$0xff]
        %v1180 = vld [vmem:[%s778 + $0xf3] sm:$0xff]
        %v1181 = vld [vmem:[%s778 + $0x103] sm:$0xff]
        %v1182 = vld [vmem:[%s778 + $0x10b] sm:$0xff]
        %v1183 = vld [vmem:[%s778 + $0x113] sm:$0xff]
        %1211 = vrot.lane.b32.xlu0 %v1157, 96
        %v1212 = vpop.permute.xlu0 %1211
        %1213 = vrot.lane.b32.xlu0 %v1158, 96
        %v1214 = vpop.permute.xlu0 %1213
        %1215 = vrot.lane.b32.xlu0 %v1159, 96
        %v1216 = vpop.permute.xlu0 %1215
        %1217 = vrot.lane.b32.xlu0 %v1160, 96
        %v1218 = vpop.permute.xlu0 %1217
        %1219 = vrot.lane.b32.xlu0 %v1161, 96
        %v1220 = vpop.permute.xlu0 %1219
        %1221 = vrot.lane.b32.xlu0 %v1162, 96
        %v1222 = vpop.permute.xlu0 %1221
        %1223 = vrot.lane.b32.xlu0 %v1163, 96
        %v1224 = vpop.permute.xlu0 %1223
        %1225 = vrot.lane.b32.xlu0 %v1164, 96
        %v1226 = vpop.permute.xlu0 %1225
        %1227 = vrot.lane.b32.xlu0 %v1165, 96
        %v1228 = vpop.permute.xlu0 %1227
        %1229 = vrot.lane.b32.xlu0 %v1166, 96
        %v1230 = vpop.permute.xlu0 %1229
        %1231 = vrot.lane.b32.xlu0 %v1167, 96
        %v1232 = vpop.permute.xlu0 %1231
        %1233 = vrot.lane.b32.xlu0 %v1168, 96
        %v1234 = vpop.permute.xlu0 %1233
        %1235 = vrot.lane.b32.xlu0 %v1169, 96
        %v1236 = vpop.permute.xlu0 %1235
        %1237 = vrot.lane.b32.xlu0 %v1170, 96
        %v1238 = vpop.permute.xlu0 %1237
        %1239 = vrot.lane.b32.xlu0 %v1171, 96
        %v1240 = vpop.permute.xlu0 %1239
        %1241 = vrot.lane.b32.xlu0 %v1172, 96
        %v1242 = vpop.permute.xlu0 %1241
        %1243 = vrot.lane.b32.xlu0 %v1173, 96
        %v1244 = vpop.permute.xlu0 %1243
        %1245 = vrot.lane.b32.xlu0 %v1174, 96
        %v1246 = vpop.permute.xlu0 %1245
        %1247 = vrot.lane.b32.xlu0 %v1175, 96
        %v1248 = vpop.permute.xlu0 %1247
        %1249 = vrot.lane.b32.xlu0 %v1176, 96
        %v1250 = vpop.permute.xlu0 %1249
        %1251 = vrot.lane.b32.xlu0 %v1177, 96
        %v1252 = vpop.permute.xlu0 %1251
        %1253 = vrot.lane.b32.xlu0 %v1178, 96
        %v1254 = vpop.permute.xlu0 %1253
        %1255 = vrot.lane.b32.xlu0 %v1179, 96
        %v1256 = vpop.permute.xlu0 %1255
        %1257 = vrot.lane.b32.xlu0 %v1180, 96
        %v1258 = vpop.permute.xlu0 %1257
        %1259 = vrot.lane.b32.xlu0 %v1181, 96
        %v1260 = vpop.permute.xlu0 %1259
        %1261 = vrot.lane.b32.xlu0 %v1182, 96
        %v1262 = vpop.permute.xlu0 %1261
        %1263 = vrot.lane.b32.xlu0 %v1183, 96
        %v1264 = vpop.permute.xlu0 %1263
        %1292 = vst.msk [vmem:[#allocation2 + $0x8] sm:$0xff] %vm750, %v1212
        %1293 = vst.msk [vmem:[#allocation2 + $0x48] sm:$0xff] %vm750, %v1214
        %1294 = vst.msk [vmem:[#allocation2 + $0x88] sm:$0xff] %vm750, %v1216
        %1295 = vst.msk [vmem:[#allocation2 + $0xc8] sm:$0xff] %vm750, %v1218
        %1296 = vst.msk [vmem:[#allocation2 + $0x108] sm:$0xff] %vm750, %v1220
        %1297 = vst.msk [vmem:[#allocation2 + $0x148] sm:$0xff] %vm750, %v1222
        %1298 = vst.msk [vmem:[#allocation2 + $0x188] sm:$0xff] %vm750, %v1224
        %1299 = vst.msk [vmem:[#allocation2 + $0x1c8] sm:$0xff] %vm750, %v1226
        %1300 = vst.msk [vmem:[#allocation2 + $0x208] sm:$0xff] %vm750, %v1228
        %1301 = vst.msk [vmem:[#allocation2 + $0x248] sm:$0xff] %vm750, %v1230
        %1302 = vst.msk [vmem:[#allocation2 + $0x288] sm:$0xff] %vm750, %v1232
        %1303 = vst.msk [vmem:[#allocation2 + $0x2c8] sm:$0xff] %vm750, %v1234
        %1304 = vst.msk [vmem:[#allocation2 + $0x308] sm:$0xff] %vm750, %v1236
        %1305 = vst.msk [vmem:[#allocation2 + $0x348] sm:$0xff] %vm750, %v1238
        %1306 = vst.msk [vmem:[#allocation2 + $0x388] sm:$0xff] %vm750, %v1240
        %1307 = vst.msk [vmem:[#allocation2 + $0x3c8] sm:$0xff] %vm750, %v1242
        %1308 = vst.msk [vmem:[#allocation2 + $0x408] sm:$0xff] %vm750, %v1244
        %1309 = vst.msk [vmem:[#allocation2 + $0x448] sm:$0xff] %vm750, %v1246
        %1310 = vst.msk [vmem:[#allocation2 + $0x488] sm:$0xff] %vm750, %v1248
        %1311 = vst.msk [vmem:[#allocation2 + $0x4c8] sm:$0xff] %vm750, %v1250
        %1312 = vst.msk [vmem:[#allocation2 + $0x508] sm:$0xff] %vm750, %v1252
        %1313 = vst.msk [vmem:[#allocation2 + $0x548] sm:$0xff] %vm750, %v1254
        %1314 = vst.msk [vmem:[#allocation2 + $0x588] sm:$0xff] %vm750, %v1256
        %1315 = vst.msk [vmem:[#allocation2 + $0x5c8] sm:$0xff] %vm750, %v1258
        %1316 = vst.msk [vmem:[#allocation2 + $0x608] sm:$0xff] %vm750, %v1260
        %1317 = vst.msk [vmem:[#allocation2 + $0x648] sm:$0xff] %vm750, %v1262
        %1318 = vst.msk [vmem:[#allocation2 + $0x688] sm:$0xff] %vm750, %v1264
        %s1319 = sadd.s32 %s231, 1
        %s1320 = smul.u32 %s1319, 32
        %s1321 = scalar_lea.vmem %s224, %s1320
        %v1322 = vld [vmem:[%s1321] sm:$0xff]
        %v1323 = vld [vmem:[%s1321 + $0x8] sm:$0xff]
        %v1324 = vld [vmem:[%s1321 + $0x10] sm:$0xff]
        %v1325 = vld [vmem:[%s1321 + $0x20] sm:$0xff]
        %v1326 = vld [vmem:[%s1321 + $0x28] sm:$0xff]
        %v1327 = vld [vmem:[%s1321 + $0x30] sm:$0xff]
        %v1328 = vld [vmem:[%s1321 + $0x40] sm:$0xff]
        %v1329 = vld [vmem:[%s1321 + $0x48] sm:$0xff]
        %v1330 = vld [vmem:[%s1321 + $0x50] sm:$0xff]
        %v1331 = vld [vmem:[%s1321 + $0x60] sm:$0xff]
        %v1332 = vld [vmem:[%s1321 + $0x68] sm:$0xff]
        %v1333 = vld [vmem:[%s1321 + $0x70] sm:$0xff]
        %v1334 = vld [vmem:[%s1321 + $0x80] sm:$0xff]
        %v1335 = vld [vmem:[%s1321 + $0x88] sm:$0xff]
        %v1336 = vld [vmem:[%s1321 + $0x90] sm:$0xff]
        %v1337 = vld [vmem:[%s1321 + $0xa0] sm:$0xff]
        %v1338 = vld [vmem:[%s1321 + $0xa8] sm:$0xff]
        %v1339 = vld [vmem:[%s1321 + $0xb0] sm:$0xff]
        %v1340 = vld [vmem:[%s1321 + $0xc0] sm:$0xff]
        %v1341 = vld [vmem:[%s1321 + $0xc8] sm:$0xff]
        %v1342 = vld [vmem:[%s1321 + $0xd0] sm:$0xff]
        %v1343 = vld [vmem:[%s1321 + $0xe0] sm:$0xff]
        %v1344 = vld [vmem:[%s1321 + $0xe8] sm:$0xff]
        %v1345 = vld [vmem:[%s1321 + $0xf0] sm:$0xff]
        %v1346 = vld [vmem:[%s1321 + $0x100] sm:$0xff]
        %v1347 = vld [vmem:[%s1321 + $0x108] sm:$0xff]
        %v1348 = vld [vmem:[%s1321 + $0x110] sm:$0xff]
        %1349 = vst.msk [vmem:[#allocation2 + $0x10] sm:$0xff] %vm261, %v1322
        %1350 = vst.msk [vmem:[#allocation2 + $0x50] sm:$0xff] %vm261, %v1323
        %1351 = vst.msk [vmem:[#allocation2 + $0x90] sm:$0xff] %vm261, %v1324
        %1352 = vst.msk [vmem:[#allocation2 + $0xd0] sm:$0xff] %vm261, %v1325
        %1353 = vst.msk [vmem:[#allocation2 + $0x110] sm:$0xff] %vm261, %v1326
        %1354 = vst.msk [vmem:[#allocation2 + $0x150] sm:$0xff] %vm261, %v1327
        %1355 = vst.msk [vmem:[#allocation2 + $0x190] sm:$0xff] %vm261, %v1328
        %1356 = vst.msk [vmem:[#allocation2 + $0x1d0] sm:$0xff] %vm261, %v1329
        %1357 = vst.msk [vmem:[#allocation2 + $0x210] sm:$0xff] %vm261, %v1330
        %1358 = vst.msk [vmem:[#allocation2 + $0x250] sm:$0xff] %vm261, %v1331
        %1359 = vst.msk [vmem:[#allocation2 + $0x290] sm:$0xff] %vm261, %v1332
        %1360 = vst.msk [vmem:[#allocation2 + $0x2d0] sm:$0xff] %vm261, %v1333
        %1361 = vst.msk [vmem:[#allocation2 + $0x310] sm:$0xff] %vm261, %v1334
        %1362 = vst.msk [vmem:[#allocation2 + $0x350] sm:$0xff] %vm261, %v1335
        %1363 = vst.msk [vmem:[#allocation2 + $0x390] sm:$0xff] %vm261, %v1336
        %1364 = vst.msk [vmem:[#allocation2 + $0x3d0] sm:$0xff] %vm261, %v1337
        %1365 = vst.msk [vmem:[#allocation2 + $0x410] sm:$0xff] %vm261, %v1338
        %1366 = vst.msk [vmem:[#allocation2 + $0x450] sm:$0xff] %vm261, %v1339
        %1367 = vst.msk [vmem:[#allocation2 + $0x490] sm:$0xff] %vm261, %v1340
        %1368 = vst.msk [vmem:[#allocation2 + $0x4d0] sm:$0xff] %vm261, %v1341
        %1369 = vst.msk [vmem:[#allocation2 + $0x510] sm:$0xff] %vm261, %v1342
        %1370 = vst.msk [vmem:[#allocation2 + $0x550] sm:$0xff] %vm261, %v1343
        %1371 = vst.msk [vmem:[#allocation2 + $0x590] sm:$0xff] %vm261, %v1344
        %1372 = vst.msk [vmem:[#allocation2 + $0x5d0] sm:$0xff] %vm261, %v1345
        %1373 = vst.msk [vmem:[#allocation2 + $0x610] sm:$0xff] %vm261, %v1346
        %1374 = vst.msk [vmem:[#allocation2 + $0x650] sm:$0xff] %vm261, %v1347
        %1375 = vst.msk [vmem:[#allocation2 + $0x690] sm:$0xff] %vm261, %v1348
        %v1376 = vld [vmem:[%s1321 + $0x1] sm:$0xff]
        %v1377 = vld [vmem:[%s1321 + $0x9] sm:$0xff]
        %v1378 = vld [vmem:[%s1321 + $0x11] sm:$0xff]
        %v1379 = vld [vmem:[%s1321 + $0x21] sm:$0xff]
        %v1380 = vld [vmem:[%s1321 + $0x29] sm:$0xff]
        %v1381 = vld [vmem:[%s1321 + $0x31] sm:$0xff]
        %v1382 = vld [vmem:[%s1321 + $0x41] sm:$0xff]
        %v1383 = vld [vmem:[%s1321 + $0x49] sm:$0xff]
        %v1384 = vld [vmem:[%s1321 + $0x51] sm:$0xff]
        %v1385 = vld [vmem:[%s1321 + $0x61] sm:$0xff]
        %v1386 = vld [vmem:[%s1321 + $0x69] sm:$0xff]
        %v1387 = vld [vmem:[%s1321 + $0x71] sm:$0xff]
        %v1388 = vld [vmem:[%s1321 + $0x81] sm:$0xff]
        %v1389 = vld [vmem:[%s1321 + $0x89] sm:$0xff]
        %v1390 = vld [vmem:[%s1321 + $0x91] sm:$0xff]
        %v1391 = vld [vmem:[%s1321 + $0xa1] sm:$0xff]
        %v1392 = vld [vmem:[%s1321 + $0xa9] sm:$0xff]
        %v1393 = vld [vmem:[%s1321 + $0xb1] sm:$0xff]
        %v1394 = vld [vmem:[%s1321 + $0xc1] sm:$0xff]
        %v1395 = vld [vmem:[%s1321 + $0xc9] sm:$0xff]
        %v1396 = vld [vmem:[%s1321 + $0xd1] sm:$0xff]
        %v1397 = vld [vmem:[%s1321 + $0xe1] sm:$0xff]
        %v1398 = vld [vmem:[%s1321 + $0xe9] sm:$0xff]
        %v1399 = vld [vmem:[%s1321 + $0xf1] sm:$0xff]
        %v1400 = vld [vmem:[%s1321 + $0x101] sm:$0xff]
        %v1401 = vld [vmem:[%s1321 + $0x109] sm:$0xff]
        %v1402 = vld [vmem:[%s1321 + $0x111] sm:$0xff]
        %1430 = vrot.lane.b32.xlu0 %v1376, 32
        %v1431 = vpop.permute.xlu0 %1430
        %1432 = vrot.lane.b32.xlu0 %v1377, 32
        %v1433 = vpop.permute.xlu0 %1432
        %1434 = vrot.lane.b32.xlu0 %v1378, 32
        %v1435 = vpop.permute.xlu0 %1434
        %1436 = vrot.lane.b32.xlu0 %v1379, 32
        %v1437 = vpop.permute.xlu0 %1436
        %1438 = vrot.lane.b32.xlu0 %v1380, 32
        %v1439 = vpop.permute.xlu0 %1438
        %1440 = vrot.lane.b32.xlu0 %v1381, 32
        %v1441 = vpop.permute.xlu0 %1440
        %1442 = vrot.lane.b32.xlu0 %v1382, 32
        %v1443 = vpop.permute.xlu0 %1442
        %1444 = vrot.lane.b32.xlu0 %v1383, 32
        %v1445 = vpop.permute.xlu0 %1444
        %1446 = vrot.lane.b32.xlu0 %v1384, 32
        %v1447 = vpop.permute.xlu0 %1446
        %1448 = vrot.lane.b32.xlu0 %v1385, 32
        %v1449 = vpop.permute.xlu0 %1448
        %1450 = vrot.lane.b32.xlu0 %v1386, 32
        %v1451 = vpop.permute.xlu0 %1450
        %1452 = vrot.lane.b32.xlu0 %v1387, 32
        %v1453 = vpop.permute.xlu0 %1452
        %1454 = vrot.lane.b32.xlu0 %v1388, 32
        %v1455 = vpop.permute.xlu0 %1454
        %1456 = vrot.lane.b32.xlu0 %v1389, 32
        %v1457 = vpop.permute.xlu0 %1456
        %1458 = vrot.lane.b32.xlu0 %v1390, 32
        %v1459 = vpop.permute.xlu0 %1458
        %1460 = vrot.lane.b32.xlu0 %v1391, 32
        %v1461 = vpop.permute.xlu0 %1460
        %1462 = vrot.lane.b32.xlu0 %v1392, 32
        %v1463 = vpop.permute.xlu0 %1462
        %1464 = vrot.lane.b32.xlu0 %v1393, 32
        %v1465 = vpop.permute.xlu0 %1464
        %1466 = vrot.lane.b32.xlu0 %v1394, 32
        %v1467 = vpop.permute.xlu0 %1466
        %1468 = vrot.lane.b32.xlu0 %v1395, 32
        %v1469 = vpop.permute.xlu0 %1468
        %1470 = vrot.lane.b32.xlu0 %v1396, 32
        %v1471 = vpop.permute.xlu0 %1470
        %1472 = vrot.lane.b32.xlu0 %v1397, 32
        %v1473 = vpop.permute.xlu0 %1472
        %1474 = vrot.lane.b32.xlu0 %v1398, 32
        %v1475 = vpop.permute.xlu0 %1474
        %1476 = vrot.lane.b32.xlu0 %v1399, 32
        %v1477 = vpop.permute.xlu0 %1476
        %1478 = vrot.lane.b32.xlu0 %v1400, 32
        %v1479 = vpop.permute.xlu0 %1478
        %1480 = vrot.lane.b32.xlu0 %v1401, 32
        %v1481 = vpop.permute.xlu0 %1480
        %1482 = vrot.lane.b32.xlu0 %v1402, 32
        %v1483 = vpop.permute.xlu0 %1482
        %1511 = vst.msk [vmem:[#allocation2 + $0x10] sm:$0xff] %vm424, %v1431
        %1512 = vst.msk [vmem:[#allocation2 + $0x50] sm:$0xff] %vm424, %v1433
        %1513 = vst.msk [vmem:[#allocation2 + $0x90] sm:$0xff] %vm424, %v1435
        %1514 = vst.msk [vmem:[#allocation2 + $0xd0] sm:$0xff] %vm424, %v1437
        %1515 = vst.msk [vmem:[#allocation2 + $0x110] sm:$0xff] %vm424, %v1439
        %1516 = vst.msk [vmem:[#allocation2 + $0x150] sm:$0xff] %vm424, %v1441
        %1517 = vst.msk [vmem:[#allocation2 + $0x190] sm:$0xff] %vm424, %v1443
        %1518 = vst.msk [vmem:[#allocation2 + $0x1d0] sm:$0xff] %vm424, %v1445
        %1519 = vst.msk [vmem:[#allocation2 + $0x210] sm:$0xff] %vm424, %v1447
        %1520 = vst.msk [vmem:[#allocation2 + $0x250] sm:$0xff] %vm424, %v1449
        %1521 = vst.msk [vmem:[#allocation2 + $0x290] sm:$0xff] %vm424, %v1451
        %1522 = vst.msk [vmem:[#allocation2 + $0x2d0] sm:$0xff] %vm424, %v1453
        %1523 = vst.msk [vmem:[#allocation2 + $0x310] sm:$0xff] %vm424, %v1455
        %1524 = vst.msk [vmem:[#allocation2 + $0x350] sm:$0xff] %vm424, %v1457
        %1525 = vst.msk [vmem:[#allocation2 + $0x390] sm:$0xff] %vm424, %v1459
        %1526 = vst.msk [vmem:[#allocation2 + $0x3d0] sm:$0xff] %vm424, %v1461
        %1527 = vst.msk [vmem:[#allocation2 + $0x410] sm:$0xff] %vm424, %v1463
        %1528 = vst.msk [vmem:[#allocation2 + $0x450] sm:$0xff] %vm424, %v1465
        %1529 = vst.msk [vmem:[#allocation2 + $0x490] sm:$0xff] %vm424, %v1467
        %1530 = vst.msk [vmem:[#allocation2 + $0x4d0] sm:$0xff] %vm424, %v1469
        %1531 = vst.msk [vmem:[#allocation2 + $0x510] sm:$0xff] %vm424, %v1471
        %1532 = vst.msk [vmem:[#allocation2 + $0x550] sm:$0xff] %vm424, %v1473
        %1533 = vst.msk [vmem:[#allocation2 + $0x590] sm:$0xff] %vm424, %v1475
        %1534 = vst.msk [vmem:[#allocation2 + $0x5d0] sm:$0xff] %vm424, %v1477
        %1535 = vst.msk [vmem:[#allocation2 + $0x610] sm:$0xff] %vm424, %v1479
        %1536 = vst.msk [vmem:[#allocation2 + $0x650] sm:$0xff] %vm424, %v1481
        %1537 = vst.msk [vmem:[#allocation2 + $0x690] sm:$0xff] %vm424, %v1483
        %v1538 = vld [vmem:[%s1321 + $0x2] sm:$0xff]
        %v1539 = vld [vmem:[%s1321 + $0xa] sm:$0xff]
        %v1540 = vld [vmem:[%s1321 + $0x12] sm:$0xff]
        %v1541 = vld [vmem:[%s1321 + $0x22] sm:$0xff]
        %v1542 = vld [vmem:[%s1321 + $0x2a] sm:$0xff]
        %v1543 = vld [vmem:[%s1321 + $0x32] sm:$0xff]
        %v1544 = vld [vmem:[%s1321 + $0x42] sm:$0xff]
        %v1545 = vld [vmem:[%s1321 + $0x4a] sm:$0xff]
        %v1546 = vld [vmem:[%s1321 + $0x52] sm:$0xff]
        %v1547 = vld [vmem:[%s1321 + $0x62] sm:$0xff]
        %v1548 = vld [vmem:[%s1321 + $0x6a] sm:$0xff]
        %v1549 = vld [vmem:[%s1321 + $0x72] sm:$0xff]
        %v1550 = vld [vmem:[%s1321 + $0x82] sm:$0xff]
        %v1551 = vld [vmem:[%s1321 + $0x8a] sm:$0xff]
        %v1552 = vld [vmem:[%s1321 + $0x92] sm:$0xff]
        %v1553 = vld [vmem:[%s1321 + $0xa2] sm:$0xff]
        %v1554 = vld [vmem:[%s1321 + $0xaa] sm:$0xff]
        %v1555 = vld [vmem:[%s1321 + $0xb2] sm:$0xff]
        %v1556 = vld [vmem:[%s1321 + $0xc2] sm:$0xff]
        %v1557 = vld [vmem:[%s1321 + $0xca] sm:$0xff]
        %v1558 = vld [vmem:[%s1321 + $0xd2] sm:$0xff]
        %v1559 = vld [vmem:[%s1321 + $0xe2] sm:$0xff]
        %v1560 = vld [vmem:[%s1321 + $0xea] sm:$0xff]
        %v1561 = vld [vmem:[%s1321 + $0xf2] sm:$0xff]
        %v1562 = vld [vmem:[%s1321 + $0x102] sm:$0xff]
        %v1563 = vld [vmem:[%s1321 + $0x10a] sm:$0xff]
        %v1564 = vld [vmem:[%s1321 + $0x112] sm:$0xff]
        %1592 = vrot.lane.b32.xlu0 %v1538, 64
        %v1593 = vpop.permute.xlu0 %1592
        %1594 = vrot.lane.b32.xlu0 %v1539, 64
        %v1595 = vpop.permute.xlu0 %1594
        %1596 = vrot.lane.b32.xlu0 %v1540, 64
        %v1597 = vpop.permute.xlu0 %1596
        %1598 = vrot.lane.b32.xlu0 %v1541, 64
        %v1599 = vpop.permute.xlu0 %1598
        %1600 = vrot.lane.b32.xlu0 %v1542, 64
        %v1601 = vpop.permute.xlu0 %1600
        %1602 = vrot.lane.b32.xlu0 %v1543, 64
        %v1603 = vpop.permute.xlu0 %1602
        %1604 = vrot.lane.b32.xlu0 %v1544, 64
        %v1605 = vpop.permute.xlu0 %1604
        %1606 = vrot.lane.b32.xlu0 %v1545, 64
        %v1607 = vpop.permute.xlu0 %1606
        %1608 = vrot.lane.b32.xlu0 %v1546, 64
        %v1609 = vpop.permute.xlu0 %1608
        %1610 = vrot.lane.b32.xlu0 %v1547, 64
        %v1611 = vpop.permute.xlu0 %1610
        %1612 = vrot.lane.b32.xlu0 %v1548, 64
        %v1613 = vpop.permute.xlu0 %1612
        %1614 = vrot.lane.b32.xlu0 %v1549, 64
        %v1615 = vpop.permute.xlu0 %1614
        %1616 = vrot.lane.b32.xlu0 %v1550, 64
        %v1617 = vpop.permute.xlu0 %1616
        %1618 = vrot.lane.b32.xlu0 %v1551, 64
        %v1619 = vpop.permute.xlu0 %1618
        %1620 = vrot.lane.b32.xlu0 %v1552, 64
        %v1621 = vpop.permute.xlu0 %1620
        %1622 = vrot.lane.b32.xlu0 %v1553, 64
        %v1623 = vpop.permute.xlu0 %1622
        %1624 = vrot.lane.b32.xlu0 %v1554, 64
        %v1625 = vpop.permute.xlu0 %1624
        %1626 = vrot.lane.b32.xlu0 %v1555, 64
        %v1627 = vpop.permute.xlu0 %1626
        %1628 = vrot.lane.b32.xlu0 %v1556, 64
        %v1629 = vpop.permute.xlu0 %1628
        %1630 = vrot.lane.b32.xlu0 %v1557, 64
        %v1631 = vpop.permute.xlu0 %1630
        %1632 = vrot.lane.b32.xlu0 %v1558, 64
        %v1633 = vpop.permute.xlu0 %1632
        %1634 = vrot.lane.b32.xlu0 %v1559, 64
        %v1635 = vpop.permute.xlu0 %1634
        %1636 = vrot.lane.b32.xlu0 %v1560, 64
        %v1637 = vpop.permute.xlu0 %1636
        %1638 = vrot.lane.b32.xlu0 %v1561, 64
        %v1639 = vpop.permute.xlu0 %1638
        %1640 = vrot.lane.b32.xlu0 %v1562, 64
        %v1641 = vpop.permute.xlu0 %1640
        %1642 = vrot.lane.b32.xlu0 %v1563, 64
        %v1643 = vpop.permute.xlu0 %1642
        %1644 = vrot.lane.b32.xlu0 %v1564, 64
        %v1645 = vpop.permute.xlu0 %1644
        %1673 = vst.msk [vmem:[#allocation2 + $0x10] sm:$0xff] %vm587, %v1593
        %1674 = vst.msk [vmem:[#allocation2 + $0x50] sm:$0xff] %vm587, %v1595
        %1675 = vst.msk [vmem:[#allocation2 + $0x90] sm:$0xff] %vm587, %v1597
        %1676 = vst.msk [vmem:[#allocation2 + $0xd0] sm:$0xff] %vm587, %v1599
        %1677 = vst.msk [vmem:[#allocation2 + $0x110] sm:$0xff] %vm587, %v1601
        %1678 = vst.msk [vmem:[#allocation2 + $0x150] sm:$0xff] %vm587, %v1603
        %1679 = vst.msk [vmem:[#allocation2 + $0x190] sm:$0xff] %vm587, %v1605
        %1680 = vst.msk [vmem:[#allocation2 + $0x1d0] sm:$0xff] %vm587, %v1607
        %1681 = vst.msk [vmem:[#allocation2 + $0x210] sm:$0xff] %vm587, %v1609
        %1682 = vst.msk [vmem:[#allocation2 + $0x250] sm:$0xff] %vm587, %v1611
        %1683 = vst.msk [vmem:[#allocation2 + $0x290] sm:$0xff] %vm587, %v1613
        %1684 = vst.msk [vmem:[#allocation2 + $0x2d0] sm:$0xff] %vm587, %v1615
        %1685 = vst.msk [vmem:[#allocation2 + $0x310] sm:$0xff] %vm587, %v1617
        %1686 = vst.msk [vmem:[#allocation2 + $0x350] sm:$0xff] %vm587, %v1619
        %1687 = vst.msk [vmem:[#allocation2 + $0x390] sm:$0xff] %vm587, %v1621
        %1688 = vst.msk [vmem:[#allocation2 + $0x3d0] sm:$0xff] %vm587, %v1623
        %1689 = vst.msk [vmem:[#allocation2 + $0x410] sm:$0xff] %vm587, %v1625
        %1690 = vst.msk [vmem:[#allocation2 + $0x450] sm:$0xff] %vm587, %v1627
        %1691 = vst.msk [vmem:[#allocation2 + $0x490] sm:$0xff] %vm587, %v1629
        %1692 = vst.msk [vmem:[#allocation2 + $0x4d0] sm:$0xff] %vm587, %v1631
        %1693 = vst.msk [vmem:[#allocation2 + $0x510] sm:$0xff] %vm587, %v1633
        %1694 = vst.msk [vmem:[#allocation2 + $0x550] sm:$0xff] %vm587, %v1635
        %1695 = vst.msk [vmem:[#allocation2 + $0x590] sm:$0xff] %vm587, %v1637
        %1696 = vst.msk [vmem:[#allocation2 + $0x5d0] sm:$0xff] %vm587, %v1639
        %1697 = vst.msk [vmem:[#allocation2 + $0x610] sm:$0xff] %vm587, %v1641
        %1698 = vst.msk [vmem:[#allocation2 + $0x650] sm:$0xff] %vm587, %v1643
        %1699 = vst.msk [vmem:[#allocation2 + $0x690] sm:$0xff] %vm587, %v1645
        %v1700 = vld [vmem:[%s1321 + $0x3] sm:$0xff]
        %v1701 = vld [vmem:[%s1321 + $0xb] sm:$0xff]
        %v1702 = vld [vmem:[%s1321 + $0x13] sm:$0xff]
        %v1703 = vld [vmem:[%s1321 + $0x23] sm:$0xff]
        %v1704 = vld [vmem:[%s1321 + $0x2b] sm:$0xff]
        %v1705 = vld [vmem:[%s1321 + $0x33] sm:$0xff]
        %v1706 = vld [vmem:[%s1321 + $0x43] sm:$0xff]
        %v1707 = vld [vmem:[%s1321 + $0x4b] sm:$0xff]
        %v1708 = vld [vmem:[%s1321 + $0x53] sm:$0xff]
        %v1709 = vld [vmem:[%s1321 + $0x63] sm:$0xff]
        %v1710 = vld [vmem:[%s1321 + $0x6b] sm:$0xff]
        %v1711 = vld [vmem:[%s1321 + $0x73] sm:$0xff]
        %v1712 = vld [vmem:[%s1321 + $0x83] sm:$0xff]
        %v1713 = vld [vmem:[%s1321 + $0x8b] sm:$0xff]
        %v1714 = vld [vmem:[%s1321 + $0x93] sm:$0xff]
        %v1715 = vld [vmem:[%s1321 + $0xa3] sm:$0xff]
        %v1716 = vld [vmem:[%s1321 + $0xab] sm:$0xff]
        %v1717 = vld [vmem:[%s1321 + $0xb3] sm:$0xff]
        %v1718 = vld [vmem:[%s1321 + $0xc3] sm:$0xff]
        %v1719 = vld [vmem:[%s1321 + $0xcb] sm:$0xff]
        %v1720 = vld [vmem:[%s1321 + $0xd3] sm:$0xff]
        %v1721 = vld [vmem:[%s1321 + $0xe3] sm:$0xff]
        %v1722 = vld [vmem:[%s1321 + $0xeb] sm:$0xff]
        %v1723 = vld [vmem:[%s1321 + $0xf3] sm:$0xff]
        %v1724 = vld [vmem:[%s1321 + $0x103] sm:$0xff]
        %v1725 = vld [vmem:[%s1321 + $0x10b] sm:$0xff]
        %v1726 = vld [vmem:[%s1321 + $0x113] sm:$0xff]
        %1754 = vrot.lane.b32.xlu0 %v1700, 96
        %v1755 = vpop.permute.xlu0 %1754
        %1756 = vrot.lane.b32.xlu0 %v1701, 96
        %v1757 = vpop.permute.xlu0 %1756
        %1758 = vrot.lane.b32.xlu0 %v1702, 96
        %v1759 = vpop.permute.xlu0 %1758
        %1760 = vrot.lane.b32.xlu0 %v1703, 96
        %v1761 = vpop.permute.xlu0 %1760
        %1762 = vrot.lane.b32.xlu0 %v1704, 96
        %v1763 = vpop.permute.xlu0 %1762
        %1764 = vrot.lane.b32.xlu0 %v1705, 96
        %v1765 = vpop.permute.xlu0 %1764
        %1766 = vrot.lane.b32.xlu0 %v1706, 96
        %v1767 = vpop.permute.xlu0 %1766
        %1768 = vrot.lane.b32.xlu0 %v1707, 96
        %v1769 = vpop.permute.xlu0 %1768
        %1770 = vrot.lane.b32.xlu0 %v1708, 96
        %v1771 = vpop.permute.xlu0 %1770
        %1772 = vrot.lane.b32.xlu0 %v1709, 96
        %v1773 = vpop.permute.xlu0 %1772
        %1774 = vrot.lane.b32.xlu0 %v1710, 96
        %v1775 = vpop.permute.xlu0 %1774
        %1776 = vrot.lane.b32.xlu0 %v1711, 96
        %v1777 = vpop.permute.xlu0 %1776
        %1778 = vrot.lane.b32.xlu0 %v1712, 96
        %v1779 = vpop.permute.xlu0 %1778
        %1780 = vrot.lane.b32.xlu0 %v1713, 96
        %v1781 = vpop.permute.xlu0 %1780
        %1782 = vrot.lane.b32.xlu0 %v1714, 96
        %v1783 = vpop.permute.xlu0 %1782
        %1784 = vrot.lane.b32.xlu0 %v1715, 96
        %v1785 = vpop.permute.xlu0 %1784
        %1786 = vrot.lane.b32.xlu0 %v1716, 96
        %v1787 = vpop.permute.xlu0 %1786
        %1788 = vrot.lane.b32.xlu0 %v1717, 96
        %v1789 = vpop.permute.xlu0 %1788
        %1790 = vrot.lane.b32.xlu0 %v1718, 96
        %v1791 = vpop.permute.xlu0 %1790
        %1792 = vrot.lane.b32.xlu0 %v1719, 96
        %v1793 = vpop.permute.xlu0 %1792
        %1794 = vrot.lane.b32.xlu0 %v1720, 96
        %v1795 = vpop.permute.xlu0 %1794
        %1796 = vrot.lane.b32.xlu0 %v1721, 96
        %v1797 = vpop.permute.xlu0 %1796
        %1798 = vrot.lane.b32.xlu0 %v1722, 96
        %v1799 = vpop.permute.xlu0 %1798
        %1800 = vrot.lane.b32.xlu0 %v1723, 96
        %v1801 = vpop.permute.xlu0 %1800
        %1802 = vrot.lane.b32.xlu0 %v1724, 96
        %v1803 = vpop.permute.xlu0 %1802
        %1804 = vrot.lane.b32.xlu0 %v1725, 96
        %v1805 = vpop.permute.xlu0 %1804
        %1806 = vrot.lane.b32.xlu0 %v1726, 96
        %v1807 = vpop.permute.xlu0 %1806
        %1835 = vst.msk [vmem:[#allocation2 + $0x10] sm:$0xff] %vm750, %v1755
        %1836 = vst.msk [vmem:[#allocation2 + $0x50] sm:$0xff] %vm750, %v1757
        %1837 = vst.msk [vmem:[#allocation2 + $0x90] sm:$0xff] %vm750, %v1759
        %1838 = vst.msk [vmem:[#allocation2 + $0xd0] sm:$0xff] %vm750, %v1761
        %1839 = vst.msk [vmem:[#allocation2 + $0x110] sm:$0xff] %vm750, %v1763
        %1840 = vst.msk [vmem:[#allocation2 + $0x150] sm:$0xff] %vm750, %v1765
        %1841 = vst.msk [vmem:[#allocation2 + $0x190] sm:$0xff] %vm750, %v1767
        %1842 = vst.msk [vmem:[#allocation2 + $0x1d0] sm:$0xff] %vm750, %v1769
        %1843 = vst.msk [vmem:[#allocation2 + $0x210] sm:$0xff] %vm750, %v1771
        %1844 = vst.msk [vmem:[#allocation2 + $0x250] sm:$0xff] %vm750, %v1773
        %1845 = vst.msk [vmem:[#allocation2 + $0x290] sm:$0xff] %vm750, %v1775
        %1846 = vst.msk [vmem:[#allocation2 + $0x2d0] sm:$0xff] %vm750, %v1777
        %1847 = vst.msk [vmem:[#allocation2 + $0x310] sm:$0xff] %vm750, %v1779
        %1848 = vst.msk [vmem:[#allocation2 + $0x350] sm:$0xff] %vm750, %v1781
        %1849 = vst.msk [vmem:[#allocation2 + $0x390] sm:$0xff] %vm750, %v1783
        %1850 = vst.msk [vmem:[#allocation2 + $0x3d0] sm:$0xff] %vm750, %v1785
        %1851 = vst.msk [vmem:[#allocation2 + $0x410] sm:$0xff] %vm750, %v1787
        %1852 = vst.msk [vmem:[#allocation2 + $0x450] sm:$0xff] %vm750, %v1789
        %1853 = vst.msk [vmem:[#allocation2 + $0x490] sm:$0xff] %vm750, %v1791
        %1854 = vst.msk [vmem:[#allocation2 + $0x4d0] sm:$0xff] %vm750, %v1793
        %1855 = vst.msk [vmem:[#allocation2 + $0x510] sm:$0xff] %vm750, %v1795
        %1856 = vst.msk [vmem:[#allocation2 + $0x550] sm:$0xff] %vm750, %v1797
        %1857 = vst.msk [vmem:[#allocation2 + $0x590] sm:$0xff] %vm750, %v1799
        %1858 = vst.msk [vmem:[#allocation2 + $0x5d0] sm:$0xff] %vm750, %v1801
        %1859 = vst.msk [vmem:[#allocation2 + $0x610] sm:$0xff] %vm750, %v1803
        %1860 = vst.msk [vmem:[#allocation2 + $0x650] sm:$0xff] %vm750, %v1805
        %1861 = vst.msk [vmem:[#allocation2 + $0x690] sm:$0xff] %vm750, %v1807
        %s1862 = scalar_lea.vmem %s229, %s1320
        %v1863 = vld [vmem:[%s1862] sm:$0xff]
        %v1864 = vld [vmem:[%s1862 + $0x8] sm:$0xff]
        %v1865 = vld [vmem:[%s1862 + $0x10] sm:$0xff]
        %v1866 = vld [vmem:[%s1862 + $0x20] sm:$0xff]
        %v1867 = vld [vmem:[%s1862 + $0x28] sm:$0xff]
        %v1868 = vld [vmem:[%s1862 + $0x30] sm:$0xff]
        %v1869 = vld [vmem:[%s1862 + $0x40] sm:$0xff]
        %v1870 = vld [vmem:[%s1862 + $0x48] sm:$0xff]
        %v1871 = vld [vmem:[%s1862 + $0x50] sm:$0xff]
        %v1872 = vld [vmem:[%s1862 + $0x60] sm:$0xff]
        %v1873 = vld [vmem:[%s1862 + $0x68] sm:$0xff]
        %v1874 = vld [vmem:[%s1862 + $0x70] sm:$0xff]
        %v1875 = vld [vmem:[%s1862 + $0x80] sm:$0xff]
        %v1876 = vld [vmem:[%s1862 + $0x88] sm:$0xff]
        %v1877 = vld [vmem:[%s1862 + $0x90] sm:$0xff]
        %v1878 = vld [vmem:[%s1862 + $0xa0] sm:$0xff]
        %v1879 = vld [vmem:[%s1862 + $0xa8] sm:$0xff]
        %v1880 = vld [vmem:[%s1862 + $0xb0] sm:$0xff]
        %v1881 = vld [vmem:[%s1862 + $0xc0] sm:$0xff]
        %v1882 = vld [vmem:[%s1862 + $0xc8] sm:$0xff]
        %v1883 = vld [vmem:[%s1862 + $0xd0] sm:$0xff]
        %v1884 = vld [vmem:[%s1862 + $0xe0] sm:$0xff]
        %v1885 = vld [vmem:[%s1862 + $0xe8] sm:$0xff]
        %v1886 = vld [vmem:[%s1862 + $0xf0] sm:$0xff]
        %v1887 = vld [vmem:[%s1862 + $0x100] sm:$0xff]
        %v1888 = vld [vmem:[%s1862 + $0x108] sm:$0xff]
        %v1889 = vld [vmem:[%s1862 + $0x110] sm:$0xff]
        %1890 = vst.msk [vmem:[#allocation2 + $0x18] sm:$0xff] %vm261, %v1863
        %1891 = vst.msk [vmem:[#allocation2 + $0x58] sm:$0xff] %vm261, %v1864
        %1892 = vst.msk [vmem:[#allocation2 + $0x98] sm:$0xff] %vm261, %v1865
        %1893 = vst.msk [vmem:[#allocation2 + $0xd8] sm:$0xff] %vm261, %v1866
        %1894 = vst.msk [vmem:[#allocation2 + $0x118] sm:$0xff] %vm261, %v1867
        %1895 = vst.msk [vmem:[#allocation2 + $0x158] sm:$0xff] %vm261, %v1868
        %1896 = vst.msk [vmem:[#allocation2 + $0x198] sm:$0xff] %vm261, %v1869
        %1897 = vst.msk [vmem:[#allocation2 + $0x1d8] sm:$0xff] %vm261, %v1870
        %1898 = vst.msk [vmem:[#allocation2 + $0x218] sm:$0xff] %vm261, %v1871
        %1899 = vst.msk [vmem:[#allocation2 + $0x258] sm:$0xff] %vm261, %v1872
        %1900 = vst.msk [vmem:[#allocation2 + $0x298] sm:$0xff] %vm261, %v1873
        %1901 = vst.msk [vmem:[#allocation2 + $0x2d8] sm:$0xff] %vm261, %v1874
        %1902 = vst.msk [vmem:[#allocation2 + $0x318] sm:$0xff] %vm261, %v1875
        %1903 = vst.msk [vmem:[#allocation2 + $0x358] sm:$0xff] %vm261, %v1876
        %1904 = vst.msk [vmem:[#allocation2 + $0x398] sm:$0xff] %vm261, %v1877
        %1905 = vst.msk [vmem:[#allocation2 + $0x3d8] sm:$0xff] %vm261, %v1878
        %1906 = vst.msk [vmem:[#allocation2 + $0x418] sm:$0xff] %vm261, %v1879
        %1907 = vst.msk [vmem:[#allocation2 + $0x458] sm:$0xff] %vm261, %v1880
        %1908 = vst.msk [vmem:[#allocation2 + $0x498] sm:$0xff] %vm261, %v1881
        %1909 = vst.msk [vmem:[#allocation2 + $0x4d8] sm:$0xff] %vm261, %v1882
        %1910 = vst.msk [vmem:[#allocation2 + $0x518] sm:$0xff] %vm261, %v1883
        %1911 = vst.msk [vmem:[#allocation2 + $0x558] sm:$0xff] %vm261, %v1884
        %1912 = vst.msk [vmem:[#allocation2 + $0x598] sm:$0xff] %vm261, %v1885
        %1913 = vst.msk [vmem:[#allocation2 + $0x5d8] sm:$0xff] %vm261, %v1886
        %1914 = vst.msk [vmem:[#allocation2 + $0x618] sm:$0xff] %vm261, %v1887
        %1915 = vst.msk [vmem:[#allocation2 + $0x658] sm:$0xff] %vm261, %v1888
        %1916 = vst.msk [vmem:[#allocation2 + $0x698] sm:$0xff] %vm261, %v1889
        %v1917 = vld [vmem:[%s1862 + $0x1] sm:$0xff]
        %v1918 = vld [vmem:[%s1862 + $0x9] sm:$0xff]
        %v1919 = vld [vmem:[%s1862 + $0x11] sm:$0xff]
        %v1920 = vld [vmem:[%s1862 + $0x21] sm:$0xff]
        %v1921 = vld [vmem:[%s1862 + $0x29] sm:$0xff]
        %v1922 = vld [vmem:[%s1862 + $0x31] sm:$0xff]
        %v1923 = vld [vmem:[%s1862 + $0x41] sm:$0xff]
        %v1924 = vld [vmem:[%s1862 + $0x49] sm:$0xff]
        %v1925 = vld [vmem:[%s1862 + $0x51] sm:$0xff]
        %v1926 = vld [vmem:[%s1862 + $0x61] sm:$0xff]
        %v1927 = vld [vmem:[%s1862 + $0x69] sm:$0xff]
        %v1928 = vld [vmem:[%s1862 + $0x71] sm:$0xff]
        %v1929 = vld [vmem:[%s1862 + $0x81] sm:$0xff]
        %v1930 = vld [vmem:[%s1862 + $0x89] sm:$0xff]
        %v1931 = vld [vmem:[%s1862 + $0x91] sm:$0xff]
        %v1932 = vld [vmem:[%s1862 + $0xa1] sm:$0xff]
        %v1933 = vld [vmem:[%s1862 + $0xa9] sm:$0xff]
        %v1934 = vld [vmem:[%s1862 + $0xb1] sm:$0xff]
        %v1935 = vld [vmem:[%s1862 + $0xc1] sm:$0xff]
        %v1936 = vld [vmem:[%s1862 + $0xc9] sm:$0xff]
        %v1937 = vld [vmem:[%s1862 + $0xd1] sm:$0xff]
        %v1938 = vld [vmem:[%s1862 + $0xe1] sm:$0xff]
        %v1939 = vld [vmem:[%s1862 + $0xe9] sm:$0xff]
        %v1940 = vld [vmem:[%s1862 + $0xf1] sm:$0xff]
        %v1941 = vld [vmem:[%s1862 + $0x101] sm:$0xff]
        %v1942 = vld [vmem:[%s1862 + $0x109] sm:$0xff]
        %v1943 = vld [vmem:[%s1862 + $0x111] sm:$0xff]
        %1971 = vrot.lane.b32.xlu0 %v1917, 32
        %v1972 = vpop.permute.xlu0 %1971
        %1973 = vrot.lane.b32.xlu0 %v1918, 32
        %v1974 = vpop.permute.xlu0 %1973
        %1975 = vrot.lane.b32.xlu0 %v1919, 32
        %v1976 = vpop.permute.xlu0 %1975
        %1977 = vrot.lane.b32.xlu0 %v1920, 32
        %v1978 = vpop.permute.xlu0 %1977
        %1979 = vrot.lane.b32.xlu0 %v1921, 32
        %v1980 = vpop.permute.xlu0 %1979
        %1981 = vrot.lane.b32.xlu0 %v1922, 32
        %v1982 = vpop.permute.xlu0 %1981
        %1983 = vrot.lane.b32.xlu0 %v1923, 32
        %v1984 = vpop.permute.xlu0 %1983
        %1985 = vrot.lane.b32.xlu0 %v1924, 32
        %v1986 = vpop.permute.xlu0 %1985
        %1987 = vrot.lane.b32.xlu0 %v1925, 32
        %v1988 = vpop.permute.xlu0 %1987
        %1989 = vrot.lane.b32.xlu0 %v1926, 32
        %v1990 = vpop.permute.xlu0 %1989
        %1991 = vrot.lane.b32.xlu0 %v1927, 32
        %v1992 = vpop.permute.xlu0 %1991
        %1993 = vrot.lane.b32.xlu0 %v1928, 32
        %v1994 = vpop.permute.xlu0 %1993
        %1995 = vrot.lane.b32.xlu0 %v1929, 32
        %v1996 = vpop.permute.xlu0 %1995
        %1997 = vrot.lane.b32.xlu0 %v1930, 32
        %v1998 = vpop.permute.xlu0 %1997
        %1999 = vrot.lane.b32.xlu0 %v1931, 32
        %v2000 = vpop.permute.xlu0 %1999
        %2001 = vrot.lane.b32.xlu0 %v1932, 32
        %v2002 = vpop.permute.xlu0 %2001
        %2003 = vrot.lane.b32.xlu0 %v1933, 32
        %v2004 = vpop.permute.xlu0 %2003
        %2005 = vrot.lane.b32.xlu0 %v1934, 32
        %v2006 = vpop.permute.xlu0 %2005
        %2007 = vrot.lane.b32.xlu0 %v1935, 32
        %v2008 = vpop.permute.xlu0 %2007
        %2009 = vrot.lane.b32.xlu0 %v1936, 32
        %v2010 = vpop.permute.xlu0 %2009
        %2011 = vrot.lane.b32.xlu0 %v1937, 32
        %v2012 = vpop.permute.xlu0 %2011
        %2013 = vrot.lane.b32.xlu0 %v1938, 32
        %v2014 = vpop.permute.xlu0 %2013
        %2015 = vrot.lane.b32.xlu0 %v1939, 32
        %v2016 = vpop.permute.xlu0 %2015
        %2017 = vrot.lane.b32.xlu0 %v1940, 32
        %v2018 = vpop.permute.xlu0 %2017
        %2019 = vrot.lane.b32.xlu0 %v1941, 32
        %v2020 = vpop.permute.xlu0 %2019
        %2021 = vrot.lane.b32.xlu0 %v1942, 32
        %v2022 = vpop.permute.xlu0 %2021
        %2023 = vrot.lane.b32.xlu0 %v1943, 32
        %v2024 = vpop.permute.xlu0 %2023
        %2052 = vst.msk [vmem:[#allocation2 + $0x18] sm:$0xff] %vm424, %v1972
        %2053 = vst.msk [vmem:[#allocation2 + $0x58] sm:$0xff] %vm424, %v1974
        %2054 = vst.msk [vmem:[#allocation2 + $0x98] sm:$0xff] %vm424, %v1976
        %2055 = vst.msk [vmem:[#allocation2 + $0xd8] sm:$0xff] %vm424, %v1978
        %2056 = vst.msk [vmem:[#allocation2 + $0x118] sm:$0xff] %vm424, %v1980
        %2057 = vst.msk [vmem:[#allocation2 + $0x158] sm:$0xff] %vm424, %v1982
        %2058 = vst.msk [vmem:[#allocation2 + $0x198] sm:$0xff] %vm424, %v1984
        %2059 = vst.msk [vmem:[#allocation2 + $0x1d8] sm:$0xff] %vm424, %v1986
        %2060 = vst.msk [vmem:[#allocation2 + $0x218] sm:$0xff] %vm424, %v1988
        %2061 = vst.msk [vmem:[#allocation2 + $0x258] sm:$0xff] %vm424, %v1990
        %2062 = vst.msk [vmem:[#allocation2 + $0x298] sm:$0xff] %vm424, %v1992
        %2063 = vst.msk [vmem:[#allocation2 + $0x2d8] sm:$0xff] %vm424, %v1994
        %2064 = vst.msk [vmem:[#allocation2 + $0x318] sm:$0xff] %vm424, %v1996
        %2065 = vst.msk [vmem:[#allocation2 + $0x358] sm:$0xff] %vm424, %v1998
        %2066 = vst.msk [vmem:[#allocation2 + $0x398] sm:$0xff] %vm424, %v2000
        %2067 = vst.msk [vmem:[#allocation2 + $0x3d8] sm:$0xff] %vm424, %v2002
        %2068 = vst.msk [vmem:[#allocation2 + $0x418] sm:$0xff] %vm424, %v2004
        %2069 = vst.msk [vmem:[#allocation2 + $0x458] sm:$0xff] %vm424, %v2006
        %2070 = vst.msk [vmem:[#allocation2 + $0x498] sm:$0xff] %vm424, %v2008
        %2071 = vst.msk [vmem:[#allocation2 + $0x4d8] sm:$0xff] %vm424, %v2010
        %2072 = vst.msk [vmem:[#allocation2 + $0x518] sm:$0xff] %vm424, %v2012
        %2073 = vst.msk [vmem:[#allocation2 + $0x558] sm:$0xff] %vm424, %v2014
        %2074 = vst.msk [vmem:[#allocation2 + $0x598] sm:$0xff] %vm424, %v2016
        %2075 = vst.msk [vmem:[#allocation2 + $0x5d8] sm:$0xff] %vm424, %v2018
        %2076 = vst.msk [vmem:[#allocation2 + $0x618] sm:$0xff] %vm424, %v2020
        %2077 = vst.msk [vmem:[#allocation2 + $0x658] sm:$0xff] %vm424, %v2022
        %2078 = vst.msk [vmem:[#allocation2 + $0x698] sm:$0xff] %vm424, %v2024
        %v2079 = vld [vmem:[%s1862 + $0x2] sm:$0xff]
        %v2080 = vld [vmem:[%s1862 + $0xa] sm:$0xff]
        %v2081 = vld [vmem:[%s1862 + $0x12] sm:$0xff]
        %v2082 = vld [vmem:[%s1862 + $0x22] sm:$0xff]
        %v2083 = vld [vmem:[%s1862 + $0x2a] sm:$0xff]
        %v2084 = vld [vmem:[%s1862 + $0x32] sm:$0xff]
        %v2085 = vld [vmem:[%s1862 + $0x42] sm:$0xff]
        %v2086 = vld [vmem:[%s1862 + $0x4a] sm:$0xff]
        %v2087 = vld [vmem:[%s1862 + $0x52] sm:$0xff]
        %v2088 = vld [vmem:[%s1862 + $0x62] sm:$0xff]
        %v2089 = vld [vmem:[%s1862 + $0x6a] sm:$0xff]
        %v2090 = vld [vmem:[%s1862 + $0x72] sm:$0xff]
        %v2091 = vld [vmem:[%s1862 + $0x82] sm:$0xff]
        %v2092 = vld [vmem:[%s1862 + $0x8a] sm:$0xff]
        %v2093 = vld [vmem:[%s1862 + $0x92] sm:$0xff]
        %v2094 = vld [vmem:[%s1862 + $0xa2] sm:$0xff]
        %v2095 = vld [vmem:[%s1862 + $0xaa] sm:$0xff]
        %v2096 = vld [vmem:[%s1862 + $0xb2] sm:$0xff]
        %v2097 = vld [vmem:[%s1862 + $0xc2] sm:$0xff]
        %v2098 = vld [vmem:[%s1862 + $0xca] sm:$0xff]
        %v2099 = vld [vmem:[%s1862 + $0xd2] sm:$0xff]
        %v2100 = vld [vmem:[%s1862 + $0xe2] sm:$0xff]
        %v2101 = vld [vmem:[%s1862 + $0xea] sm:$0xff]
        %v2102 = vld [vmem:[%s1862 + $0xf2] sm:$0xff]
        %v2103 = vld [vmem:[%s1862 + $0x102] sm:$0xff]
        %v2104 = vld [vmem:[%s1862 + $0x10a] sm:$0xff]
        %v2105 = vld [vmem:[%s1862 + $0x112] sm:$0xff]
        %2133 = vrot.lane.b32.xlu0 %v2079, 64
        %v2134 = vpop.permute.xlu0 %2133
        %2135 = vrot.lane.b32.xlu0 %v2080, 64
        %v2136 = vpop.permute.xlu0 %2135
        %2137 = vrot.lane.b32.xlu0 %v2081, 64
        %v2138 = vpop.permute.xlu0 %2137
        %2139 = vrot.lane.b32.xlu0 %v2082, 64
        %v2140 = vpop.permute.xlu0 %2139
        %2141 = vrot.lane.b32.xlu0 %v2083, 64
        %v2142 = vpop.permute.xlu0 %2141
        %2143 = vrot.lane.b32.xlu0 %v2084, 64
        %v2144 = vpop.permute.xlu0 %2143
        %2145 = vrot.lane.b32.xlu0 %v2085, 64
        %v2146 = vpop.permute.xlu0 %2145
        %2147 = vrot.lane.b32.xlu0 %v2086, 64
        %v2148 = vpop.permute.xlu0 %2147
        %2149 = vrot.lane.b32.xlu0 %v2087, 64
        %v2150 = vpop.permute.xlu0 %2149
        %2151 = vrot.lane.b32.xlu0 %v2088, 64
        %v2152 = vpop.permute.xlu0 %2151
        %2153 = vrot.lane.b32.xlu0 %v2089, 64
        %v2154 = vpop.permute.xlu0 %2153
        %2155 = vrot.lane.b32.xlu0 %v2090, 64
        %v2156 = vpop.permute.xlu0 %2155
        %2157 = vrot.lane.b32.xlu0 %v2091, 64
        %v2158 = vpop.permute.xlu0 %2157
        %2159 = vrot.lane.b32.xlu0 %v2092, 64
        %v2160 = vpop.permute.xlu0 %2159
        %2161 = vrot.lane.b32.xlu0 %v2093, 64
        %v2162 = vpop.permute.xlu0 %2161
        %2163 = vrot.lane.b32.xlu0 %v2094, 64
        %v2164 = vpop.permute.xlu0 %2163
        %2165 = vrot.lane.b32.xlu0 %v2095, 64
        %v2166 = vpop.permute.xlu0 %2165
        %2167 = vrot.lane.b32.xlu0 %v2096, 64
        %v2168 = vpop.permute.xlu0 %2167
        %2169 = vrot.lane.b32.xlu0 %v2097, 64
        %v2170 = vpop.permute.xlu0 %2169
        %2171 = vrot.lane.b32.xlu0 %v2098, 64
        %v2172 = vpop.permute.xlu0 %2171
        %2173 = vrot.lane.b32.xlu0 %v2099, 64
        %v2174 = vpop.permute.xlu0 %2173
        %2175 = vrot.lane.b32.xlu0 %v2100, 64
        %v2176 = vpop.permute.xlu0 %2175
        %2177 = vrot.lane.b32.xlu0 %v2101, 64
        %v2178 = vpop.permute.xlu0 %2177
        %2179 = vrot.lane.b32.xlu0 %v2102, 64
        %v2180 = vpop.permute.xlu0 %2179
        %2181 = vrot.lane.b32.xlu0 %v2103, 64
        %v2182 = vpop.permute.xlu0 %2181
        %2183 = vrot.lane.b32.xlu0 %v2104, 64
        %v2184 = vpop.permute.xlu0 %2183
        %2185 = vrot.lane.b32.xlu0 %v2105, 64
        %v2186 = vpop.permute.xlu0 %2185
        %2214 = vst.msk [vmem:[#allocation2 + $0x18] sm:$0xff] %vm587, %v2134
        %2215 = vst.msk [vmem:[#allocation2 + $0x58] sm:$0xff] %vm587, %v2136
        %2216 = vst.msk [vmem:[#allocation2 + $0x98] sm:$0xff] %vm587, %v2138
        %2217 = vst.msk [vmem:[#allocation2 + $0xd8] sm:$0xff] %vm587, %v2140
        %2218 = vst.msk [vmem:[#allocation2 + $0x118] sm:$0xff] %vm587, %v2142
        %2219 = vst.msk [vmem:[#allocation2 + $0x158] sm:$0xff] %vm587, %v2144
        %2220 = vst.msk [vmem:[#allocation2 + $0x198] sm:$0xff] %vm587, %v2146
        %2221 = vst.msk [vmem:[#allocation2 + $0x1d8] sm:$0xff] %vm587, %v2148
        %2222 = vst.msk [vmem:[#allocation2 + $0x218] sm:$0xff] %vm587, %v2150
        %2223 = vst.msk [vmem:[#allocation2 + $0x258] sm:$0xff] %vm587, %v2152
        %2224 = vst.msk [vmem:[#allocation2 + $0x298] sm:$0xff] %vm587, %v2154
        %2225 = vst.msk [vmem:[#allocation2 + $0x2d8] sm:$0xff] %vm587, %v2156
        %2226 = vst.msk [vmem:[#allocation2 + $0x318] sm:$0xff] %vm587, %v2158
        %2227 = vst.msk [vmem:[#allocation2 + $0x358] sm:$0xff] %vm587, %v2160
        %2228 = vst.msk [vmem:[#allocation2 + $0x398] sm:$0xff] %vm587, %v2162
        %2229 = vst.msk [vmem:[#allocation2 + $0x3d8] sm:$0xff] %vm587, %v2164
        %2230 = vst.msk [vmem:[#allocation2 + $0x418] sm:$0xff] %vm587, %v2166
        %2231 = vst.msk [vmem:[#allocation2 + $0x458] sm:$0xff] %vm587, %v2168
        %2232 = vst.msk [vmem:[#allocation2 + $0x498] sm:$0xff] %vm587, %v2170
        %2233 = vst.msk [vmem:[#allocation2 + $0x4d8] sm:$0xff] %vm587, %v2172
        %2234 = vst.msk [vmem:[#allocation2 + $0x518] sm:$0xff] %vm587, %v2174
        %2235 = vst.msk [vmem:[#allocation2 + $0x558] sm:$0xff] %vm587, %v2176
        %2236 = vst.msk [vmem:[#allocation2 + $0x598] sm:$0xff] %vm587, %v2178
        %2237 = vst.msk [vmem:[#allocation2 + $0x5d8] sm:$0xff] %vm587, %v2180
        %2238 = vst.msk [vmem:[#allocation2 + $0x618] sm:$0xff] %vm587, %v2182
        %2239 = vst.msk [vmem:[#allocation2 + $0x658] sm:$0xff] %vm587, %v2184
        %2240 = vst.msk [vmem:[#allocation2 + $0x698] sm:$0xff] %vm587, %v2186
        %v2241 = vld [vmem:[%s1862 + $0x3] sm:$0xff]
        %v2242 = vld [vmem:[%s1862 + $0xb] sm:$0xff]
        %v2243 = vld [vmem:[%s1862 + $0x13] sm:$0xff]
        %v2244 = vld [vmem:[%s1862 + $0x23] sm:$0xff]
        %v2245 = vld [vmem:[%s1862 + $0x2b] sm:$0xff]
        %v2246 = vld [vmem:[%s1862 + $0x33] sm:$0xff]
        %v2247 = vld [vmem:[%s1862 + $0x43] sm:$0xff]
        %v2248 = vld [vmem:[%s1862 + $0x4b] sm:$0xff]
        %v2249 = vld [vmem:[%s1862 + $0x53] sm:$0xff]
        %v2250 = vld [vmem:[%s1862 + $0x63] sm:$0xff]
        %v2251 = vld [vmem:[%s1862 + $0x6b] sm:$0xff]
        %v2252 = vld [vmem:[%s1862 + $0x73] sm:$0xff]
        %v2253 = vld [vmem:[%s1862 + $0x83] sm:$0xff]
        %v2254 = vld [vmem:[%s1862 + $0x8b] sm:$0xff]
        %v2255 = vld [vmem:[%s1862 + $0x93] sm:$0xff]
        %v2256 = vld [vmem:[%s1862 + $0xa3] sm:$0xff]
        %v2257 = vld [vmem:[%s1862 + $0xab] sm:$0xff]
        %v2258 = vld [vmem:[%s1862 + $0xb3] sm:$0xff]
        %v2259 = vld [vmem:[%s1862 + $0xc3] sm:$0xff]
        %v2260 = vld [vmem:[%s1862 + $0xcb] sm:$0xff]
        %v2261 = vld [vmem:[%s1862 + $0xd3] sm:$0xff]
        %v2262 = vld [vmem:[%s1862 + $0xe3] sm:$0xff]
        %v2263 = vld [vmem:[%s1862 + $0xeb] sm:$0xff]
        %v2264 = vld [vmem:[%s1862 + $0xf3] sm:$0xff]
        %v2265 = vld [vmem:[%s1862 + $0x103] sm:$0xff]
        %v2266 = vld [vmem:[%s1862 + $0x10b] sm:$0xff]
        %v2267 = vld [vmem:[%s1862 + $0x113] sm:$0xff]
        %2295 = vrot.lane.b32.xlu0 %v2241, 96
        %v2296 = vpop.permute.xlu0 %2295
        %2297 = vrot.lane.b32.xlu0 %v2242, 96
        %v2298 = vpop.permute.xlu0 %2297
        %2299 = vrot.lane.b32.xlu0 %v2243, 96
        %v2300 = vpop.permute.xlu0 %2299
        %2301 = vrot.lane.b32.xlu0 %v2244, 96
        %v2302 = vpop.permute.xlu0 %2301
        %2303 = vrot.lane.b32.xlu0 %v2245, 96
        %v2304 = vpop.permute.xlu0 %2303
        %2305 = vrot.lane.b32.xlu0 %v2246, 96
        %v2306 = vpop.permute.xlu0 %2305
        %2307 = vrot.lane.b32.xlu0 %v2247, 96
        %v2308 = vpop.permute.xlu0 %2307
        %2309 = vrot.lane.b32.xlu0 %v2248, 96
        %v2310 = vpop.permute.xlu0 %2309
        %2311 = vrot.lane.b32.xlu0 %v2249, 96
        %v2312 = vpop.permute.xlu0 %2311
        %2313 = vrot.lane.b32.xlu0 %v2250, 96
        %v2314 = vpop.permute.xlu0 %2313
        %2315 = vrot.lane.b32.xlu0 %v2251, 96
        %v2316 = vpop.permute.xlu0 %2315
        %2317 = vrot.lane.b32.xlu0 %v2252, 96
        %v2318 = vpop.permute.xlu0 %2317
        %2319 = vrot.lane.b32.xlu0 %v2253, 96
        %v2320 = vpop.permute.xlu0 %2319
        %2321 = vrot.lane.b32.xlu0 %v2254, 96
        %v2322 = vpop.permute.xlu0 %2321
        %2323 = vrot.lane.b32.xlu0 %v2255, 96
        %v2324 = vpop.permute.xlu0 %2323
        %2325 = vrot.lane.b32.xlu0 %v2256, 96
        %v2326 = vpop.permute.xlu0 %2325
        %2327 = vrot.lane.b32.xlu0 %v2257, 96
        %v2328 = vpop.permute.xlu0 %2327
        %2329 = vrot.lane.b32.xlu0 %v2258, 96
        %v2330 = vpop.permute.xlu0 %2329
        %2331 = vrot.lane.b32.xlu0 %v2259, 96
        %v2332 = vpop.permute.xlu0 %2331
        %2333 = vrot.lane.b32.xlu0 %v2260, 96
        %v2334 = vpop.permute.xlu0 %2333
        %2335 = vrot.lane.b32.xlu0 %v2261, 96
        %v2336 = vpop.permute.xlu0 %2335
        %2337 = vrot.lane.b32.xlu0 %v2262, 96
        %v2338 = vpop.permute.xlu0 %2337
        %2339 = vrot.lane.b32.xlu0 %v2263, 96
        %v2340 = vpop.permute.xlu0 %2339
        %2341 = vrot.lane.b32.xlu0 %v2264, 96
        %v2342 = vpop.permute.xlu0 %2341
        %2343 = vrot.lane.b32.xlu0 %v2265, 96
        %v2344 = vpop.permute.xlu0 %2343
        %2345 = vrot.lane.b32.xlu0 %v2266, 96
        %v2346 = vpop.permute.xlu0 %2345
        %2347 = vrot.lane.b32.xlu0 %v2267, 96
        %v2348 = vpop.permute.xlu0 %2347
        %2376 = vst.msk [vmem:[#allocation2 + $0x18] sm:$0xff] %vm750, %v2296
        %2377 = vst.msk [vmem:[#allocation2 + $0x58] sm:$0xff] %vm750, %v2298
        %2378 = vst.msk [vmem:[#allocation2 + $0x98] sm:$0xff] %vm750, %v2300
        %2379 = vst.msk [vmem:[#allocation2 + $0xd8] sm:$0xff] %vm750, %v2302
        %2380 = vst.msk [vmem:[#allocation2 + $0x118] sm:$0xff] %vm750, %v2304
        %2381 = vst.msk [vmem:[#allocation2 + $0x158] sm:$0xff] %vm750, %v2306
        %2382 = vst.msk [vmem:[#allocation2 + $0x198] sm:$0xff] %vm750, %v2308
        %2383 = vst.msk [vmem:[#allocation2 + $0x1d8] sm:$0xff] %vm750, %v2310
        %2384 = vst.msk [vmem:[#allocation2 + $0x218] sm:$0xff] %vm750, %v2312
        %2385 = vst.msk [vmem:[#allocation2 + $0x258] sm:$0xff] %vm750, %v2314
        %2386 = vst.msk [vmem:[#allocation2 + $0x298] sm:$0xff] %vm750, %v2316
        %2387 = vst.msk [vmem:[#allocation2 + $0x2d8] sm:$0xff] %vm750, %v2318
        %2388 = vst.msk [vmem:[#allocation2 + $0x318] sm:$0xff] %vm750, %v2320
        %2389 = vst.msk [vmem:[#allocation2 + $0x358] sm:$0xff] %vm750, %v2322
        %2390 = vst.msk [vmem:[#allocation2 + $0x398] sm:$0xff] %vm750, %v2324
        %2391 = vst.msk [vmem:[#allocation2 + $0x3d8] sm:$0xff] %vm750, %v2326
        %2392 = vst.msk [vmem:[#allocation2 + $0x418] sm:$0xff] %vm750, %v2328
        %2393 = vst.msk [vmem:[#allocation2 + $0x458] sm:$0xff] %vm750, %v2330
        %2394 = vst.msk [vmem:[#allocation2 + $0x498] sm:$0xff] %vm750, %v2332
        %2395 = vst.msk [vmem:[#allocation2 + $0x4d8] sm:$0xff] %vm750, %v2334
        %2396 = vst.msk [vmem:[#allocation2 + $0x518] sm:$0xff] %vm750, %v2336
        %2397 = vst.msk [vmem:[#allocation2 + $0x558] sm:$0xff] %vm750, %v2338
        %2398 = vst.msk [vmem:[#allocation2 + $0x598] sm:$0xff] %vm750, %v2340
        %2399 = vst.msk [vmem:[#allocation2 + $0x5d8] sm:$0xff] %vm750, %v2342
        %2400 = vst.msk [vmem:[#allocation2 + $0x618] sm:$0xff] %vm750, %v2344
        %2401 = vst.msk [vmem:[#allocation2 + $0x658] sm:$0xff] %vm750, %v2346
        %2402 = vst.msk [vmem:[#allocation2 + $0x698] sm:$0xff] %vm750, %v2348
        %s2403 = sadd.s32 %s231, 2
        %s2404 = smul.u32 %s2403, 32
        %s2405 = scalar_lea.vmem %s224, %s2404
        %v2406 = vld [vmem:[%s2405] sm:$0xff]
        %v2407 = vld [vmem:[%s2405 + $0x8] sm:$0xff]
        %v2408 = vld [vmem:[%s2405 + $0x10] sm:$0xff]
        %v2409 = vld [vmem:[%s2405 + $0x20] sm:$0xff]
        %v2410 = vld [vmem:[%s2405 + $0x28] sm:$0xff]
        %v2411 = vld [vmem:[%s2405 + $0x30] sm:$0xff]
        %v2412 = vld [vmem:[%s2405 + $0x40] sm:$0xff]
        %v2413 = vld [vmem:[%s2405 + $0x48] sm:$0xff]
        %v2414 = vld [vmem:[%s2405 + $0x50] sm:$0xff]
        %v2415 = vld [vmem:[%s2405 + $0x60] sm:$0xff]
        %v2416 = vld [vmem:[%s2405 + $0x68] sm:$0xff]
        %v2417 = vld [vmem:[%s2405 + $0x70] sm:$0xff]
        %v2418 = vld [vmem:[%s2405 + $0x80] sm:$0xff]
        %v2419 = vld [vmem:[%s2405 + $0x88] sm:$0xff]
        %v2420 = vld [vmem:[%s2405 + $0x90] sm:$0xff]
        %v2421 = vld [vmem:[%s2405 + $0xa0] sm:$0xff]
        %v2422 = vld [vmem:[%s2405 + $0xa8] sm:$0xff]
        %v2423 = vld [vmem:[%s2405 + $0xb0] sm:$0xff]
        %v2424 = vld [vmem:[%s2405 + $0xc0] sm:$0xff]
        %v2425 = vld [vmem:[%s2405 + $0xc8] sm:$0xff]
        %v2426 = vld [vmem:[%s2405 + $0xd0] sm:$0xff]
        %v2427 = vld [vmem:[%s2405 + $0xe0] sm:$0xff]
        %v2428 = vld [vmem:[%s2405 + $0xe8] sm:$0xff]
        %v2429 = vld [vmem:[%s2405 + $0xf0] sm:$0xff]
        %v2430 = vld [vmem:[%s2405 + $0x100] sm:$0xff]
        %v2431 = vld [vmem:[%s2405 + $0x108] sm:$0xff]
        %v2432 = vld [vmem:[%s2405 + $0x110] sm:$0xff]
        %2433 = vst.msk [vmem:[#allocation2 + $0x20] sm:$0xff] %vm261, %v2406
        %2434 = vst.msk [vmem:[#allocation2 + $0x60] sm:$0xff] %vm261, %v2407
        %2435 = vst.msk [vmem:[#allocation2 + $0xa0] sm:$0xff] %vm261, %v2408
        %2436 = vst.msk [vmem:[#allocation2 + $0xe0] sm:$0xff] %vm261, %v2409
        %2437 = vst.msk [vmem:[#allocation2 + $0x120] sm:$0xff] %vm261, %v2410
        %2438 = vst.msk [vmem:[#allocation2 + $0x160] sm:$0xff] %vm261, %v2411
        %2439 = vst.msk [vmem:[#allocation2 + $0x1a0] sm:$0xff] %vm261, %v2412
        %2440 = vst.msk [vmem:[#allocation2 + $0x1e0] sm:$0xff] %vm261, %v2413
        %2441 = vst.msk [vmem:[#allocation2 + $0x220] sm:$0xff] %vm261, %v2414
        %2442 = vst.msk [vmem:[#allocation2 + $0x260] sm:$0xff] %vm261, %v2415
        %2443 = vst.msk [vmem:[#allocation2 + $0x2a0] sm:$0xff] %vm261, %v2416
        %2444 = vst.msk [vmem:[#allocation2 + $0x2e0] sm:$0xff] %vm261, %v2417
        %2445 = vst.msk [vmem:[#allocation2 + $0x320] sm:$0xff] %vm261, %v2418
        %2446 = vst.msk [vmem:[#allocation2 + $0x360] sm:$0xff] %vm261, %v2419
        %2447 = vst.msk [vmem:[#allocation2 + $0x3a0] sm:$0xff] %vm261, %v2420
        %2448 = vst.msk [vmem:[#allocation2 + $0x3e0] sm:$0xff] %vm261, %v2421
        %2449 = vst.msk [vmem:[#allocation2 + $0x420] sm:$0xff] %vm261, %v2422
        %2450 = vst.msk [vmem:[#allocation2 + $0x460] sm:$0xff] %vm261, %v2423
        %2451 = vst.msk [vmem:[#allocation2 + $0x4a0] sm:$0xff] %vm261, %v2424
        %2452 = vst.msk [vmem:[#allocation2 + $0x4e0] sm:$0xff] %vm261, %v2425
        %2453 = vst.msk [vmem:[#allocation2 + $0x520] sm:$0xff] %vm261, %v2426
        %2454 = vst.msk [vmem:[#allocation2 + $0x560] sm:$0xff] %vm261, %v2427
        %2455 = vst.msk [vmem:[#allocation2 + $0x5a0] sm:$0xff] %vm261, %v2428
        %2456 = vst.msk [vmem:[#allocation2 + $0x5e0] sm:$0xff] %vm261, %v2429
        %2457 = vst.msk [vmem:[#allocation2 + $0x620] sm:$0xff] %vm261, %v2430
        %2458 = vst.msk [vmem:[#allocation2 + $0x660] sm:$0xff] %vm261, %v2431
        %2459 = vst.msk [vmem:[#allocation2 + $0x6a0] sm:$0xff] %vm261, %v2432
        %v2460 = vld [vmem:[%s2405 + $0x1] sm:$0xff]
        %v2461 = vld [vmem:[%s2405 + $0x9] sm:$0xff]
        %v2462 = vld [vmem:[%s2405 + $0x11] sm:$0xff]
        %v2463 = vld [vmem:[%s2405 + $0x21] sm:$0xff]
        %v2464 = vld [vmem:[%s2405 + $0x29] sm:$0xff]
        %v2465 = vld [vmem:[%s2405 + $0x31] sm:$0xff]
        %v2466 = vld [vmem:[%s2405 + $0x41] sm:$0xff]
        %v2467 = vld [vmem:[%s2405 + $0x49] sm:$0xff]
        %v2468 = vld [vmem:[%s2405 + $0x51] sm:$0xff]
        %v2469 = vld [vmem:[%s2405 + $0x61] sm:$0xff]
        %v2470 = vld [vmem:[%s2405 + $0x69] sm:$0xff]
        %v2471 = vld [vmem:[%s2405 + $0x71] sm:$0xff]
        %v2472 = vld [vmem:[%s2405 + $0x81] sm:$0xff]
        %v2473 = vld [vmem:[%s2405 + $0x89] sm:$0xff]
        %v2474 = vld [vmem:[%s2405 + $0x91] sm:$0xff]
        %v2475 = vld [vmem:[%s2405 + $0xa1] sm:$0xff]
        %v2476 = vld [vmem:[%s2405 + $0xa9] sm:$0xff]
        %v2477 = vld [vmem:[%s2405 + $0xb1] sm:$0xff]
        %v2478 = vld [vmem:[%s2405 + $0xc1] sm:$0xff]
        %v2479 = vld [vmem:[%s2405 + $0xc9] sm:$0xff]
        %v2480 = vld [vmem:[%s2405 + $0xd1] sm:$0xff]
        %v2481 = vld [vmem:[%s2405 + $0xe1] sm:$0xff]
        %v2482 = vld [vmem:[%s2405 + $0xe9] sm:$0xff]
        %v2483 = vld [vmem:[%s2405 + $0xf1] sm:$0xff]
        %v2484 = vld [vmem:[%s2405 + $0x101] sm:$0xff]
        %v2485 = vld [vmem:[%s2405 + $0x109] sm:$0xff]
        %v2486 = vld [vmem:[%s2405 + $0x111] sm:$0xff]
        %2514 = vrot.lane.b32.xlu0 %v2460, 32
        %v2515 = vpop.permute.xlu0 %2514
        %2516 = vrot.lane.b32.xlu0 %v2461, 32
        %v2517 = vpop.permute.xlu0 %2516
        %2518 = vrot.lane.b32.xlu0 %v2462, 32
        %v2519 = vpop.permute.xlu0 %2518
        %2520 = vrot.lane.b32.xlu0 %v2463, 32
        %v2521 = vpop.permute.xlu0 %2520
        %2522 = vrot.lane.b32.xlu0 %v2464, 32
        %v2523 = vpop.permute.xlu0 %2522
        %2524 = vrot.lane.b32.xlu0 %v2465, 32
        %v2525 = vpop.permute.xlu0 %2524
        %2526 = vrot.lane.b32.xlu0 %v2466, 32
        %v2527 = vpop.permute.xlu0 %2526
        %2528 = vrot.lane.b32.xlu0 %v2467, 32
        %v2529 = vpop.permute.xlu0 %2528
        %2530 = vrot.lane.b32.xlu0 %v2468, 32
        %v2531 = vpop.permute.xlu0 %2530
        %2532 = vrot.lane.b32.xlu0 %v2469, 32
        %v2533 = vpop.permute.xlu0 %2532
        %2534 = vrot.lane.b32.xlu0 %v2470, 32
        %v2535 = vpop.permute.xlu0 %2534
        %2536 = vrot.lane.b32.xlu0 %v2471, 32
        %v2537 = vpop.permute.xlu0 %2536
        %2538 = vrot.lane.b32.xlu0 %v2472, 32
        %v2539 = vpop.permute.xlu0 %2538
        %2540 = vrot.lane.b32.xlu0 %v2473, 32
        %v2541 = vpop.permute.xlu0 %2540
        %2542 = vrot.lane.b32.xlu0 %v2474, 32
        %v2543 = vpop.permute.xlu0 %2542
        %2544 = vrot.lane.b32.xlu0 %v2475, 32
        %v2545 = vpop.permute.xlu0 %2544
        %2546 = vrot.lane.b32.xlu0 %v2476, 32
        %v2547 = vpop.permute.xlu0 %2546
        %2548 = vrot.lane.b32.xlu0 %v2477, 32
        %v2549 = vpop.permute.xlu0 %2548
        %2550 = vrot.lane.b32.xlu0 %v2478, 32
        %v2551 = vpop.permute.xlu0 %2550
        %2552 = vrot.lane.b32.xlu0 %v2479, 32
        %v2553 = vpop.permute.xlu0 %2552
        %2554 = vrot.lane.b32.xlu0 %v2480, 32
        %v2555 = vpop.permute.xlu0 %2554
        %2556 = vrot.lane.b32.xlu0 %v2481, 32
        %v2557 = vpop.permute.xlu0 %2556
        %2558 = vrot.lane.b32.xlu0 %v2482, 32
        %v2559 = vpop.permute.xlu0 %2558
        %2560 = vrot.lane.b32.xlu0 %v2483, 32
        %v2561 = vpop.permute.xlu0 %2560
        %2562 = vrot.lane.b32.xlu0 %v2484, 32
        %v2563 = vpop.permute.xlu0 %2562
        %2564 = vrot.lane.b32.xlu0 %v2485, 32
        %v2565 = vpop.permute.xlu0 %2564
        %2566 = vrot.lane.b32.xlu0 %v2486, 32
        %v2567 = vpop.permute.xlu0 %2566
        %2595 = vst.msk [vmem:[#allocation2 + $0x20] sm:$0xff] %vm424, %v2515
        %2596 = vst.msk [vmem:[#allocation2 + $0x60] sm:$0xff] %vm424, %v2517
        %2597 = vst.msk [vmem:[#allocation2 + $0xa0] sm:$0xff] %vm424, %v2519
        %2598 = vst.msk [vmem:[#allocation2 + $0xe0] sm:$0xff] %vm424, %v2521
        %2599 = vst.msk [vmem:[#allocation2 + $0x120] sm:$0xff] %vm424, %v2523
        %2600 = vst.msk [vmem:[#allocation2 + $0x160] sm:$0xff] %vm424, %v2525
        %2601 = vst.msk [vmem:[#allocation2 + $0x1a0] sm:$0xff] %vm424, %v2527
        %2602 = vst.msk [vmem:[#allocation2 + $0x1e0] sm:$0xff] %vm424, %v2529
        %2603 = vst.msk [vmem:[#allocation2 + $0x220] sm:$0xff] %vm424, %v2531
        %2604 = vst.msk [vmem:[#allocation2 + $0x260] sm:$0xff] %vm424, %v2533
        %2605 = vst.msk [vmem:[#allocation2 + $0x2a0] sm:$0xff] %vm424, %v2535
        %2606 = vst.msk [vmem:[#allocation2 + $0x2e0] sm:$0xff] %vm424, %v2537
        %2607 = vst.msk [vmem:[#allocation2 + $0x320] sm:$0xff] %vm424, %v2539
        %2608 = vst.msk [vmem:[#allocation2 + $0x360] sm:$0xff] %vm424, %v2541
        %2609 = vst.msk [vmem:[#allocation2 + $0x3a0] sm:$0xff] %vm424, %v2543
        %2610 = vst.msk [vmem:[#allocation2 + $0x3e0] sm:$0xff] %vm424, %v2545
        %2611 = vst.msk [vmem:[#allocation2 + $0x420] sm:$0xff] %vm424, %v2547
        %2612 = vst.msk [vmem:[#allocation2 + $0x460] sm:$0xff] %vm424, %v2549
        %2613 = vst.msk [vmem:[#allocation2 + $0x4a0] sm:$0xff] %vm424, %v2551
        %2614 = vst.msk [vmem:[#allocation2 + $0x4e0] sm:$0xff] %vm424, %v2553
        %2615 = vst.msk [vmem:[#allocation2 + $0x520] sm:$0xff] %vm424, %v2555
        %2616 = vst.msk [vmem:[#allocation2 + $0x560] sm:$0xff] %vm424, %v2557
        %2617 = vst.msk [vmem:[#allocation2 + $0x5a0] sm:$0xff] %vm424, %v2559
        %2618 = vst.msk [vmem:[#allocation2 + $0x5e0] sm:$0xff] %vm424, %v2561
        %2619 = vst.msk [vmem:[#allocation2 + $0x620] sm:$0xff] %vm424, %v2563
        %2620 = vst.msk [vmem:[#allocation2 + $0x660] sm:$0xff] %vm424, %v2565
        %2621 = vst.msk [vmem:[#allocation2 + $0x6a0] sm:$0xff] %vm424, %v2567
        %v2622 = vld [vmem:[%s2405 + $0x2] sm:$0xff]
        %v2623 = vld [vmem:[%s2405 + $0xa] sm:$0xff]
        %v2624 = vld [vmem:[%s2405 + $0x12] sm:$0xff]
        %v2625 = vld [vmem:[%s2405 + $0x22] sm:$0xff]
        %v2626 = vld [vmem:[%s2405 + $0x2a] sm:$0xff]
        %v2627 = vld [vmem:[%s2405 + $0x32] sm:$0xff]
        %v2628 = vld [vmem:[%s2405 + $0x42] sm:$0xff]
        %v2629 = vld [vmem:[%s2405 + $0x4a] sm:$0xff]
        %v2630 = vld [vmem:[%s2405 + $0x52] sm:$0xff]
        %v2631 = vld [vmem:[%s2405 + $0x62] sm:$0xff]
        %v2632 = vld [vmem:[%s2405 + $0x6a] sm:$0xff]
        %v2633 = vld [vmem:[%s2405 + $0x72] sm:$0xff]
        %v2634 = vld [vmem:[%s2405 + $0x82] sm:$0xff]
        %v2635 = vld [vmem:[%s2405 + $0x8a] sm:$0xff]
        %v2636 = vld [vmem:[%s2405 + $0x92] sm:$0xff]
        %v2637 = vld [vmem:[%s2405 + $0xa2] sm:$0xff]
        %v2638 = vld [vmem:[%s2405 + $0xaa] sm:$0xff]
        %v2639 = vld [vmem:[%s2405 + $0xb2] sm:$0xff]
        %v2640 = vld [vmem:[%s2405 + $0xc2] sm:$0xff]
        %v2641 = vld [vmem:[%s2405 + $0xca] sm:$0xff]
        %v2642 = vld [vmem:[%s2405 + $0xd2] sm:$0xff]
        %v2643 = vld [vmem:[%s2405 + $0xe2] sm:$0xff]
        %v2644 = vld [vmem:[%s2405 + $0xea] sm:$0xff]
        %v2645 = vld [vmem:[%s2405 + $0xf2] sm:$0xff]
        %v2646 = vld [vmem:[%s2405 + $0x102] sm:$0xff]
        %v2647 = vld [vmem:[%s2405 + $0x10a] sm:$0xff]
        %v2648 = vld [vmem:[%s2405 + $0x112] sm:$0xff]
        %2676 = vrot.lane.b32.xlu0 %v2622, 64
        %v2677 = vpop.permute.xlu0 %2676
        %2678 = vrot.lane.b32.xlu0 %v2623, 64
        %v2679 = vpop.permute.xlu0 %2678
        %2680 = vrot.lane.b32.xlu0 %v2624, 64
        %v2681 = vpop.permute.xlu0 %2680
        %2682 = vrot.lane.b32.xlu0 %v2625, 64
        %v2683 = vpop.permute.xlu0 %2682
        %2684 = vrot.lane.b32.xlu0 %v2626, 64
        %v2685 = vpop.permute.xlu0 %2684
        %2686 = vrot.lane.b32.xlu0 %v2627, 64
        %v2687 = vpop.permute.xlu0 %2686
        %2688 = vrot.lane.b32.xlu0 %v2628, 64
        %v2689 = vpop.permute.xlu0 %2688
        %2690 = vrot.lane.b32.xlu0 %v2629, 64
        %v2691 = vpop.permute.xlu0 %2690
        %2692 = vrot.lane.b32.xlu0 %v2630, 64
        %v2693 = vpop.permute.xlu0 %2692
        %2694 = vrot.lane.b32.xlu0 %v2631, 64
        %v2695 = vpop.permute.xlu0 %2694
        %2696 = vrot.lane.b32.xlu0 %v2632, 64
        %v2697 = vpop.permute.xlu0 %2696
        %2698 = vrot.lane.b32.xlu0 %v2633, 64
        %v2699 = vpop.permute.xlu0 %2698
        %2700 = vrot.lane.b32.xlu0 %v2634, 64
        %v2701 = vpop.permute.xlu0 %2700
        %2702 = vrot.lane.b32.xlu0 %v2635, 64
        %v2703 = vpop.permute.xlu0 %2702
        %2704 = vrot.lane.b32.xlu0 %v2636, 64
        %v2705 = vpop.permute.xlu0 %2704
        %2706 = vrot.lane.b32.xlu0 %v2637, 64
        %v2707 = vpop.permute.xlu0 %2706
        %2708 = vrot.lane.b32.xlu0 %v2638, 64
        %v2709 = vpop.permute.xlu0 %2708
        %2710 = vrot.lane.b32.xlu0 %v2639, 64
        %v2711 = vpop.permute.xlu0 %2710
        %2712 = vrot.lane.b32.xlu0 %v2640, 64
        %v2713 = vpop.permute.xlu0 %2712
        %2714 = vrot.lane.b32.xlu0 %v2641, 64
        %v2715 = vpop.permute.xlu0 %2714
        %2716 = vrot.lane.b32.xlu0 %v2642, 64
        %v2717 = vpop.permute.xlu0 %2716
        %2718 = vrot.lane.b32.xlu0 %v2643, 64
        %v2719 = vpop.permute.xlu0 %2718
        %2720 = vrot.lane.b32.xlu0 %v2644, 64
        %v2721 = vpop.permute.xlu0 %2720
        %2722 = vrot.lane.b32.xlu0 %v2645, 64
        %v2723 = vpop.permute.xlu0 %2722
        %2724 = vrot.lane.b32.xlu0 %v2646, 64
        %v2725 = vpop.permute.xlu0 %2724
        %2726 = vrot.lane.b32.xlu0 %v2647, 64
        %v2727 = vpop.permute.xlu0 %2726
        %2728 = vrot.lane.b32.xlu0 %v2648, 64
        %v2729 = vpop.permute.xlu0 %2728
        %2757 = vst.msk [vmem:[#allocation2 + $0x20] sm:$0xff] %vm587, %v2677
        %2758 = vst.msk [vmem:[#allocation2 + $0x60] sm:$0xff] %vm587, %v2679
        %2759 = vst.msk [vmem:[#allocation2 + $0xa0] sm:$0xff] %vm587, %v2681
        %2760 = vst.msk [vmem:[#allocation2 + $0xe0] sm:$0xff] %vm587, %v2683
        %2761 = vst.msk [vmem:[#allocation2 + $0x120] sm:$0xff] %vm587, %v2685
        %2762 = vst.msk [vmem:[#allocation2 + $0x160] sm:$0xff] %vm587, %v2687
        %2763 = vst.msk [vmem:[#allocation2 + $0x1a0] sm:$0xff] %vm587, %v2689
        %2764 = vst.msk [vmem:[#allocation2 + $0x1e0] sm:$0xff] %vm587, %v2691
        %2765 = vst.msk [vmem:[#allocation2 + $0x220] sm:$0xff] %vm587, %v2693
        %2766 = vst.msk [vmem:[#allocation2 + $0x260] sm:$0xff] %vm587, %v2695
        %2767 = vst.msk [vmem:[#allocation2 + $0x2a0] sm:$0xff] %vm587, %v2697
        %2768 = vst.msk [vmem:[#allocation2 + $0x2e0] sm:$0xff] %vm587, %v2699
        %2769 = vst.msk [vmem:[#allocation2 + $0x320] sm:$0xff] %vm587, %v2701
        %2770 = vst.msk [vmem:[#allocation2 + $0x360] sm:$0xff] %vm587, %v2703
        %2771 = vst.msk [vmem:[#allocation2 + $0x3a0] sm:$0xff] %vm587, %v2705
        %2772 = vst.msk [vmem:[#allocation2 + $0x3e0] sm:$0xff] %vm587, %v2707
        %2773 = vst.msk [vmem:[#allocation2 + $0x420] sm:$0xff] %vm587, %v2709
        %2774 = vst.msk [vmem:[#allocation2 + $0x460] sm:$0xff] %vm587, %v2711
        %2775 = vst.msk [vmem:[#allocation2 + $0x4a0] sm:$0xff] %vm587, %v2713
        %2776 = vst.msk [vmem:[#allocation2 + $0x4e0] sm:$0xff] %vm587, %v2715
        %2777 = vst.msk [vmem:[#allocation2 + $0x520] sm:$0xff] %vm587, %v2717
        %2778 = vst.msk [vmem:[#allocation2 + $0x560] sm:$0xff] %vm587, %v2719
        %2779 = vst.msk [vmem:[#allocation2 + $0x5a0] sm:$0xff] %vm587, %v2721
        %2780 = vst.msk [vmem:[#allocation2 + $0x5e0] sm:$0xff] %vm587, %v2723
        %2781 = vst.msk [vmem:[#allocation2 + $0x620] sm:$0xff] %vm587, %v2725
        %2782 = vst.msk [vmem:[#allocation2 + $0x660] sm:$0xff] %vm587, %v2727
        %2783 = vst.msk [vmem:[#allocation2 + $0x6a0] sm:$0xff] %vm587, %v2729
        %v2784 = vld [vmem:[%s2405 + $0x3] sm:$0xff]
        %v2785 = vld [vmem:[%s2405 + $0xb] sm:$0xff]
        %v2786 = vld [vmem:[%s2405 + $0x13] sm:$0xff]
        %v2787 = vld [vmem:[%s2405 + $0x23] sm:$0xff]
        %v2788 = vld [vmem:[%s2405 + $0x2b] sm:$0xff]
        %v2789 = vld [vmem:[%s2405 + $0x33] sm:$0xff]
        %v2790 = vld [vmem:[%s2405 + $0x43] sm:$0xff]
        %v2791 = vld [vmem:[%s2405 + $0x4b] sm:$0xff]
        %v2792 = vld [vmem:[%s2405 + $0x53] sm:$0xff]
        %v2793 = vld [vmem:[%s2405 + $0x63] sm:$0xff]
        %v2794 = vld [vmem:[%s2405 + $0x6b] sm:$0xff]
        %v2795 = vld [vmem:[%s2405 + $0x73] sm:$0xff]
        %v2796 = vld [vmem:[%s2405 + $0x83] sm:$0xff]
        %v2797 = vld [vmem:[%s2405 + $0x8b] sm:$0xff]
        %v2798 = vld [vmem:[%s2405 + $0x93] sm:$0xff]
        %v2799 = vld [vmem:[%s2405 + $0xa3] sm:$0xff]
        %v2800 = vld [vmem:[%s2405 + $0xab] sm:$0xff]
        %v2801 = vld [vmem:[%s2405 + $0xb3] sm:$0xff]
        %v2802 = vld [vmem:[%s2405 + $0xc3] sm:$0xff]
        %v2803 = vld [vmem:[%s2405 + $0xcb] sm:$0xff]
        %v2804 = vld [vmem:[%s2405 + $0xd3] sm:$0xff]
        %v2805 = vld [vmem:[%s2405 + $0xe3] sm:$0xff]
        %v2806 = vld [vmem:[%s2405 + $0xeb] sm:$0xff]
        %v2807 = vld [vmem:[%s2405 + $0xf3] sm:$0xff]
        %v2808 = vld [vmem:[%s2405 + $0x103] sm:$0xff]
        %v2809 = vld [vmem:[%s2405 + $0x10b] sm:$0xff]
        %v2810 = vld [vmem:[%s2405 + $0x113] sm:$0xff]
        %2838 = vrot.lane.b32.xlu0 %v2784, 96
        %v2839 = vpop.permute.xlu0 %2838
        %2840 = vrot.lane.b32.xlu0 %v2785, 96
        %v2841 = vpop.permute.xlu0 %2840
        %2842 = vrot.lane.b32.xlu0 %v2786, 96
        %v2843 = vpop.permute.xlu0 %2842
        %2844 = vrot.lane.b32.xlu0 %v2787, 96
        %v2845 = vpop.permute.xlu0 %2844
        %2846 = vrot.lane.b32.xlu0 %v2788, 96
        %v2847 = vpop.permute.xlu0 %2846
        %2848 = vrot.lane.b32.xlu0 %v2789, 96
        %v2849 = vpop.permute.xlu0 %2848
        %2850 = vrot.lane.b32.xlu0 %v2790, 96
        %v2851 = vpop.permute.xlu0 %2850
        %2852 = vrot.lane.b32.xlu0 %v2791, 96
        %v2853 = vpop.permute.xlu0 %2852
        %2854 = vrot.lane.b32.xlu0 %v2792, 96
        %v2855 = vpop.permute.xlu0 %2854
        %2856 = vrot.lane.b32.xlu0 %v2793, 96
        %v2857 = vpop.permute.xlu0 %2856
        %2858 = vrot.lane.b32.xlu0 %v2794, 96
        %v2859 = vpop.permute.xlu0 %2858
        %2860 = vrot.lane.b32.xlu0 %v2795, 96
        %v2861 = vpop.permute.xlu0 %2860
        %2862 = vrot.lane.b32.xlu0 %v2796, 96
        %v2863 = vpop.permute.xlu0 %2862
        %2864 = vrot.lane.b32.xlu0 %v2797, 96
        %v2865 = vpop.permute.xlu0 %2864
        %2866 = vrot.lane.b32.xlu0 %v2798, 96
        %v2867 = vpop.permute.xlu0 %2866
        %2868 = vrot.lane.b32.xlu0 %v2799, 96
        %v2869 = vpop.permute.xlu0 %2868
        %2870 = vrot.lane.b32.xlu0 %v2800, 96
        %v2871 = vpop.permute.xlu0 %2870
        %2872 = vrot.lane.b32.xlu0 %v2801, 96
        %v2873 = vpop.permute.xlu0 %2872
        %2874 = vrot.lane.b32.xlu0 %v2802, 96
        %v2875 = vpop.permute.xlu0 %2874
        %2876 = vrot.lane.b32.xlu0 %v2803, 96
        %v2877 = vpop.permute.xlu0 %2876
        %2878 = vrot.lane.b32.xlu0 %v2804, 96
        %v2879 = vpop.permute.xlu0 %2878
        %2880 = vrot.lane.b32.xlu0 %v2805, 96
        %v2881 = vpop.permute.xlu0 %2880
        %2882 = vrot.lane.b32.xlu0 %v2806, 96
        %v2883 = vpop.permute.xlu0 %2882
        %2884 = vrot.lane.b32.xlu0 %v2807, 96
        %v2885 = vpop.permute.xlu0 %2884
        %2886 = vrot.lane.b32.xlu0 %v2808, 96
        %v2887 = vpop.permute.xlu0 %2886
        %2888 = vrot.lane.b32.xlu0 %v2809, 96
        %v2889 = vpop.permute.xlu0 %2888
        %2890 = vrot.lane.b32.xlu0 %v2810, 96
        %v2891 = vpop.permute.xlu0 %2890
        %2919 = vst.msk [vmem:[#allocation2 + $0x20] sm:$0xff] %vm750, %v2839
        %2920 = vst.msk [vmem:[#allocation2 + $0x60] sm:$0xff] %vm750, %v2841
        %2921 = vst.msk [vmem:[#allocation2 + $0xa0] sm:$0xff] %vm750, %v2843
        %2922 = vst.msk [vmem:[#allocation2 + $0xe0] sm:$0xff] %vm750, %v2845
        %2923 = vst.msk [vmem:[#allocation2 + $0x120] sm:$0xff] %vm750, %v2847
        %2924 = vst.msk [vmem:[#allocation2 + $0x160] sm:$0xff] %vm750, %v2849
        %2925 = vst.msk [vmem:[#allocation2 + $0x1a0] sm:$0xff] %vm750, %v2851
        %2926 = vst.msk [vmem:[#allocation2 + $0x1e0] sm:$0xff] %vm750, %v2853
        %2927 = vst.msk [vmem:[#allocation2 + $0x220] sm:$0xff] %vm750, %v2855
        %2928 = vst.msk [vmem:[#allocation2 + $0x260] sm:$0xff] %vm750, %v2857
        %2929 = vst.msk [vmem:[#allocation2 + $0x2a0] sm:$0xff] %vm750, %v2859
        %2930 = vst.msk [vmem:[#allocation2 + $0x2e0] sm:$0xff] %vm750, %v2861
        %2931 = vst.msk [vmem:[#allocation2 + $0x320] sm:$0xff] %vm750, %v2863
        %2932 = vst.msk [vmem:[#allocation2 + $0x360] sm:$0xff] %vm750, %v2865
        %2933 = vst.msk [vmem:[#allocation2 + $0x3a0] sm:$0xff] %vm750, %v2867
        %2934 = vst.msk [vmem:[#allocation2 + $0x3e0] sm:$0xff] %vm750, %v2869
        %2935 = vst.msk [vmem:[#allocation2 + $0x420] sm:$0xff] %vm750, %v2871
        %2936 = vst.msk [vmem:[#allocation2 + $0x460] sm:$0xff] %vm750, %v2873
        %2937 = vst.msk [vmem:[#allocation2 + $0x4a0] sm:$0xff] %vm750, %v2875
        %2938 = vst.msk [vmem:[#allocation2 + $0x4e0] sm:$0xff] %vm750, %v2877
        %2939 = vst.msk [vmem:[#allocation2 + $0x520] sm:$0xff] %vm750, %v2879
        %2940 = vst.msk [vmem:[#allocation2 + $0x560] sm:$0xff] %vm750, %v2881
        %2941 = vst.msk [vmem:[#allocation2 + $0x5a0] sm:$0xff] %vm750, %v2883
        %2942 = vst.msk [vmem:[#allocation2 + $0x5e0] sm:$0xff] %vm750, %v2885
        %2943 = vst.msk [vmem:[#allocation2 + $0x620] sm:$0xff] %vm750, %v2887
        %2944 = vst.msk [vmem:[#allocation2 + $0x660] sm:$0xff] %vm750, %v2889
        %2945 = vst.msk [vmem:[#allocation2 + $0x6a0] sm:$0xff] %vm750, %v2891
        %s2946 = scalar_lea.vmem %s229, %s2404
        %v2947 = vld [vmem:[%s2946] sm:$0xff]
        %v2948 = vld [vmem:[%s2946 + $0x8] sm:$0xff]
        %v2949 = vld [vmem:[%s2946 + $0x10] sm:$0xff]
        %v2950 = vld [vmem:[%s2946 + $0x20] sm:$0xff]
        %v2951 = vld [vmem:[%s2946 + $0x28] sm:$0xff]
        %v2952 = vld [vmem:[%s2946 + $0x30] sm:$0xff]
        %v2953 = vld [vmem:[%s2946 + $0x40] sm:$0xff]
        %v2954 = vld [vmem:[%s2946 + $0x48] sm:$0xff]
        %v2955 = vld [vmem:[%s2946 + $0x50] sm:$0xff]
        %v2956 = vld [vmem:[%s2946 + $0x60] sm:$0xff]
        %v2957 = vld [vmem:[%s2946 + $0x68] sm:$0xff]
        %v2958 = vld [vmem:[%s2946 + $0x70] sm:$0xff]
        %v2959 = vld [vmem:[%s2946 + $0x80] sm:$0xff]
        %v2960 = vld [vmem:[%s2946 + $0x88] sm:$0xff]
        %v2961 = vld [vmem:[%s2946 + $0x90] sm:$0xff]
        %v2962 = vld [vmem:[%s2946 + $0xa0] sm:$0xff]
        %v2963 = vld [vmem:[%s2946 + $0xa8] sm:$0xff]
        %v2964 = vld [vmem:[%s2946 + $0xb0] sm:$0xff]
        %v2965 = vld [vmem:[%s2946 + $0xc0] sm:$0xff]
        %v2966 = vld [vmem:[%s2946 + $0xc8] sm:$0xff]
        %v2967 = vld [vmem:[%s2946 + $0xd0] sm:$0xff]
        %v2968 = vld [vmem:[%s2946 + $0xe0] sm:$0xff]
        %v2969 = vld [vmem:[%s2946 + $0xe8] sm:$0xff]
        %v2970 = vld [vmem:[%s2946 + $0xf0] sm:$0xff]
        %v2971 = vld [vmem:[%s2946 + $0x100] sm:$0xff]
        %v2972 = vld [vmem:[%s2946 + $0x108] sm:$0xff]
        %v2973 = vld [vmem:[%s2946 + $0x110] sm:$0xff]
        %2974 = vst.msk [vmem:[#allocation2 + $0x28] sm:$0xff] %vm261, %v2947
        %2975 = vst.msk [vmem:[#allocation2 + $0x68] sm:$0xff] %vm261, %v2948
        %2976 = vst.msk [vmem:[#allocation2 + $0xa8] sm:$0xff] %vm261, %v2949
        %2977 = vst.msk [vmem:[#allocation2 + $0xe8] sm:$0xff] %vm261, %v2950
        %2978 = vst.msk [vmem:[#allocation2 + $0x128] sm:$0xff] %vm261, %v2951
        %2979 = vst.msk [vmem:[#allocation2 + $0x168] sm:$0xff] %vm261, %v2952
        %2980 = vst.msk [vmem:[#allocation2 + $0x1a8] sm:$0xff] %vm261, %v2953
        %2981 = vst.msk [vmem:[#allocation2 + $0x1e8] sm:$0xff] %vm261, %v2954
        %2982 = vst.msk [vmem:[#allocation2 + $0x228] sm:$0xff] %vm261, %v2955
        %2983 = vst.msk [vmem:[#allocation2 + $0x268] sm:$0xff] %vm261, %v2956
        %2984 = vst.msk [vmem:[#allocation2 + $0x2a8] sm:$0xff] %vm261, %v2957
        %2985 = vst.msk [vmem:[#allocation2 + $0x2e8] sm:$0xff] %vm261, %v2958
        %2986 = vst.msk [vmem:[#allocation2 + $0x328] sm:$0xff] %vm261, %v2959
        %2987 = vst.msk [vmem:[#allocation2 + $0x368] sm:$0xff] %vm261, %v2960
        %2988 = vst.msk [vmem:[#allocation2 + $0x3a8] sm:$0xff] %vm261, %v2961
        %2989 = vst.msk [vmem:[#allocation2 + $0x3e8] sm:$0xff] %vm261, %v2962
        %2990 = vst.msk [vmem:[#allocation2 + $0x428] sm:$0xff] %vm261, %v2963
        %2991 = vst.msk [vmem:[#allocation2 + $0x468] sm:$0xff] %vm261, %v2964
        %2992 = vst.msk [vmem:[#allocation2 + $0x4a8] sm:$0xff] %vm261, %v2965
        %2993 = vst.msk [vmem:[#allocation2 + $0x4e8] sm:$0xff] %vm261, %v2966
        %2994 = vst.msk [vmem:[#allocation2 + $0x528] sm:$0xff] %vm261, %v2967
        %2995 = vst.msk [vmem:[#allocation2 + $0x568] sm:$0xff] %vm261, %v2968
        %2996 = vst.msk [vmem:[#allocation2 + $0x5a8] sm:$0xff] %vm261, %v2969
        %2997 = vst.msk [vmem:[#allocation2 + $0x5e8] sm:$0xff] %vm261, %v2970
        %2998 = vst.msk [vmem:[#allocation2 + $0x628] sm:$0xff] %vm261, %v2971
        %2999 = vst.msk [vmem:[#allocation2 + $0x668] sm:$0xff] %vm261, %v2972
        %3000 = vst.msk [vmem:[#allocation2 + $0x6a8] sm:$0xff] %vm261, %v2973
        %v3001 = vld [vmem:[%s2946 + $0x1] sm:$0xff]
        %v3002 = vld [vmem:[%s2946 + $0x9] sm:$0xff]
        %v3003 = vld [vmem:[%s2946 + $0x11] sm:$0xff]
        %v3004 = vld [vmem:[%s2946 + $0x21] sm:$0xff]
        %v3005 = vld [vmem:[%s2946 + $0x29] sm:$0xff]
        %v3006 = vld [vmem:[%s2946 + $0x31] sm:$0xff]
        %v3007 = vld [vmem:[%s2946 + $0x41] sm:$0xff]
        %v3008 = vld [vmem:[%s2946 + $0x49] sm:$0xff]
        %v3009 = vld [vmem:[%s2946 + $0x51] sm:$0xff]
        %v3010 = vld [vmem:[%s2946 + $0x61] sm:$0xff]
        %v3011 = vld [vmem:[%s2946 + $0x69] sm:$0xff]
        %v3012 = vld [vmem:[%s2946 + $0x71] sm:$0xff]
        %v3013 = vld [vmem:[%s2946 + $0x81] sm:$0xff]
        %v3014 = vld [vmem:[%s2946 + $0x89] sm:$0xff]
        %v3015 = vld [vmem:[%s2946 + $0x91] sm:$0xff]
        %v3016 = vld [vmem:[%s2946 + $0xa1] sm:$0xff]
        %v3017 = vld [vmem:[%s2946 + $0xa9] sm:$0xff]
        %v3018 = vld [vmem:[%s2946 + $0xb1] sm:$0xff]
        %v3019 = vld [vmem:[%s2946 + $0xc1] sm:$0xff]
        %v3020 = vld [vmem:[%s2946 + $0xc9] sm:$0xff]
        %v3021 = vld [vmem:[%s2946 + $0xd1] sm:$0xff]
        %v3022 = vld [vmem:[%s2946 + $0xe1] sm:$0xff]
        %v3023 = vld [vmem:[%s2946 + $0xe9] sm:$0xff]
        %v3024 = vld [vmem:[%s2946 + $0xf1] sm:$0xff]
        %v3025 = vld [vmem:[%s2946 + $0x101] sm:$0xff]
        %v3026 = vld [vmem:[%s2946 + $0x109] sm:$0xff]
        %v3027 = vld [vmem:[%s2946 + $0x111] sm:$0xff]
        %3055 = vrot.lane.b32.xlu0 %v3001, 32
        %v3056 = vpop.permute.xlu0 %3055
        %3057 = vrot.lane.b32.xlu0 %v3002, 32
        %v3058 = vpop.permute.xlu0 %3057
        %3059 = vrot.lane.b32.xlu0 %v3003, 32
        %v3060 = vpop.permute.xlu0 %3059
        %3061 = vrot.lane.b32.xlu0 %v3004, 32
        %v3062 = vpop.permute.xlu0 %3061
        %3063 = vrot.lane.b32.xlu0 %v3005, 32
        %v3064 = vpop.permute.xlu0 %3063
        %3065 = vrot.lane.b32.xlu0 %v3006, 32
        %v3066 = vpop.permute.xlu0 %3065
        %3067 = vrot.lane.b32.xlu0 %v3007, 32
        %v3068 = vpop.permute.xlu0 %3067
        %3069 = vrot.lane.b32.xlu0 %v3008, 32
        %v3070 = vpop.permute.xlu0 %3069
        %3071 = vrot.lane.b32.xlu0 %v3009, 32
        %v3072 = vpop.permute.xlu0 %3071
        %3073 = vrot.lane.b32.xlu0 %v3010, 32
        %v3074 = vpop.permute.xlu0 %3073
        %3075 = vrot.lane.b32.xlu0 %v3011, 32
        %v3076 = vpop.permute.xlu0 %3075
        %3077 = vrot.lane.b32.xlu0 %v3012, 32
        %v3078 = vpop.permute.xlu0 %3077
        %3079 = vrot.lane.b32.xlu0 %v3013, 32
        %v3080 = vpop.permute.xlu0 %3079
        %3081 = vrot.lane.b32.xlu0 %v3014, 32
        %v3082 = vpop.permute.xlu0 %3081
        %3083 = vrot.lane.b32.xlu0 %v3015, 32
        %v3084 = vpop.permute.xlu0 %3083
        %3085 = vrot.lane.b32.xlu0 %v3016, 32
        %v3086 = vpop.permute.xlu0 %3085
        %3087 = vrot.lane.b32.xlu0 %v3017, 32
        %v3088 = vpop.permute.xlu0 %3087
        %3089 = vrot.lane.b32.xlu0 %v3018, 32
        %v3090 = vpop.permute.xlu0 %3089
        %3091 = vrot.lane.b32.xlu0 %v3019, 32
        %v3092 = vpop.permute.xlu0 %3091
        %3093 = vrot.lane.b32.xlu0 %v3020, 32
        %v3094 = vpop.permute.xlu0 %3093
        %3095 = vrot.lane.b32.xlu0 %v3021, 32
        %v3096 = vpop.permute.xlu0 %3095
        %3097 = vrot.lane.b32.xlu0 %v3022, 32
        %v3098 = vpop.permute.xlu0 %3097
        %3099 = vrot.lane.b32.xlu0 %v3023, 32
        %v3100 = vpop.permute.xlu0 %3099
        %3101 = vrot.lane.b32.xlu0 %v3024, 32
        %v3102 = vpop.permute.xlu0 %3101
        %3103 = vrot.lane.b32.xlu0 %v3025, 32
        %v3104 = vpop.permute.xlu0 %3103
        %3105 = vrot.lane.b32.xlu0 %v3026, 32
        %v3106 = vpop.permute.xlu0 %3105
        %3107 = vrot.lane.b32.xlu0 %v3027, 32
        %v3108 = vpop.permute.xlu0 %3107
        %3136 = vst.msk [vmem:[#allocation2 + $0x28] sm:$0xff] %vm424, %v3056
        %3137 = vst.msk [vmem:[#allocation2 + $0x68] sm:$0xff] %vm424, %v3058
        %3138 = vst.msk [vmem:[#allocation2 + $0xa8] sm:$0xff] %vm424, %v3060
        %3139 = vst.msk [vmem:[#allocation2 + $0xe8] sm:$0xff] %vm424, %v3062
        %3140 = vst.msk [vmem:[#allocation2 + $0x128] sm:$0xff] %vm424, %v3064
        %3141 = vst.msk [vmem:[#allocation2 + $0x168] sm:$0xff] %vm424, %v3066
        %3142 = vst.msk [vmem:[#allocation2 + $0x1a8] sm:$0xff] %vm424, %v3068
        %3143 = vst.msk [vmem:[#allocation2 + $0x1e8] sm:$0xff] %vm424, %v3070
        %3144 = vst.msk [vmem:[#allocation2 + $0x228] sm:$0xff] %vm424, %v3072
        %3145 = vst.msk [vmem:[#allocation2 + $0x268] sm:$0xff] %vm424, %v3074
        %3146 = vst.msk [vmem:[#allocation2 + $0x2a8] sm:$0xff] %vm424, %v3076
        %3147 = vst.msk [vmem:[#allocation2 + $0x2e8] sm:$0xff] %vm424, %v3078
        %3148 = vst.msk [vmem:[#allocation2 + $0x328] sm:$0xff] %vm424, %v3080
        %3149 = vst.msk [vmem:[#allocation2 + $0x368] sm:$0xff] %vm424, %v3082
        %3150 = vst.msk [vmem:[#allocation2 + $0x3a8] sm:$0xff] %vm424, %v3084
        %3151 = vst.msk [vmem:[#allocation2 + $0x3e8] sm:$0xff] %vm424, %v3086
        %3152 = vst.msk [vmem:[#allocation2 + $0x428] sm:$0xff] %vm424, %v3088
        %3153 = vst.msk [vmem:[#allocation2 + $0x468] sm:$0xff] %vm424, %v3090
        %3154 = vst.msk [vmem:[#allocation2 + $0x4a8] sm:$0xff] %vm424, %v3092
        %3155 = vst.msk [vmem:[#allocation2 + $0x4e8] sm:$0xff] %vm424, %v3094
        %3156 = vst.msk [vmem:[#allocation2 + $0x528] sm:$0xff] %vm424, %v3096
        %3157 = vst.msk [vmem:[#allocation2 + $0x568] sm:$0xff] %vm424, %v3098
        %3158 = vst.msk [vmem:[#allocation2 + $0x5a8] sm:$0xff] %vm424, %v3100
        %3159 = vst.msk [vmem:[#allocation2 + $0x5e8] sm:$0xff] %vm424, %v3102
        %3160 = vst.msk [vmem:[#allocation2 + $0x628] sm:$0xff] %vm424, %v3104
        %3161 = vst.msk [vmem:[#allocation2 + $0x668] sm:$0xff] %vm424, %v3106
        %3162 = vst.msk [vmem:[#allocation2 + $0x6a8] sm:$0xff] %vm424, %v3108
        %v3163 = vld [vmem:[%s2946 + $0x2] sm:$0xff]
        %v3164 = vld [vmem:[%s2946 + $0xa] sm:$0xff]
        %v3165 = vld [vmem:[%s2946 + $0x12] sm:$0xff]
        %v3166 = vld [vmem:[%s2946 + $0x22] sm:$0xff]
        %v3167 = vld [vmem:[%s2946 + $0x2a] sm:$0xff]
        %v3168 = vld [vmem:[%s2946 + $0x32] sm:$0xff]
        %v3169 = vld [vmem:[%s2946 + $0x42] sm:$0xff]
        %v3170 = vld [vmem:[%s2946 + $0x4a] sm:$0xff]
        %v3171 = vld [vmem:[%s2946 + $0x52] sm:$0xff]
        %v3172 = vld [vmem:[%s2946 + $0x62] sm:$0xff]
        %v3173 = vld [vmem:[%s2946 + $0x6a] sm:$0xff]
        %v3174 = vld [vmem:[%s2946 + $0x72] sm:$0xff]
        %v3175 = vld [vmem:[%s2946 + $0x82] sm:$0xff]
        %v3176 = vld [vmem:[%s2946 + $0x8a] sm:$0xff]
        %v3177 = vld [vmem:[%s2946 + $0x92] sm:$0xff]
        %v3178 = vld [vmem:[%s2946 + $0xa2] sm:$0xff]
        %v3179 = vld [vmem:[%s2946 + $0xaa] sm:$0xff]
        %v3180 = vld [vmem:[%s2946 + $0xb2] sm:$0xff]
        %v3181 = vld [vmem:[%s2946 + $0xc2] sm:$0xff]
        %v3182 = vld [vmem:[%s2946 + $0xca] sm:$0xff]
        %v3183 = vld [vmem:[%s2946 + $0xd2] sm:$0xff]
        %v3184 = vld [vmem:[%s2946 + $0xe2] sm:$0xff]
        %v3185 = vld [vmem:[%s2946 + $0xea] sm:$0xff]
        %v3186 = vld [vmem:[%s2946 + $0xf2] sm:$0xff]
        %v3187 = vld [vmem:[%s2946 + $0x102] sm:$0xff]
        %v3188 = vld [vmem:[%s2946 + $0x10a] sm:$0xff]
        %v3189 = vld [vmem:[%s2946 + $0x112] sm:$0xff]
        %3217 = vrot.lane.b32.xlu0 %v3163, 64
        %v3218 = vpop.permute.xlu0 %3217
        %3219 = vrot.lane.b32.xlu0 %v3164, 64
        %v3220 = vpop.permute.xlu0 %3219
        %3221 = vrot.lane.b32.xlu0 %v3165, 64
        %v3222 = vpop.permute.xlu0 %3221
        %3223 = vrot.lane.b32.xlu0 %v3166, 64
        %v3224 = vpop.permute.xlu0 %3223
        %3225 = vrot.lane.b32.xlu0 %v3167, 64
        %v3226 = vpop.permute.xlu0 %3225
        %3227 = vrot.lane.b32.xlu0 %v3168, 64
        %v3228 = vpop.permute.xlu0 %3227
        %3229 = vrot.lane.b32.xlu0 %v3169, 64
        %v3230 = vpop.permute.xlu0 %3229
        %3231 = vrot.lane.b32.xlu0 %v3170, 64
        %v3232 = vpop.permute.xlu0 %3231
        %3233 = vrot.lane.b32.xlu0 %v3171, 64
        %v3234 = vpop.permute.xlu0 %3233
        %3235 = vrot.lane.b32.xlu0 %v3172, 64
        %v3236 = vpop.permute.xlu0 %3235
        %3237 = vrot.lane.b32.xlu0 %v3173, 64
        %v3238 = vpop.permute.xlu0 %3237
        %3239 = vrot.lane.b32.xlu0 %v3174, 64
        %v3240 = vpop.permute.xlu0 %3239
        %3241 = vrot.lane.b32.xlu0 %v3175, 64
        %v3242 = vpop.permute.xlu0 %3241
        %3243 = vrot.lane.b32.xlu0 %v3176, 64
        %v3244 = vpop.permute.xlu0 %3243
        %3245 = vrot.lane.b32.xlu0 %v3177, 64
        %v3246 = vpop.permute.xlu0 %3245
        %3247 = vrot.lane.b32.xlu0 %v3178, 64
        %v3248 = vpop.permute.xlu0 %3247
        %3249 = vrot.lane.b32.xlu0 %v3179, 64
        %v3250 = vpop.permute.xlu0 %3249
        %3251 = vrot.lane.b32.xlu0 %v3180, 64
        %v3252 = vpop.permute.xlu0 %3251
        %3253 = vrot.lane.b32.xlu0 %v3181, 64
        %v3254 = vpop.permute.xlu0 %3253
        %3255 = vrot.lane.b32.xlu0 %v3182, 64
        %v3256 = vpop.permute.xlu0 %3255
        %3257 = vrot.lane.b32.xlu0 %v3183, 64
        %v3258 = vpop.permute.xlu0 %3257
        %3259 = vrot.lane.b32.xlu0 %v3184, 64
        %v3260 = vpop.permute.xlu0 %3259
        %3261 = vrot.lane.b32.xlu0 %v3185, 64
        %v3262 = vpop.permute.xlu0 %3261
        %3263 = vrot.lane.b32.xlu0 %v3186, 64
        %v3264 = vpop.permute.xlu0 %3263
        %3265 = vrot.lane.b32.xlu0 %v3187, 64
        %v3266 = vpop.permute.xlu0 %3265
        %3267 = vrot.lane.b32.xlu0 %v3188, 64
        %v3268 = vpop.permute.xlu0 %3267
        %3269 = vrot.lane.b32.xlu0 %v3189, 64
        %v3270 = vpop.permute.xlu0 %3269
        %3298 = vst.msk [vmem:[#allocation2 + $0x28] sm:$0xff] %vm587, %v3218
        %3299 = vst.msk [vmem:[#allocation2 + $0x68] sm:$0xff] %vm587, %v3220
        %3300 = vst.msk [vmem:[#allocation2 + $0xa8] sm:$0xff] %vm587, %v3222
        %3301 = vst.msk [vmem:[#allocation2 + $0xe8] sm:$0xff] %vm587, %v3224
        %3302 = vst.msk [vmem:[#allocation2 + $0x128] sm:$0xff] %vm587, %v3226
        %3303 = vst.msk [vmem:[#allocation2 + $0x168] sm:$0xff] %vm587, %v3228
        %3304 = vst.msk [vmem:[#allocation2 + $0x1a8] sm:$0xff] %vm587, %v3230
        %3305 = vst.msk [vmem:[#allocation2 + $0x1e8] sm:$0xff] %vm587, %v3232
        %3306 = vst.msk [vmem:[#allocation2 + $0x228] sm:$0xff] %vm587, %v3234
        %3307 = vst.msk [vmem:[#allocation2 + $0x268] sm:$0xff] %vm587, %v3236
        %3308 = vst.msk [vmem:[#allocation2 + $0x2a8] sm:$0xff] %vm587, %v3238
        %3309 = vst.msk [vmem:[#allocation2 + $0x2e8] sm:$0xff] %vm587, %v3240
        %3310 = vst.msk [vmem:[#allocation2 + $0x328] sm:$0xff] %vm587, %v3242
        %3311 = vst.msk [vmem:[#allocation2 + $0x368] sm:$0xff] %vm587, %v3244
        %3312 = vst.msk [vmem:[#allocation2 + $0x3a8] sm:$0xff] %vm587, %v3246
        %3313 = vst.msk [vmem:[#allocation2 + $0x3e8] sm:$0xff] %vm587, %v3248
        %3314 = vst.msk [vmem:[#allocation2 + $0x428] sm:$0xff] %vm587, %v3250
        %3315 = vst.msk [vmem:[#allocation2 + $0x468] sm:$0xff] %vm587, %v3252
        %3316 = vst.msk [vmem:[#allocation2 + $0x4a8] sm:$0xff] %vm587, %v3254
        %3317 = vst.msk [vmem:[#allocation2 + $0x4e8] sm:$0xff] %vm587, %v3256
        %3318 = vst.msk [vmem:[#allocation2 + $0x528] sm:$0xff] %vm587, %v3258
        %3319 = vst.msk [vmem:[#allocation2 + $0x568] sm:$0xff] %vm587, %v3260
        %3320 = vst.msk [vmem:[#allocation2 + $0x5a8] sm:$0xff] %vm587, %v3262
        %3321 = vst.msk [vmem:[#allocation2 + $0x5e8] sm:$0xff] %vm587, %v3264
        %3322 = vst.msk [vmem:[#allocation2 + $0x628] sm:$0xff] %vm587, %v3266
        %3323 = vst.msk [vmem:[#allocation2 + $0x668] sm:$0xff] %vm587, %v3268
        %3324 = vst.msk [vmem:[#allocation2 + $0x6a8] sm:$0xff] %vm587, %v3270
        %v3325 = vld [vmem:[%s2946 + $0x3] sm:$0xff]
        %v3326 = vld [vmem:[%s2946 + $0xb] sm:$0xff]
        %v3327 = vld [vmem:[%s2946 + $0x13] sm:$0xff]
        %v3328 = vld [vmem:[%s2946 + $0x23] sm:$0xff]
        %v3329 = vld [vmem:[%s2946 + $0x2b] sm:$0xff]
        %v3330 = vld [vmem:[%s2946 + $0x33] sm:$0xff]
        %v3331 = vld [vmem:[%s2946 + $0x43] sm:$0xff]
        %v3332 = vld [vmem:[%s2946 + $0x4b] sm:$0xff]
        %v3333 = vld [vmem:[%s2946 + $0x53] sm:$0xff]
        %v3334 = vld [vmem:[%s2946 + $0x63] sm:$0xff]
        %v3335 = vld [vmem:[%s2946 + $0x6b] sm:$0xff]
        %v3336 = vld [vmem:[%s2946 + $0x73] sm:$0xff]
        %v3337 = vld [vmem:[%s2946 + $0x83] sm:$0xff]
        %v3338 = vld [vmem:[%s2946 + $0x8b] sm:$0xff]
        %v3339 = vld [vmem:[%s2946 + $0x93] sm:$0xff]
        %v3340 = vld [vmem:[%s2946 + $0xa3] sm:$0xff]
        %v3341 = vld [vmem:[%s2946 + $0xab] sm:$0xff]
        %v3342 = vld [vmem:[%s2946 + $0xb3] sm:$0xff]
        %v3343 = vld [vmem:[%s2946 + $0xc3] sm:$0xff]
        %v3344 = vld [vmem:[%s2946 + $0xcb] sm:$0xff]
        %v3345 = vld [vmem:[%s2946 + $0xd3] sm:$0xff]
        %v3346 = vld [vmem:[%s2946 + $0xe3] sm:$0xff]
        %v3347 = vld [vmem:[%s2946 + $0xeb] sm:$0xff]
        %v3348 = vld [vmem:[%s2946 + $0xf3] sm:$0xff]
        %v3349 = vld [vmem:[%s2946 + $0x103] sm:$0xff]
        %v3350 = vld [vmem:[%s2946 + $0x10b] sm:$0xff]
        %v3351 = vld [vmem:[%s2946 + $0x113] sm:$0xff]
        %3379 = vrot.lane.b32.xlu0 %v3325, 96
        %v3380 = vpop.permute.xlu0 %3379
        %3381 = vrot.lane.b32.xlu0 %v3326, 96
        %v3382 = vpop.permute.xlu0 %3381
        %3383 = vrot.lane.b32.xlu0 %v3327, 96
        %v3384 = vpop.permute.xlu0 %3383
        %3385 = vrot.lane.b32.xlu0 %v3328, 96
        %v3386 = vpop.permute.xlu0 %3385
        %3387 = vrot.lane.b32.xlu0 %v3329, 96
        %v3388 = vpop.permute.xlu0 %3387
        %3389 = vrot.lane.b32.xlu0 %v3330, 96
        %v3390 = vpop.permute.xlu0 %3389
        %3391 = vrot.lane.b32.xlu0 %v3331, 96
        %v3392 = vpop.permute.xlu0 %3391
        %3393 = vrot.lane.b32.xlu0 %v3332, 96
        %v3394 = vpop.permute.xlu0 %3393
        %3395 = vrot.lane.b32.xlu0 %v3333, 96
        %v3396 = vpop.permute.xlu0 %3395
        %3397 = vrot.lane.b32.xlu0 %v3334, 96
        %v3398 = vpop.permute.xlu0 %3397
        %3399 = vrot.lane.b32.xlu0 %v3335, 96
        %v3400 = vpop.permute.xlu0 %3399
        %3401 = vrot.lane.b32.xlu0 %v3336, 96
        %v3402 = vpop.permute.xlu0 %3401
        %3403 = vrot.lane.b32.xlu0 %v3337, 96
        %v3404 = vpop.permute.xlu0 %3403
        %3405 = vrot.lane.b32.xlu0 %v3338, 96
        %v3406 = vpop.permute.xlu0 %3405
        %3407 = vrot.lane.b32.xlu0 %v3339, 96
        %v3408 = vpop.permute.xlu0 %3407
        %3409 = vrot.lane.b32.xlu0 %v3340, 96
        %v3410 = vpop.permute.xlu0 %3409
        %3411 = vrot.lane.b32.xlu0 %v3341, 96
        %v3412 = vpop.permute.xlu0 %3411
        %3413 = vrot.lane.b32.xlu0 %v3342, 96
        %v3414 = vpop.permute.xlu0 %3413
        %3415 = vrot.lane.b32.xlu0 %v3343, 96
        %v3416 = vpop.permute.xlu0 %3415
        %3417 = vrot.lane.b32.xlu0 %v3344, 96
        %v3418 = vpop.permute.xlu0 %3417
        %3419 = vrot.lane.b32.xlu0 %v3345, 96
        %v3420 = vpop.permute.xlu0 %3419
        %3421 = vrot.lane.b32.xlu0 %v3346, 96
        %v3422 = vpop.permute.xlu0 %3421
        %3423 = vrot.lane.b32.xlu0 %v3347, 96
        %v3424 = vpop.permute.xlu0 %3423
        %3425 = vrot.lane.b32.xlu0 %v3348, 96
        %v3426 = vpop.permute.xlu0 %3425
        %3427 = vrot.lane.b32.xlu0 %v3349, 96
        %v3428 = vpop.permute.xlu0 %3427
        %3429 = vrot.lane.b32.xlu0 %v3350, 96
        %v3430 = vpop.permute.xlu0 %3429
        %3431 = vrot.lane.b32.xlu0 %v3351, 96
        %v3432 = vpop.permute.xlu0 %3431
        %3460 = vst.msk [vmem:[#allocation2 + $0x28] sm:$0xff] %vm750, %v3380
        %3461 = vst.msk [vmem:[#allocation2 + $0x68] sm:$0xff] %vm750, %v3382
        %3462 = vst.msk [vmem:[#allocation2 + $0xa8] sm:$0xff] %vm750, %v3384
        %3463 = vst.msk [vmem:[#allocation2 + $0xe8] sm:$0xff] %vm750, %v3386
        %3464 = vst.msk [vmem:[#allocation2 + $0x128] sm:$0xff] %vm750, %v3388
        %3465 = vst.msk [vmem:[#allocation2 + $0x168] sm:$0xff] %vm750, %v3390
        %3466 = vst.msk [vmem:[#allocation2 + $0x1a8] sm:$0xff] %vm750, %v3392
        %3467 = vst.msk [vmem:[#allocation2 + $0x1e8] sm:$0xff] %vm750, %v3394
        %3468 = vst.msk [vmem:[#allocation2 + $0x228] sm:$0xff] %vm750, %v3396
        %3469 = vst.msk [vmem:[#allocation2 + $0x268] sm:$0xff] %vm750, %v3398
        %3470 = vst.msk [vmem:[#allocation2 + $0x2a8] sm:$0xff] %vm750, %v3400
        %3471 = vst.msk [vmem:[#allocation2 + $0x2e8] sm:$0xff] %vm750, %v3402
        %3472 = vst.msk [vmem:[#allocation2 + $0x328] sm:$0xff] %vm750, %v3404
        %3473 = vst.msk [vmem:[#allocation2 + $0x368] sm:$0xff] %vm750, %v3406
        %3474 = vst.msk [vmem:[#allocation2 + $0x3a8] sm:$0xff] %vm750, %v3408
        %3475 = vst.msk [vmem:[#allocation2 + $0x3e8] sm:$0xff] %vm750, %v3410
        %3476 = vst.msk [vmem:[#allocation2 + $0x428] sm:$0xff] %vm750, %v3412
        %3477 = vst.msk [vmem:[#allocation2 + $0x468] sm:$0xff] %vm750, %v3414
        %3478 = vst.msk [vmem:[#allocation2 + $0x4a8] sm:$0xff] %vm750, %v3416
        %3479 = vst.msk [vmem:[#allocation2 + $0x4e8] sm:$0xff] %vm750, %v3418
        %3480 = vst.msk [vmem:[#allocation2 + $0x528] sm:$0xff] %vm750, %v3420
        %3481 = vst.msk [vmem:[#allocation2 + $0x568] sm:$0xff] %vm750, %v3422
        %3482 = vst.msk [vmem:[#allocation2 + $0x5a8] sm:$0xff] %vm750, %v3424
        %3483 = vst.msk [vmem:[#allocation2 + $0x5e8] sm:$0xff] %vm750, %v3426
        %3484 = vst.msk [vmem:[#allocation2 + $0x628] sm:$0xff] %vm750, %v3428
        %3485 = vst.msk [vmem:[#allocation2 + $0x668] sm:$0xff] %vm750, %v3430
        %3486 = vst.msk [vmem:[#allocation2 + $0x6a8] sm:$0xff] %vm750, %v3432
        %s3487 = sadd.s32 %s231, 3
        %s3488 = smul.u32 %s3487, 32
        %s3489 = scalar_lea.vmem %s224, %s3488
        %v3490 = vld [vmem:[%s3489] sm:$0xff]
        %v3491 = vld [vmem:[%s3489 + $0x8] sm:$0xff]
        %v3492 = vld [vmem:[%s3489 + $0x10] sm:$0xff]
        %v3493 = vld [vmem:[%s3489 + $0x20] sm:$0xff]
        %v3494 = vld [vmem:[%s3489 + $0x28] sm:$0xff]
        %v3495 = vld [vmem:[%s3489 + $0x30] sm:$0xff]
        %v3496 = vld [vmem:[%s3489 + $0x40] sm:$0xff]
        %v3497 = vld [vmem:[%s3489 + $0x48] sm:$0xff]
        %v3498 = vld [vmem:[%s3489 + $0x50] sm:$0xff]
        %v3499 = vld [vmem:[%s3489 + $0x60] sm:$0xff]
        %v3500 = vld [vmem:[%s3489 + $0x68] sm:$0xff]
        %v3501 = vld [vmem:[%s3489 + $0x70] sm:$0xff]
        %v3502 = vld [vmem:[%s3489 + $0x80] sm:$0xff]
        %v3503 = vld [vmem:[%s3489 + $0x88] sm:$0xff]
        %v3504 = vld [vmem:[%s3489 + $0x90] sm:$0xff]
        %v3505 = vld [vmem:[%s3489 + $0xa0] sm:$0xff]
        %v3506 = vld [vmem:[%s3489 + $0xa8] sm:$0xff]
        %v3507 = vld [vmem:[%s3489 + $0xb0] sm:$0xff]
        %v3508 = vld [vmem:[%s3489 + $0xc0] sm:$0xff]
        %v3509 = vld [vmem:[%s3489 + $0xc8] sm:$0xff]
        %v3510 = vld [vmem:[%s3489 + $0xd0] sm:$0xff]
        %v3511 = vld [vmem:[%s3489 + $0xe0] sm:$0xff]
        %v3512 = vld [vmem:[%s3489 + $0xe8] sm:$0xff]
        %v3513 = vld [vmem:[%s3489 + $0xf0] sm:$0xff]
        %v3514 = vld [vmem:[%s3489 + $0x100] sm:$0xff]
        %v3515 = vld [vmem:[%s3489 + $0x108] sm:$0xff]
        %v3516 = vld [vmem:[%s3489 + $0x110] sm:$0xff]
        %3517 = vst.msk [vmem:[#allocation2 + $0x30] sm:$0xff] %vm261, %v3490
        %3518 = vst.msk [vmem:[#allocation2 + $0x70] sm:$0xff] %vm261, %v3491
        %3519 = vst.msk [vmem:[#allocation2 + $0xb0] sm:$0xff] %vm261, %v3492
        %3520 = vst.msk [vmem:[#allocation2 + $0xf0] sm:$0xff] %vm261, %v3493
        %3521 = vst.msk [vmem:[#allocation2 + $0x130] sm:$0xff] %vm261, %v3494
        %3522 = vst.msk [vmem:[#allocation2 + $0x170] sm:$0xff] %vm261, %v3495
        %3523 = vst.msk [vmem:[#allocation2 + $0x1b0] sm:$0xff] %vm261, %v3496
        %3524 = vst.msk [vmem:[#allocation2 + $0x1f0] sm:$0xff] %vm261, %v3497
        %3525 = vst.msk [vmem:[#allocation2 + $0x230] sm:$0xff] %vm261, %v3498
        %3526 = vst.msk [vmem:[#allocation2 + $0x270] sm:$0xff] %vm261, %v3499
        %3527 = vst.msk [vmem:[#allocation2 + $0x2b0] sm:$0xff] %vm261, %v3500
        %3528 = vst.msk [vmem:[#allocation2 + $0x2f0] sm:$0xff] %vm261, %v3501
        %3529 = vst.msk [vmem:[#allocation2 + $0x330] sm:$0xff] %vm261, %v3502
        %3530 = vst.msk [vmem:[#allocation2 + $0x370] sm:$0xff] %vm261, %v3503
        %3531 = vst.msk [vmem:[#allocation2 + $0x3b0] sm:$0xff] %vm261, %v3504
        %3532 = vst.msk [vmem:[#allocation2 + $0x3f0] sm:$0xff] %vm261, %v3505
        %3533 = vst.msk [vmem:[#allocation2 + $0x430] sm:$0xff] %vm261, %v3506
        %3534 = vst.msk [vmem:[#allocation2 + $0x470] sm:$0xff] %vm261, %v3507
        %3535 = vst.msk [vmem:[#allocation2 + $0x4b0] sm:$0xff] %vm261, %v3508
        %3536 = vst.msk [vmem:[#allocation2 + $0x4f0] sm:$0xff] %vm261, %v3509
        %3537 = vst.msk [vmem:[#allocation2 + $0x530] sm:$0xff] %vm261, %v3510
        %3538 = vst.msk [vmem:[#allocation2 + $0x570] sm:$0xff] %vm261, %v3511
        %3539 = vst.msk [vmem:[#allocation2 + $0x5b0] sm:$0xff] %vm261, %v3512
        %3540 = vst.msk [vmem:[#allocation2 + $0x5f0] sm:$0xff] %vm261, %v3513
        %3541 = vst.msk [vmem:[#allocation2 + $0x630] sm:$0xff] %vm261, %v3514
        %3542 = vst.msk [vmem:[#allocation2 + $0x670] sm:$0xff] %vm261, %v3515
        %3543 = vst.msk [vmem:[#allocation2 + $0x6b0] sm:$0xff] %vm261, %v3516
        %v3544 = vld [vmem:[%s3489 + $0x1] sm:$0xff]
        %v3545 = vld [vmem:[%s3489 + $0x9] sm:$0xff]
        %v3546 = vld [vmem:[%s3489 + $0x11] sm:$0xff]
        %v3547 = vld [vmem:[%s3489 + $0x21] sm:$0xff]
        %v3548 = vld [vmem:[%s3489 + $0x29] sm:$0xff]
        %v3549 = vld [vmem:[%s3489 + $0x31] sm:$0xff]
        %v3550 = vld [vmem:[%s3489 + $0x41] sm:$0xff]
        %v3551 = vld [vmem:[%s3489 + $0x49] sm:$0xff]
        %v3552 = vld [vmem:[%s3489 + $0x51] sm:$0xff]
        %v3553 = vld [vmem:[%s3489 + $0x61] sm:$0xff]
        %v3554 = vld [vmem:[%s3489 + $0x69] sm:$0xff]
        %v3555 = vld [vmem:[%s3489 + $0x71] sm:$0xff]
        %v3556 = vld [vmem:[%s3489 + $0x81] sm:$0xff]
        %v3557 = vld [vmem:[%s3489 + $0x89] sm:$0xff]
        %v3558 = vld [vmem:[%s3489 + $0x91] sm:$0xff]
        %v3559 = vld [vmem:[%s3489 + $0xa1] sm:$0xff]
        %v3560 = vld [vmem:[%s3489 + $0xa9] sm:$0xff]
        %v3561 = vld [vmem:[%s3489 + $0xb1] sm:$0xff]
        %v3562 = vld [vmem:[%s3489 + $0xc1] sm:$0xff]
        %v3563 = vld [vmem:[%s3489 + $0xc9] sm:$0xff]
        %v3564 = vld [vmem:[%s3489 + $0xd1] sm:$0xff]
        %v3565 = vld [vmem:[%s3489 + $0xe1] sm:$0xff]
        %v3566 = vld [vmem:[%s3489 + $0xe9] sm:$0xff]
        %v3567 = vld [vmem:[%s3489 + $0xf1] sm:$0xff]
        %v3568 = vld [vmem:[%s3489 + $0x101] sm:$0xff]
        %v3569 = vld [vmem:[%s3489 + $0x109] sm:$0xff]
        %v3570 = vld [vmem:[%s3489 + $0x111] sm:$0xff]
        %3598 = vrot.lane.b32.xlu0 %v3544, 32
        %v3599 = vpop.permute.xlu0 %3598
        %3600 = vrot.lane.b32.xlu0 %v3545, 32
        %v3601 = vpop.permute.xlu0 %3600
        %3602 = vrot.lane.b32.xlu0 %v3546, 32
        %v3603 = vpop.permute.xlu0 %3602
        %3604 = vrot.lane.b32.xlu0 %v3547, 32
        %v3605 = vpop.permute.xlu0 %3604
        %3606 = vrot.lane.b32.xlu0 %v3548, 32
        %v3607 = vpop.permute.xlu0 %3606
        %3608 = vrot.lane.b32.xlu0 %v3549, 32
        %v3609 = vpop.permute.xlu0 %3608
        %3610 = vrot.lane.b32.xlu0 %v3550, 32
        %v3611 = vpop.permute.xlu0 %3610
        %3612 = vrot.lane.b32.xlu0 %v3551, 32
        %v3613 = vpop.permute.xlu0 %3612
        %3614 = vrot.lane.b32.xlu0 %v3552, 32
        %v3615 = vpop.permute.xlu0 %3614
        %3616 = vrot.lane.b32.xlu0 %v3553, 32
        %v3617 = vpop.permute.xlu0 %3616
        %3618 = vrot.lane.b32.xlu0 %v3554, 32
        %v3619 = vpop.permute.xlu0 %3618
        %3620 = vrot.lane.b32.xlu0 %v3555, 32
        %v3621 = vpop.permute.xlu0 %3620
        %3622 = vrot.lane.b32.xlu0 %v3556, 32
        %v3623 = vpop.permute.xlu0 %3622
        %3624 = vrot.lane.b32.xlu0 %v3557, 32
        %v3625 = vpop.permute.xlu0 %3624
        %3626 = vrot.lane.b32.xlu0 %v3558, 32
        %v3627 = vpop.permute.xlu0 %3626
        %3628 = vrot.lane.b32.xlu0 %v3559, 32
        %v3629 = vpop.permute.xlu0 %3628
        %3630 = vrot.lane.b32.xlu0 %v3560, 32
        %v3631 = vpop.permute.xlu0 %3630
        %3632 = vrot.lane.b32.xlu0 %v3561, 32
        %v3633 = vpop.permute.xlu0 %3632
        %3634 = vrot.lane.b32.xlu0 %v3562, 32
        %v3635 = vpop.permute.xlu0 %3634
        %3636 = vrot.lane.b32.xlu0 %v3563, 32
        %v3637 = vpop.permute.xlu0 %3636
        %3638 = vrot.lane.b32.xlu0 %v3564, 32
        %v3639 = vpop.permute.xlu0 %3638
        %3640 = vrot.lane.b32.xlu0 %v3565, 32
        %v3641 = vpop.permute.xlu0 %3640
        %3642 = vrot.lane.b32.xlu0 %v3566, 32
        %v3643 = vpop.permute.xlu0 %3642
        %3644 = vrot.lane.b32.xlu0 %v3567, 32
        %v3645 = vpop.permute.xlu0 %3644
        %3646 = vrot.lane.b32.xlu0 %v3568, 32
        %v3647 = vpop.permute.xlu0 %3646
        %3648 = vrot.lane.b32.xlu0 %v3569, 32
        %v3649 = vpop.permute.xlu0 %3648
        %3650 = vrot.lane.b32.xlu0 %v3570, 32
        %v3651 = vpop.permute.xlu0 %3650
        %3679 = vst.msk [vmem:[#allocation2 + $0x30] sm:$0xff] %vm424, %v3599
        %3680 = vst.msk [vmem:[#allocation2 + $0x70] sm:$0xff] %vm424, %v3601
        %3681 = vst.msk [vmem:[#allocation2 + $0xb0] sm:$0xff] %vm424, %v3603
        %3682 = vst.msk [vmem:[#allocation2 + $0xf0] sm:$0xff] %vm424, %v3605
        %3683 = vst.msk [vmem:[#allocation2 + $0x130] sm:$0xff] %vm424, %v3607
        %3684 = vst.msk [vmem:[#allocation2 + $0x170] sm:$0xff] %vm424, %v3609
        %3685 = vst.msk [vmem:[#allocation2 + $0x1b0] sm:$0xff] %vm424, %v3611
        %3686 = vst.msk [vmem:[#allocation2 + $0x1f0] sm:$0xff] %vm424, %v3613
        %3687 = vst.msk [vmem:[#allocation2 + $0x230] sm:$0xff] %vm424, %v3615
        %3688 = vst.msk [vmem:[#allocation2 + $0x270] sm:$0xff] %vm424, %v3617
        %3689 = vst.msk [vmem:[#allocation2 + $0x2b0] sm:$0xff] %vm424, %v3619
        %3690 = vst.msk [vmem:[#allocation2 + $0x2f0] sm:$0xff] %vm424, %v3621
        %3691 = vst.msk [vmem:[#allocation2 + $0x330] sm:$0xff] %vm424, %v3623
        %3692 = vst.msk [vmem:[#allocation2 + $0x370] sm:$0xff] %vm424, %v3625
        %3693 = vst.msk [vmem:[#allocation2 + $0x3b0] sm:$0xff] %vm424, %v3627
        %3694 = vst.msk [vmem:[#allocation2 + $0x3f0] sm:$0xff] %vm424, %v3629
        %3695 = vst.msk [vmem:[#allocation2 + $0x430] sm:$0xff] %vm424, %v3631
        %3696 = vst.msk [vmem:[#allocation2 + $0x470] sm:$0xff] %vm424, %v3633
        %3697 = vst.msk [vmem:[#allocation2 + $0x4b0] sm:$0xff] %vm424, %v3635
        %3698 = vst.msk [vmem:[#allocation2 + $0x4f0] sm:$0xff] %vm424, %v3637
        %3699 = vst.msk [vmem:[#allocation2 + $0x530] sm:$0xff] %vm424, %v3639
        %3700 = vst.msk [vmem:[#allocation2 + $0x570] sm:$0xff] %vm424, %v3641
        %3701 = vst.msk [vmem:[#allocation2 + $0x5b0] sm:$0xff] %vm424, %v3643
        %3702 = vst.msk [vmem:[#allocation2 + $0x5f0] sm:$0xff] %vm424, %v3645
        %3703 = vst.msk [vmem:[#allocation2 + $0x630] sm:$0xff] %vm424, %v3647
        %3704 = vst.msk [vmem:[#allocation2 + $0x670] sm:$0xff] %vm424, %v3649
        %3705 = vst.msk [vmem:[#allocation2 + $0x6b0] sm:$0xff] %vm424, %v3651
        %v3706 = vld [vmem:[%s3489 + $0x2] sm:$0xff]
        %v3707 = vld [vmem:[%s3489 + $0xa] sm:$0xff]
        %v3708 = vld [vmem:[%s3489 + $0x12] sm:$0xff]
        %v3709 = vld [vmem:[%s3489 + $0x22] sm:$0xff]
        %v3710 = vld [vmem:[%s3489 + $0x2a] sm:$0xff]
        %v3711 = vld [vmem:[%s3489 + $0x32] sm:$0xff]
        %v3712 = vld [vmem:[%s3489 + $0x42] sm:$0xff]
        %v3713 = vld [vmem:[%s3489 + $0x4a] sm:$0xff]
        %v3714 = vld [vmem:[%s3489 + $0x52] sm:$0xff]
        %v3715 = vld [vmem:[%s3489 + $0x62] sm:$0xff]
        %v3716 = vld [vmem:[%s3489 + $0x6a] sm:$0xff]
        %v3717 = vld [vmem:[%s3489 + $0x72] sm:$0xff]
        %v3718 = vld [vmem:[%s3489 + $0x82] sm:$0xff]
        %v3719 = vld [vmem:[%s3489 + $0x8a] sm:$0xff]
        %v3720 = vld [vmem:[%s3489 + $0x92] sm:$0xff]
        %v3721 = vld [vmem:[%s3489 + $0xa2] sm:$0xff]
        %v3722 = vld [vmem:[%s3489 + $0xaa] sm:$0xff]
        %v3723 = vld [vmem:[%s3489 + $0xb2] sm:$0xff]
        %v3724 = vld [vmem:[%s3489 + $0xc2] sm:$0xff]
        %v3725 = vld [vmem:[%s3489 + $0xca] sm:$0xff]
        %v3726 = vld [vmem:[%s3489 + $0xd2] sm:$0xff]
        %v3727 = vld [vmem:[%s3489 + $0xe2] sm:$0xff]
        %v3728 = vld [vmem:[%s3489 + $0xea] sm:$0xff]
        %v3729 = vld [vmem:[%s3489 + $0xf2] sm:$0xff]
        %v3730 = vld [vmem:[%s3489 + $0x102] sm:$0xff]
        %v3731 = vld [vmem:[%s3489 + $0x10a] sm:$0xff]
        %v3732 = vld [vmem:[%s3489 + $0x112] sm:$0xff]
        %3760 = vrot.lane.b32.xlu0 %v3706, 64
        %v3761 = vpop.permute.xlu0 %3760
        %3762 = vrot.lane.b32.xlu0 %v3707, 64
        %v3763 = vpop.permute.xlu0 %3762
        %3764 = vrot.lane.b32.xlu0 %v3708, 64
        %v3765 = vpop.permute.xlu0 %3764
        %3766 = vrot.lane.b32.xlu0 %v3709, 64
        %v3767 = vpop.permute.xlu0 %3766
        %3768 = vrot.lane.b32.xlu0 %v3710, 64
        %v3769 = vpop.permute.xlu0 %3768
        %3770 = vrot.lane.b32.xlu0 %v3711, 64
        %v3771 = vpop.permute.xlu0 %3770
        %3772 = vrot.lane.b32.xlu0 %v3712, 64
        %v3773 = vpop.permute.xlu0 %3772
        %3774 = vrot.lane.b32.xlu0 %v3713, 64
        %v3775 = vpop.permute.xlu0 %3774
        %3776 = vrot.lane.b32.xlu0 %v3714, 64
        %v3777 = vpop.permute.xlu0 %3776
        %3778 = vrot.lane.b32.xlu0 %v3715, 64
        %v3779 = vpop.permute.xlu0 %3778
        %3780 = vrot.lane.b32.xlu0 %v3716, 64
        %v3781 = vpop.permute.xlu0 %3780
        %3782 = vrot.lane.b32.xlu0 %v3717, 64
        %v3783 = vpop.permute.xlu0 %3782
        %3784 = vrot.lane.b32.xlu0 %v3718, 64
        %v3785 = vpop.permute.xlu0 %3784
        %3786 = vrot.lane.b32.xlu0 %v3719, 64
        %v3787 = vpop.permute.xlu0 %3786
        %3788 = vrot.lane.b32.xlu0 %v3720, 64
        %v3789 = vpop.permute.xlu0 %3788
        %3790 = vrot.lane.b32.xlu0 %v3721, 64
        %v3791 = vpop.permute.xlu0 %3790
        %3792 = vrot.lane.b32.xlu0 %v3722, 64
        %v3793 = vpop.permute.xlu0 %3792
        %3794 = vrot.lane.b32.xlu0 %v3723, 64
        %v3795 = vpop.permute.xlu0 %3794
        %3796 = vrot.lane.b32.xlu0 %v3724, 64
        %v3797 = vpop.permute.xlu0 %3796
        %3798 = vrot.lane.b32.xlu0 %v3725, 64
        %v3799 = vpop.permute.xlu0 %3798
        %3800 = vrot.lane.b32.xlu0 %v3726, 64
        %v3801 = vpop.permute.xlu0 %3800
        %3802 = vrot.lane.b32.xlu0 %v3727, 64
        %v3803 = vpop.permute.xlu0 %3802
        %3804 = vrot.lane.b32.xlu0 %v3728, 64
        %v3805 = vpop.permute.xlu0 %3804
        %3806 = vrot.lane.b32.xlu0 %v3729, 64
        %v3807 = vpop.permute.xlu0 %3806
        %3808 = vrot.lane.b32.xlu0 %v3730, 64
        %v3809 = vpop.permute.xlu0 %3808
        %3810 = vrot.lane.b32.xlu0 %v3731, 64
        %v3811 = vpop.permute.xlu0 %3810
        %3812 = vrot.lane.b32.xlu0 %v3732, 64
        %v3813 = vpop.permute.xlu0 %3812
        %3841 = vst.msk [vmem:[#allocation2 + $0x30] sm:$0xff] %vm587, %v3761
        %3842 = vst.msk [vmem:[#allocation2 + $0x70] sm:$0xff] %vm587, %v3763
        %3843 = vst.msk [vmem:[#allocation2 + $0xb0] sm:$0xff] %vm587, %v3765
        %3844 = vst.msk [vmem:[#allocation2 + $0xf0] sm:$0xff] %vm587, %v3767
        %3845 = vst.msk [vmem:[#allocation2 + $0x130] sm:$0xff] %vm587, %v3769
        %3846 = vst.msk [vmem:[#allocation2 + $0x170] sm:$0xff] %vm587, %v3771
        %3847 = vst.msk [vmem:[#allocation2 + $0x1b0] sm:$0xff] %vm587, %v3773
        %3848 = vst.msk [vmem:[#allocation2 + $0x1f0] sm:$0xff] %vm587, %v3775
        %3849 = vst.msk [vmem:[#allocation2 + $0x230] sm:$0xff] %vm587, %v3777
        %3850 = vst.msk [vmem:[#allocation2 + $0x270] sm:$0xff] %vm587, %v3779
        %3851 = vst.msk [vmem:[#allocation2 + $0x2b0] sm:$0xff] %vm587, %v3781
        %3852 = vst.msk [vmem:[#allocation2 + $0x2f0] sm:$0xff] %vm587, %v3783
        %3853 = vst.msk [vmem:[#allocation2 + $0x330] sm:$0xff] %vm587, %v3785
        %3854 = vst.msk [vmem:[#allocation2 + $0x370] sm:$0xff] %vm587, %v3787
        %3855 = vst.msk [vmem:[#allocation2 + $0x3b0] sm:$0xff] %vm587, %v3789
        %3856 = vst.msk [vmem:[#allocation2 + $0x3f0] sm:$0xff] %vm587, %v3791
        %3857 = vst.msk [vmem:[#allocation2 + $0x430] sm:$0xff] %vm587, %v3793
        %3858 = vst.msk [vmem:[#allocation2 + $0x470] sm:$0xff] %vm587, %v3795
        %3859 = vst.msk [vmem:[#allocation2 + $0x4b0] sm:$0xff] %vm587, %v3797
        %3860 = vst.msk [vmem:[#allocation2 + $0x4f0] sm:$0xff] %vm587, %v3799
        %3861 = vst.msk [vmem:[#allocation2 + $0x530] sm:$0xff] %vm587, %v3801
        %3862 = vst.msk [vmem:[#allocation2 + $0x570] sm:$0xff] %vm587, %v3803
        %3863 = vst.msk [vmem:[#allocation2 + $0x5b0] sm:$0xff] %vm587, %v3805
        %3864 = vst.msk [vmem:[#allocation2 + $0x5f0] sm:$0xff] %vm587, %v3807
        %3865 = vst.msk [vmem:[#allocation2 + $0x630] sm:$0xff] %vm587, %v3809
        %3866 = vst.msk [vmem:[#allocation2 + $0x670] sm:$0xff] %vm587, %v3811
        %3867 = vst.msk [vmem:[#allocation2 + $0x6b0] sm:$0xff] %vm587, %v3813
        %v3868 = vld [vmem:[%s3489 + $0x3] sm:$0xff]
        %v3869 = vld [vmem:[%s3489 + $0xb] sm:$0xff]
        %v3870 = vld [vmem:[%s3489 + $0x13] sm:$0xff]
        %v3871 = vld [vmem:[%s3489 + $0x23] sm:$0xff]
        %v3872 = vld [vmem:[%s3489 + $0x2b] sm:$0xff]
        %v3873 = vld [vmem:[%s3489 + $0x33] sm:$0xff]
        %v3874 = vld [vmem:[%s3489 + $0x43] sm:$0xff]
        %v3875 = vld [vmem:[%s3489 + $0x4b] sm:$0xff]
        %v3876 = vld [vmem:[%s3489 + $0x53] sm:$0xff]
        %v3877 = vld [vmem:[%s3489 + $0x63] sm:$0xff]
        %v3878 = vld [vmem:[%s3489 + $0x6b] sm:$0xff]
        %v3879 = vld [vmem:[%s3489 + $0x73] sm:$0xff]
        %v3880 = vld [vmem:[%s3489 + $0x83] sm:$0xff]
        %v3881 = vld [vmem:[%s3489 + $0x8b] sm:$0xff]
        %v3882 = vld [vmem:[%s3489 + $0x93] sm:$0xff]
        %v3883 = vld [vmem:[%s3489 + $0xa3] sm:$0xff]
        %v3884 = vld [vmem:[%s3489 + $0xab] sm:$0xff]
        %v3885 = vld [vmem:[%s3489 + $0xb3] sm:$0xff]
        %v3886 = vld [vmem:[%s3489 + $0xc3] sm:$0xff]
        %v3887 = vld [vmem:[%s3489 + $0xcb] sm:$0xff]
        %v3888 = vld [vmem:[%s3489 + $0xd3] sm:$0xff]
        %v3889 = vld [vmem:[%s3489 + $0xe3] sm:$0xff]
        %v3890 = vld [vmem:[%s3489 + $0xeb] sm:$0xff]
        %v3891 = vld [vmem:[%s3489 + $0xf3] sm:$0xff]
        %v3892 = vld [vmem:[%s3489 + $0x103] sm:$0xff]
        %v3893 = vld [vmem:[%s3489 + $0x10b] sm:$0xff]
        %v3894 = vld [vmem:[%s3489 + $0x113] sm:$0xff]
        %3922 = vrot.lane.b32.xlu0 %v3868, 96
        %v3923 = vpop.permute.xlu0 %3922
        %3924 = vrot.lane.b32.xlu0 %v3869, 96
        %v3925 = vpop.permute.xlu0 %3924
        %3926 = vrot.lane.b32.xlu0 %v3870, 96
        %v3927 = vpop.permute.xlu0 %3926
        %3928 = vrot.lane.b32.xlu0 %v3871, 96
        %v3929 = vpop.permute.xlu0 %3928
        %3930 = vrot.lane.b32.xlu0 %v3872, 96
        %v3931 = vpop.permute.xlu0 %3930
        %3932 = vrot.lane.b32.xlu0 %v3873, 96
        %v3933 = vpop.permute.xlu0 %3932
        %3934 = vrot.lane.b32.xlu0 %v3874, 96
        %v3935 = vpop.permute.xlu0 %3934
        %3936 = vrot.lane.b32.xlu0 %v3875, 96
        %v3937 = vpop.permute.xlu0 %3936
        %3938 = vrot.lane.b32.xlu0 %v3876, 96
        %v3939 = vpop.permute.xlu0 %3938
        %3940 = vrot.lane.b32.xlu0 %v3877, 96
        %v3941 = vpop.permute.xlu0 %3940
        %3942 = vrot.lane.b32.xlu0 %v3878, 96
        %v3943 = vpop.permute.xlu0 %3942
        %3944 = vrot.lane.b32.xlu0 %v3879, 96
        %v3945 = vpop.permute.xlu0 %3944
        %3946 = vrot.lane.b32.xlu0 %v3880, 96
        %v3947 = vpop.permute.xlu0 %3946
        %3948 = vrot.lane.b32.xlu0 %v3881, 96
        %v3949 = vpop.permute.xlu0 %3948
        %3950 = vrot.lane.b32.xlu0 %v3882, 96
        %v3951 = vpop.permute.xlu0 %3950
        %3952 = vrot.lane.b32.xlu0 %v3883, 96
        %v3953 = vpop.permute.xlu0 %3952
        %3954 = vrot.lane.b32.xlu0 %v3884, 96
        %v3955 = vpop.permute.xlu0 %3954
        %3956 = vrot.lane.b32.xlu0 %v3885, 96
        %v3957 = vpop.permute.xlu0 %3956
        %3958 = vrot.lane.b32.xlu0 %v3886, 96
        %v3959 = vpop.permute.xlu0 %3958
        %3960 = vrot.lane.b32.xlu0 %v3887, 96
        %v3961 = vpop.permute.xlu0 %3960
        %3962 = vrot.lane.b32.xlu0 %v3888, 96
        %v3963 = vpop.permute.xlu0 %3962
        %3964 = vrot.lane.b32.xlu0 %v3889, 96
        %v3965 = vpop.permute.xlu0 %3964
        %3966 = vrot.lane.b32.xlu0 %v3890, 96
        %v3967 = vpop.permute.xlu0 %3966
        %3968 = vrot.lane.b32.xlu0 %v3891, 96
        %v3969 = vpop.permute.xlu0 %3968
        %3970 = vrot.lane.b32.xlu0 %v3892, 96
        %v3971 = vpop.permute.xlu0 %3970
        %3972 = vrot.lane.b32.xlu0 %v3893, 96
        %v3973 = vpop.permute.xlu0 %3972
        %3974 = vrot.lane.b32.xlu0 %v3894, 96
        %v3975 = vpop.permute.xlu0 %3974
        %4003 = vst.msk [vmem:[#allocation2 + $0x30] sm:$0xff] %vm750, %v3923
        %4004 = vst.msk [vmem:[#allocation2 + $0x70] sm:$0xff] %vm750, %v3925
        %4005 = vst.msk [vmem:[#allocation2 + $0xb0] sm:$0xff] %vm750, %v3927
        %4006 = vst.msk [vmem:[#allocation2 + $0xf0] sm:$0xff] %vm750, %v3929
        %4007 = vst.msk [vmem:[#allocation2 + $0x130] sm:$0xff] %vm750, %v3931
        %4008 = vst.msk [vmem:[#allocation2 + $0x170] sm:$0xff] %vm750, %v3933
        %4009 = vst.msk [vmem:[#allocation2 + $0x1b0] sm:$0xff] %vm750, %v3935
        %4010 = vst.msk [vmem:[#allocation2 + $0x1f0] sm:$0xff] %vm750, %v3937
        %4011 = vst.msk [vmem:[#allocation2 + $0x230] sm:$0xff] %vm750, %v3939
        %4012 = vst.msk [vmem:[#allocation2 + $0x270] sm:$0xff] %vm750, %v3941
        %4013 = vst.msk [vmem:[#allocation2 + $0x2b0] sm:$0xff] %vm750, %v3943
        %4014 = vst.msk [vmem:[#allocation2 + $0x2f0] sm:$0xff] %vm750, %v3945
        %4015 = vst.msk [vmem:[#allocation2 + $0x330] sm:$0xff] %vm750, %v3947
        %4016 = vst.msk [vmem:[#allocation2 + $0x370] sm:$0xff] %vm750, %v3949
        %4017 = vst.msk [vmem:[#allocation2 + $0x3b0] sm:$0xff] %vm750, %v3951
        %4018 = vst.msk [vmem:[#allocation2 + $0x3f0] sm:$0xff] %vm750, %v3953
        %4019 = vst.msk [vmem:[#allocation2 + $0x430] sm:$0xff] %vm750, %v3955
        %4020 = vst.msk [vmem:[#allocation2 + $0x470] sm:$0xff] %vm750, %v3957
        %4021 = vst.msk [vmem:[#allocation2 + $0x4b0] sm:$0xff] %vm750, %v3959
        %4022 = vst.msk [vmem:[#allocation2 + $0x4f0] sm:$0xff] %vm750, %v3961
        %4023 = vst.msk [vmem:[#allocation2 + $0x530] sm:$0xff] %vm750, %v3963
        %4024 = vst.msk [vmem:[#allocation2 + $0x570] sm:$0xff] %vm750, %v3965
        %4025 = vst.msk [vmem:[#allocation2 + $0x5b0] sm:$0xff] %vm750, %v3967
        %4026 = vst.msk [vmem:[#allocation2 + $0x5f0] sm:$0xff] %vm750, %v3969
        %4027 = vst.msk [vmem:[#allocation2 + $0x630] sm:$0xff] %vm750, %v3971
        %4028 = vst.msk [vmem:[#allocation2 + $0x670] sm:$0xff] %vm750, %v3973
        %4029 = vst.msk [vmem:[#allocation2 + $0x6b0] sm:$0xff] %vm750, %v3975
        %s4030 = scalar_lea.vmem %s229, %s3488
        %v4031 = vld [vmem:[%s4030] sm:$0xff]
        %v4032 = vld [vmem:[%s4030 + $0x8] sm:$0xff]
        %v4033 = vld [vmem:[%s4030 + $0x10] sm:$0xff]
        %v4034 = vld [vmem:[%s4030 + $0x20] sm:$0xff]
        %v4035 = vld [vmem:[%s4030 + $0x28] sm:$0xff]
        %v4036 = vld [vmem:[%s4030 + $0x30] sm:$0xff]
        %v4037 = vld [vmem:[%s4030 + $0x40] sm:$0xff]
        %v4038 = vld [vmem:[%s4030 + $0x48] sm:$0xff]
        %v4039 = vld [vmem:[%s4030 + $0x50] sm:$0xff]
        %v4040 = vld [vmem:[%s4030 + $0x60] sm:$0xff]
        %v4041 = vld [vmem:[%s4030 + $0x68] sm:$0xff]
        %v4042 = vld [vmem:[%s4030 + $0x70] sm:$0xff]
        %v4043 = vld [vmem:[%s4030 + $0x80] sm:$0xff]
        %v4044 = vld [vmem:[%s4030 + $0x88] sm:$0xff]
        %v4045 = vld [vmem:[%s4030 + $0x90] sm:$0xff]
        %v4046 = vld [vmem:[%s4030 + $0xa0] sm:$0xff]
        %v4047 = vld [vmem:[%s4030 + $0xa8] sm:$0xff]
        %v4048 = vld [vmem:[%s4030 + $0xb0] sm:$0xff]
        %v4049 = vld [vmem:[%s4030 + $0xc0] sm:$0xff]
        %v4050 = vld [vmem:[%s4030 + $0xc8] sm:$0xff]
        %v4051 = vld [vmem:[%s4030 + $0xd0] sm:$0xff]
        %v4052 = vld [vmem:[%s4030 + $0xe0] sm:$0xff]
        %v4053 = vld [vmem:[%s4030 + $0xe8] sm:$0xff]
        %v4054 = vld [vmem:[%s4030 + $0xf0] sm:$0xff]
        %v4055 = vld [vmem:[%s4030 + $0x100] sm:$0xff]
        %v4056 = vld [vmem:[%s4030 + $0x108] sm:$0xff]
        %v4057 = vld [vmem:[%s4030 + $0x110] sm:$0xff]
        %4058 = vst.msk [vmem:[#allocation2 + $0x38] sm:$0xff] %vm261, %v4031
        %4059 = vst.msk [vmem:[#allocation2 + $0x78] sm:$0xff] %vm261, %v4032
        %4060 = vst.msk [vmem:[#allocation2 + $0xb8] sm:$0xff] %vm261, %v4033
        %4061 = vst.msk [vmem:[#allocation2 + $0xf8] sm:$0xff] %vm261, %v4034
        %4062 = vst.msk [vmem:[#allocation2 + $0x138] sm:$0xff] %vm261, %v4035
        %4063 = vst.msk [vmem:[#allocation2 + $0x178] sm:$0xff] %vm261, %v4036
        %4064 = vst.msk [vmem:[#allocation2 + $0x1b8] sm:$0xff] %vm261, %v4037
        %4065 = vst.msk [vmem:[#allocation2 + $0x1f8] sm:$0xff] %vm261, %v4038
        %4066 = vst.msk [vmem:[#allocation2 + $0x238] sm:$0xff] %vm261, %v4039
        %4067 = vst.msk [vmem:[#allocation2 + $0x278] sm:$0xff] %vm261, %v4040
        %4068 = vst.msk [vmem:[#allocation2 + $0x2b8] sm:$0xff] %vm261, %v4041
        %4069 = vst.msk [vmem:[#allocation2 + $0x2f8] sm:$0xff] %vm261, %v4042
        %4070 = vst.msk [vmem:[#allocation2 + $0x338] sm:$0xff] %vm261, %v4043
        %4071 = vst.msk [vmem:[#allocation2 + $0x378] sm:$0xff] %vm261, %v4044
        %4072 = vst.msk [vmem:[#allocation2 + $0x3b8] sm:$0xff] %vm261, %v4045
        %4073 = vst.msk [vmem:[#allocation2 + $0x3f8] sm:$0xff] %vm261, %v4046
        %4074 = vst.msk [vmem:[#allocation2 + $0x438] sm:$0xff] %vm261, %v4047
        %4075 = vst.msk [vmem:[#allocation2 + $0x478] sm:$0xff] %vm261, %v4048
        %4076 = vst.msk [vmem:[#allocation2 + $0x4b8] sm:$0xff] %vm261, %v4049
        %4077 = vst.msk [vmem:[#allocation2 + $0x4f8] sm:$0xff] %vm261, %v4050
        %4078 = vst.msk [vmem:[#allocation2 + $0x538] sm:$0xff] %vm261, %v4051
        %4079 = vst.msk [vmem:[#allocation2 + $0x578] sm:$0xff] %vm261, %v4052
        %4080 = vst.msk [vmem:[#allocation2 + $0x5b8] sm:$0xff] %vm261, %v4053
        %4081 = vst.msk [vmem:[#allocation2 + $0x5f8] sm:$0xff] %vm261, %v4054
        %4082 = vst.msk [vmem:[#allocation2 + $0x638] sm:$0xff] %vm261, %v4055
        %4083 = vst.msk [vmem:[#allocation2 + $0x678] sm:$0xff] %vm261, %v4056
        %4084 = vst.msk [vmem:[#allocation2 + $0x6b8] sm:$0xff] %vm261, %v4057
        %v4085 = vld [vmem:[%s4030 + $0x1] sm:$0xff]
        %v4086 = vld [vmem:[%s4030 + $0x9] sm:$0xff]
        %v4087 = vld [vmem:[%s4030 + $0x11] sm:$0xff]
        %v4088 = vld [vmem:[%s4030 + $0x21] sm:$0xff]
        %v4089 = vld [vmem:[%s4030 + $0x29] sm:$0xff]
        %v4090 = vld [vmem:[%s4030 + $0x31] sm:$0xff]
        %v4091 = vld [vmem:[%s4030 + $0x41] sm:$0xff]
        %v4092 = vld [vmem:[%s4030 + $0x49] sm:$0xff]
        %v4093 = vld [vmem:[%s4030 + $0x51] sm:$0xff]
        %v4094 = vld [vmem:[%s4030 + $0x61] sm:$0xff]
        %v4095 = vld [vmem:[%s4030 + $0x69] sm:$0xff]
        %v4096 = vld [vmem:[%s4030 + $0x71] sm:$0xff]
        %v4097 = vld [vmem:[%s4030 + $0x81] sm:$0xff]
        %v4098 = vld [vmem:[%s4030 + $0x89] sm:$0xff]
        %v4099 = vld [vmem:[%s4030 + $0x91] sm:$0xff]
        %v4100 = vld [vmem:[%s4030 + $0xa1] sm:$0xff]
        %v4101 = vld [vmem:[%s4030 + $0xa9] sm:$0xff]
        %v4102 = vld [vmem:[%s4030 + $0xb1] sm:$0xff]
        %v4103 = vld [vmem:[%s4030 + $0xc1] sm:$0xff]
        %v4104 = vld [vmem:[%s4030 + $0xc9] sm:$0xff]
        %v4105 = vld [vmem:[%s4030 + $0xd1] sm:$0xff]
        %v4106 = vld [vmem:[%s4030 + $0xe1] sm:$0xff]
        %v4107 = vld [vmem:[%s4030 + $0xe9] sm:$0xff]
        %v4108 = vld [vmem:[%s4030 + $0xf1] sm:$0xff]
        %v4109 = vld [vmem:[%s4030 + $0x101] sm:$0xff]
        %v4110 = vld [vmem:[%s4030 + $0x109] sm:$0xff]
        %v4111 = vld [vmem:[%s4030 + $0x111] sm:$0xff]
        %4139 = vrot.lane.b32.xlu0 %v4085, 32
        %v4140 = vpop.permute.xlu0 %4139
        %4141 = vrot.lane.b32.xlu0 %v4086, 32
        %v4142 = vpop.permute.xlu0 %4141
        %4143 = vrot.lane.b32.xlu0 %v4087, 32
        %v4144 = vpop.permute.xlu0 %4143
        %4145 = vrot.lane.b32.xlu0 %v4088, 32
        %v4146 = vpop.permute.xlu0 %4145
        %4147 = vrot.lane.b32.xlu0 %v4089, 32
        %v4148 = vpop.permute.xlu0 %4147
        %4149 = vrot.lane.b32.xlu0 %v4090, 32
        %v4150 = vpop.permute.xlu0 %4149
        %4151 = vrot.lane.b32.xlu0 %v4091, 32
        %v4152 = vpop.permute.xlu0 %4151
        %4153 = vrot.lane.b32.xlu0 %v4092, 32
        %v4154 = vpop.permute.xlu0 %4153
        %4155 = vrot.lane.b32.xlu0 %v4093, 32
        %v4156 = vpop.permute.xlu0 %4155
        %4157 = vrot.lane.b32.xlu0 %v4094, 32
        %v4158 = vpop.permute.xlu0 %4157
        %4159 = vrot.lane.b32.xlu0 %v4095, 32
        %v4160 = vpop.permute.xlu0 %4159
        %4161 = vrot.lane.b32.xlu0 %v4096, 32
        %v4162 = vpop.permute.xlu0 %4161
        %4163 = vrot.lane.b32.xlu0 %v4097, 32
        %v4164 = vpop.permute.xlu0 %4163
        %4165 = vrot.lane.b32.xlu0 %v4098, 32
        %v4166 = vpop.permute.xlu0 %4165
        %4167 = vrot.lane.b32.xlu0 %v4099, 32
        %v4168 = vpop.permute.xlu0 %4167
        %4169 = vrot.lane.b32.xlu0 %v4100, 32
        %v4170 = vpop.permute.xlu0 %4169
        %4171 = vrot.lane.b32.xlu0 %v4101, 32
        %v4172 = vpop.permute.xlu0 %4171
        %4173 = vrot.lane.b32.xlu0 %v4102, 32
        %v4174 = vpop.permute.xlu0 %4173
        %4175 = vrot.lane.b32.xlu0 %v4103, 32
        %v4176 = vpop.permute.xlu0 %4175
        %4177 = vrot.lane.b32.xlu0 %v4104, 32
        %v4178 = vpop.permute.xlu0 %4177
        %4179 = vrot.lane.b32.xlu0 %v4105, 32
        %v4180 = vpop.permute.xlu0 %4179
        %4181 = vrot.lane.b32.xlu0 %v4106, 32
        %v4182 = vpop.permute.xlu0 %4181
        %4183 = vrot.lane.b32.xlu0 %v4107, 32
        %v4184 = vpop.permute.xlu0 %4183
        %4185 = vrot.lane.b32.xlu0 %v4108, 32
        %v4186 = vpop.permute.xlu0 %4185
        %4187 = vrot.lane.b32.xlu0 %v4109, 32
        %v4188 = vpop.permute.xlu0 %4187
        %4189 = vrot.lane.b32.xlu0 %v4110, 32
        %v4190 = vpop.permute.xlu0 %4189
        %4191 = vrot.lane.b32.xlu0 %v4111, 32
        %v4192 = vpop.permute.xlu0 %4191
        %4220 = vst.msk [vmem:[#allocation2 + $0x38] sm:$0xff] %vm424, %v4140
        %4221 = vst.msk [vmem:[#allocation2 + $0x78] sm:$0xff] %vm424, %v4142
        %4222 = vst.msk [vmem:[#allocation2 + $0xb8] sm:$0xff] %vm424, %v4144
        %4223 = vst.msk [vmem:[#allocation2 + $0xf8] sm:$0xff] %vm424, %v4146
        %4224 = vst.msk [vmem:[#allocation2 + $0x138] sm:$0xff] %vm424, %v4148
        %4225 = vst.msk [vmem:[#allocation2 + $0x178] sm:$0xff] %vm424, %v4150
        %4226 = vst.msk [vmem:[#allocation2 + $0x1b8] sm:$0xff] %vm424, %v4152
        %4227 = vst.msk [vmem:[#allocation2 + $0x1f8] sm:$0xff] %vm424, %v4154
        %4228 = vst.msk [vmem:[#allocation2 + $0x238] sm:$0xff] %vm424, %v4156
        %4229 = vst.msk [vmem:[#allocation2 + $0x278] sm:$0xff] %vm424, %v4158
        %4230 = vst.msk [vmem:[#allocation2 + $0x2b8] sm:$0xff] %vm424, %v4160
        %4231 = vst.msk [vmem:[#allocation2 + $0x2f8] sm:$0xff] %vm424, %v4162
        %4232 = vst.msk [vmem:[#allocation2 + $0x338] sm:$0xff] %vm424, %v4164
        %4233 = vst.msk [vmem:[#allocation2 + $0x378] sm:$0xff] %vm424, %v4166
        %4234 = vst.msk [vmem:[#allocation2 + $0x3b8] sm:$0xff] %vm424, %v4168
        %4235 = vst.msk [vmem:[#allocation2 + $0x3f8] sm:$0xff] %vm424, %v4170
        %4236 = vst.msk [vmem:[#allocation2 + $0x438] sm:$0xff] %vm424, %v4172
        %4237 = vst.msk [vmem:[#allocation2 + $0x478] sm:$0xff] %vm424, %v4174
        %4238 = vst.msk [vmem:[#allocation2 + $0x4b8] sm:$0xff] %vm424, %v4176
        %4239 = vst.msk [vmem:[#allocation2 + $0x4f8] sm:$0xff] %vm424, %v4178
        %4240 = vst.msk [vmem:[#allocation2 + $0x538] sm:$0xff] %vm424, %v4180
        %4241 = vst.msk [vmem:[#allocation2 + $0x578] sm:$0xff] %vm424, %v4182
        %4242 = vst.msk [vmem:[#allocation2 + $0x5b8] sm:$0xff] %vm424, %v4184
        %4243 = vst.msk [vmem:[#allocation2 + $0x5f8] sm:$0xff] %vm424, %v4186
        %4244 = vst.msk [vmem:[#allocation2 + $0x638] sm:$0xff] %vm424, %v4188
        %4245 = vst.msk [vmem:[#allocation2 + $0x678] sm:$0xff] %vm424, %v4190
        %4246 = vst.msk [vmem:[#allocation2 + $0x6b8] sm:$0xff] %vm424, %v4192
        %v4247 = vld [vmem:[%s4030 + $0x2] sm:$0xff]
        %v4248 = vld [vmem:[%s4030 + $0xa] sm:$0xff]
        %v4249 = vld [vmem:[%s4030 + $0x12] sm:$0xff]
        %v4250 = vld [vmem:[%s4030 + $0x22] sm:$0xff]
        %v4251 = vld [vmem:[%s4030 + $0x2a] sm:$0xff]
        %v4252 = vld [vmem:[%s4030 + $0x32] sm:$0xff]
        %v4253 = vld [vmem:[%s4030 + $0x42] sm:$0xff]
        %v4254 = vld [vmem:[%s4030 + $0x4a] sm:$0xff]
        %v4255 = vld [vmem:[%s4030 + $0x52] sm:$0xff]
        %v4256 = vld [vmem:[%s4030 + $0x62] sm:$0xff]
        %v4257 = vld [vmem:[%s4030 + $0x6a] sm:$0xff]
        %v4258 = vld [vmem:[%s4030 + $0x72] sm:$0xff]
        %v4259 = vld [vmem:[%s4030 + $0x82] sm:$0xff]
        %v4260 = vld [vmem:[%s4030 + $0x8a] sm:$0xff]
        %v4261 = vld [vmem:[%s4030 + $0x92] sm:$0xff]
        %v4262 = vld [vmem:[%s4030 + $0xa2] sm:$0xff]
        %v4263 = vld [vmem:[%s4030 + $0xaa] sm:$0xff]
        %v4264 = vld [vmem:[%s4030 + $0xb2] sm:$0xff]
        %v4265 = vld [vmem:[%s4030 + $0xc2] sm:$0xff]
        %v4266 = vld [vmem:[%s4030 + $0xca] sm:$0xff]
        %v4267 = vld [vmem:[%s4030 + $0xd2] sm:$0xff]
        %v4268 = vld [vmem:[%s4030 + $0xe2] sm:$0xff]
        %v4269 = vld [vmem:[%s4030 + $0xea] sm:$0xff]
        %v4270 = vld [vmem:[%s4030 + $0xf2] sm:$0xff]
        %v4271 = vld [vmem:[%s4030 + $0x102] sm:$0xff]
        %v4272 = vld [vmem:[%s4030 + $0x10a] sm:$0xff]
        %v4273 = vld [vmem:[%s4030 + $0x112] sm:$0xff]
        %4301 = vrot.lane.b32.xlu0 %v4247, 64
        %v4302 = vpop.permute.xlu0 %4301
        %4303 = vrot.lane.b32.xlu0 %v4248, 64
        %v4304 = vpop.permute.xlu0 %4303
        %4305 = vrot.lane.b32.xlu0 %v4249, 64
        %v4306 = vpop.permute.xlu0 %4305
        %4307 = vrot.lane.b32.xlu0 %v4250, 64
        %v4308 = vpop.permute.xlu0 %4307
        %4309 = vrot.lane.b32.xlu0 %v4251, 64
        %v4310 = vpop.permute.xlu0 %4309
        %4311 = vrot.lane.b32.xlu0 %v4252, 64
        %v4312 = vpop.permute.xlu0 %4311
        %4313 = vrot.lane.b32.xlu0 %v4253, 64
        %v4314 = vpop.permute.xlu0 %4313
        %4315 = vrot.lane.b32.xlu0 %v4254, 64
        %v4316 = vpop.permute.xlu0 %4315
        %4317 = vrot.lane.b32.xlu0 %v4255, 64
        %v4318 = vpop.permute.xlu0 %4317
        %4319 = vrot.lane.b32.xlu0 %v4256, 64
        %v4320 = vpop.permute.xlu0 %4319
        %4321 = vrot.lane.b32.xlu0 %v4257, 64
        %v4322 = vpop.permute.xlu0 %4321
        %4323 = vrot.lane.b32.xlu0 %v4258, 64
        %v4324 = vpop.permute.xlu0 %4323
        %4325 = vrot.lane.b32.xlu0 %v4259, 64
        %v4326 = vpop.permute.xlu0 %4325
        %4327 = vrot.lane.b32.xlu0 %v4260, 64
        %v4328 = vpop.permute.xlu0 %4327
        %4329 = vrot.lane.b32.xlu0 %v4261, 64
        %v4330 = vpop.permute.xlu0 %4329
        %4331 = vrot.lane.b32.xlu0 %v4262, 64
        %v4332 = vpop.permute.xlu0 %4331
        %4333 = vrot.lane.b32.xlu0 %v4263, 64
        %v4334 = vpop.permute.xlu0 %4333
        %4335 = vrot.lane.b32.xlu0 %v4264, 64
        %v4336 = vpop.permute.xlu0 %4335
        %4337 = vrot.lane.b32.xlu0 %v4265, 64
        %v4338 = vpop.permute.xlu0 %4337
        %4339 = vrot.lane.b32.xlu0 %v4266, 64
        %v4340 = vpop.permute.xlu0 %4339
        %4341 = vrot.lane.b32.xlu0 %v4267, 64
        %v4342 = vpop.permute.xlu0 %4341
        %4343 = vrot.lane.b32.xlu0 %v4268, 64
        %v4344 = vpop.permute.xlu0 %4343
        %4345 = vrot.lane.b32.xlu0 %v4269, 64
        %v4346 = vpop.permute.xlu0 %4345
        %4347 = vrot.lane.b32.xlu0 %v4270, 64
        %v4348 = vpop.permute.xlu0 %4347
        %4349 = vrot.lane.b32.xlu0 %v4271, 64
        %v4350 = vpop.permute.xlu0 %4349
        %4351 = vrot.lane.b32.xlu0 %v4272, 64
        %v4352 = vpop.permute.xlu0 %4351
        %4353 = vrot.lane.b32.xlu0 %v4273, 64
        %v4354 = vpop.permute.xlu0 %4353
        %4382 = vst.msk [vmem:[#allocation2 + $0x38] sm:$0xff] %vm587, %v4302
        %4383 = vst.msk [vmem:[#allocation2 + $0x78] sm:$0xff] %vm587, %v4304
        %4384 = vst.msk [vmem:[#allocation2 + $0xb8] sm:$0xff] %vm587, %v4306
        %4385 = vst.msk [vmem:[#allocation2 + $0xf8] sm:$0xff] %vm587, %v4308
        %4386 = vst.msk [vmem:[#allocation2 + $0x138] sm:$0xff] %vm587, %v4310
        %4387 = vst.msk [vmem:[#allocation2 + $0x178] sm:$0xff] %vm587, %v4312
        %4388 = vst.msk [vmem:[#allocation2 + $0x1b8] sm:$0xff] %vm587, %v4314
        %4389 = vst.msk [vmem:[#allocation2 + $0x1f8] sm:$0xff] %vm587, %v4316
        %4390 = vst.msk [vmem:[#allocation2 + $0x238] sm:$0xff] %vm587, %v4318
        %4391 = vst.msk [vmem:[#allocation2 + $0x278] sm:$0xff] %vm587, %v4320
        %4392 = vst.msk [vmem:[#allocation2 + $0x2b8] sm:$0xff] %vm587, %v4322
        %4393 = vst.msk [vmem:[#allocation2 + $0x2f8] sm:$0xff] %vm587, %v4324
        %4394 = vst.msk [vmem:[#allocation2 + $0x338] sm:$0xff] %vm587, %v4326
        %4395 = vst.msk [vmem:[#allocation2 + $0x378] sm:$0xff] %vm587, %v4328
        %4396 = vst.msk [vmem:[#allocation2 + $0x3b8] sm:$0xff] %vm587, %v4330
        %4397 = vst.msk [vmem:[#allocation2 + $0x3f8] sm:$0xff] %vm587, %v4332
        %4398 = vst.msk [vmem:[#allocation2 + $0x438] sm:$0xff] %vm587, %v4334
        %4399 = vst.msk [vmem:[#allocation2 + $0x478] sm:$0xff] %vm587, %v4336
        %4400 = vst.msk [vmem:[#allocation2 + $0x4b8] sm:$0xff] %vm587, %v4338
        %4401 = vst.msk [vmem:[#allocation2 + $0x4f8] sm:$0xff] %vm587, %v4340
        %4402 = vst.msk [vmem:[#allocation2 + $0x538] sm:$0xff] %vm587, %v4342
        %4403 = vst.msk [vmem:[#allocation2 + $0x578] sm:$0xff] %vm587, %v4344
        %4404 = vst.msk [vmem:[#allocation2 + $0x5b8] sm:$0xff] %vm587, %v4346
        %4405 = vst.msk [vmem:[#allocation2 + $0x5f8] sm:$0xff] %vm587, %v4348
        %4406 = vst.msk [vmem:[#allocation2 + $0x638] sm:$0xff] %vm587, %v4350
        %4407 = vst.msk [vmem:[#allocation2 + $0x678] sm:$0xff] %vm587, %v4352
        %4408 = vst.msk [vmem:[#allocation2 + $0x6b8] sm:$0xff] %vm587, %v4354
        %v4409 = vld [vmem:[%s4030 + $0x3] sm:$0xff]
        %v4410 = vld [vmem:[%s4030 + $0xb] sm:$0xff]
        %v4411 = vld [vmem:[%s4030 + $0x13] sm:$0xff]
        %v4412 = vld [vmem:[%s4030 + $0x23] sm:$0xff]
        %v4413 = vld [vmem:[%s4030 + $0x2b] sm:$0xff]
        %v4414 = vld [vmem:[%s4030 + $0x33] sm:$0xff]
        %v4415 = vld [vmem:[%s4030 + $0x43] sm:$0xff]
        %v4416 = vld [vmem:[%s4030 + $0x4b] sm:$0xff]
        %v4417 = vld [vmem:[%s4030 + $0x53] sm:$0xff]
        %v4418 = vld [vmem:[%s4030 + $0x63] sm:$0xff]
        %v4419 = vld [vmem:[%s4030 + $0x6b] sm:$0xff]
        %v4420 = vld [vmem:[%s4030 + $0x73] sm:$0xff]
        %v4421 = vld [vmem:[%s4030 + $0x83] sm:$0xff]
        %v4422 = vld [vmem:[%s4030 + $0x8b] sm:$0xff]
        %v4423 = vld [vmem:[%s4030 + $0x93] sm:$0xff]
        %v4424 = vld [vmem:[%s4030 + $0xa3] sm:$0xff]
        %v4425 = vld [vmem:[%s4030 + $0xab] sm:$0xff]
        %v4426 = vld [vmem:[%s4030 + $0xb3] sm:$0xff]
        %v4427 = vld [vmem:[%s4030 + $0xc3] sm:$0xff]
        %v4428 = vld [vmem:[%s4030 + $0xcb] sm:$0xff]
        %v4429 = vld [vmem:[%s4030 + $0xd3] sm:$0xff]
        %v4430 = vld [vmem:[%s4030 + $0xe3] sm:$0xff]
        %v4431 = vld [vmem:[%s4030 + $0xeb] sm:$0xff]
        %v4432 = vld [vmem:[%s4030 + $0xf3] sm:$0xff]
        %v4433 = vld [vmem:[%s4030 + $0x103] sm:$0xff]
        %v4434 = vld [vmem:[%s4030 + $0x10b] sm:$0xff]
        %v4435 = vld [vmem:[%s4030 + $0x113] sm:$0xff]
        %4463 = vrot.lane.b32.xlu0 %v4409, 96
        %v4464 = vpop.permute.xlu0 %4463
        %4465 = vrot.lane.b32.xlu0 %v4410, 96
        %v4466 = vpop.permute.xlu0 %4465
        %4467 = vrot.lane.b32.xlu0 %v4411, 96
        %v4468 = vpop.permute.xlu0 %4467
        %4469 = vrot.lane.b32.xlu0 %v4412, 96
        %v4470 = vpop.permute.xlu0 %4469
        %4471 = vrot.lane.b32.xlu0 %v4413, 96
        %v4472 = vpop.permute.xlu0 %4471
        %4473 = vrot.lane.b32.xlu0 %v4414, 96
        %v4474 = vpop.permute.xlu0 %4473
        %4475 = vrot.lane.b32.xlu0 %v4415, 96
        %v4476 = vpop.permute.xlu0 %4475
        %4477 = vrot.lane.b32.xlu0 %v4416, 96
        %v4478 = vpop.permute.xlu0 %4477
        %4479 = vrot.lane.b32.xlu0 %v4417, 96
        %v4480 = vpop.permute.xlu0 %4479
        %4481 = vrot.lane.b32.xlu0 %v4418, 96
        %v4482 = vpop.permute.xlu0 %4481
        %4483 = vrot.lane.b32.xlu0 %v4419, 96
        %v4484 = vpop.permute.xlu0 %4483
        %4485 = vrot.lane.b32.xlu0 %v4420, 96
        %v4486 = vpop.permute.xlu0 %4485
        %4487 = vrot.lane.b32.xlu0 %v4421, 96
        %v4488 = vpop.permute.xlu0 %4487
        %4489 = vrot.lane.b32.xlu0 %v4422, 96
        %v4490 = vpop.permute.xlu0 %4489
        %4491 = vrot.lane.b32.xlu0 %v4423, 96
        %v4492 = vpop.permute.xlu0 %4491
        %4493 = vrot.lane.b32.xlu0 %v4424, 96
        %v4494 = vpop.permute.xlu0 %4493
        %4495 = vrot.lane.b32.xlu0 %v4425, 96
        %v4496 = vpop.permute.xlu0 %4495
        %4497 = vrot.lane.b32.xlu0 %v4426, 96
        %v4498 = vpop.permute.xlu0 %4497
        %4499 = vrot.lane.b32.xlu0 %v4427, 96
        %v4500 = vpop.permute.xlu0 %4499
        %4501 = vrot.lane.b32.xlu0 %v4428, 96
        %v4502 = vpop.permute.xlu0 %4501
        %4503 = vrot.lane.b32.xlu0 %v4429, 96
        %v4504 = vpop.permute.xlu0 %4503
        %4505 = vrot.lane.b32.xlu0 %v4430, 96
        %v4506 = vpop.permute.xlu0 %4505
        %4507 = vrot.lane.b32.xlu0 %v4431, 96
        %v4508 = vpop.permute.xlu0 %4507
        %4509 = vrot.lane.b32.xlu0 %v4432, 96
        %v4510 = vpop.permute.xlu0 %4509
        %4511 = vrot.lane.b32.xlu0 %v4433, 96
        %v4512 = vpop.permute.xlu0 %4511
        %4513 = vrot.lane.b32.xlu0 %v4434, 96
        %v4514 = vpop.permute.xlu0 %4513
        %4515 = vrot.lane.b32.xlu0 %v4435, 96
        %v4516 = vpop.permute.xlu0 %4515
        %4544 = vst.msk [vmem:[#allocation2 + $0x38] sm:$0xff] %vm750, %v4464
        %4545 = vst.msk [vmem:[#allocation2 + $0x78] sm:$0xff] %vm750, %v4466
        %4546 = vst.msk [vmem:[#allocation2 + $0xb8] sm:$0xff] %vm750, %v4468
        %4547 = vst.msk [vmem:[#allocation2 + $0xf8] sm:$0xff] %vm750, %v4470
        %4548 = vst.msk [vmem:[#allocation2 + $0x138] sm:$0xff] %vm750, %v4472
        %4549 = vst.msk [vmem:[#allocation2 + $0x178] sm:$0xff] %vm750, %v4474
        %4550 = vst.msk [vmem:[#allocation2 + $0x1b8] sm:$0xff] %vm750, %v4476
        %4551 = vst.msk [vmem:[#allocation2 + $0x1f8] sm:$0xff] %vm750, %v4478
        %4552 = vst.msk [vmem:[#allocation2 + $0x238] sm:$0xff] %vm750, %v4480
        %4553 = vst.msk [vmem:[#allocation2 + $0x278] sm:$0xff] %vm750, %v4482
        %4554 = vst.msk [vmem:[#allocation2 + $0x2b8] sm:$0xff] %vm750, %v4484
        %4555 = vst.msk [vmem:[#allocation2 + $0x2f8] sm:$0xff] %vm750, %v4486
        %4556 = vst.msk [vmem:[#allocation2 + $0x338] sm:$0xff] %vm750, %v4488
        %4557 = vst.msk [vmem:[#allocation2 + $0x378] sm:$0xff] %vm750, %v4490
        %4558 = vst.msk [vmem:[#allocation2 + $0x3b8] sm:$0xff] %vm750, %v4492
        %4559 = vst.msk [vmem:[#allocation2 + $0x3f8] sm:$0xff] %vm750, %v4494
        %4560 = vst.msk [vmem:[#allocation2 + $0x438] sm:$0xff] %vm750, %v4496
        %4561 = vst.msk [vmem:[#allocation2 + $0x478] sm:$0xff] %vm750, %v4498
        %4562 = vst.msk [vmem:[#allocation2 + $0x4b8] sm:$0xff] %vm750, %v4500
        %4563 = vst.msk [vmem:[#allocation2 + $0x4f8] sm:$0xff] %vm750, %v4502
        %4564 = vst.msk [vmem:[#allocation2 + $0x538] sm:$0xff] %vm750, %v4504
        %4565 = vst.msk [vmem:[#allocation2 + $0x578] sm:$0xff] %vm750, %v4506
        %4566 = vst.msk [vmem:[#allocation2 + $0x5b8] sm:$0xff] %vm750, %v4508
        %4567 = vst.msk [vmem:[#allocation2 + $0x5f8] sm:$0xff] %vm750, %v4510
        %4568 = vst.msk [vmem:[#allocation2 + $0x638] sm:$0xff] %vm750, %v4512
        %4569 = vst.msk [vmem:[#allocation2 + $0x678] sm:$0xff] %vm750, %v4514
        %4570 = vst.msk [vmem:[#allocation2 + $0x6b8] sm:$0xff] %vm750, %v4516
        %v4571 = vld [vmem:[#allocation2] sm:$0xff]
        %v4572 = vld [vmem:[#allocation2 + $0x8] sm:$0xff]
        %v4573 = vld [vmem:[#allocation2 + $0x10] sm:$0xff]
        %v4574 = vld [vmem:[#allocation2 + $0x18] sm:$0xff]
        %v4575 = vld [vmem:[#allocation2 + $0x20] sm:$0xff]
        %v4576 = vld [vmem:[#allocation2 + $0x28] sm:$0xff]
        %v4577 = vld [vmem:[#allocation2 + $0x30] sm:$0xff]
        %v4578 = vld [vmem:[#allocation2 + $0x38] sm:$0xff]
        %v4579 = vld [vmem:[#allocation2 + $0x40] sm:$0xff]
        %v4580 = vld [vmem:[#allocation2 + $0x48] sm:$0xff]
        %v4581 = vld [vmem:[#allocation2 + $0x50] sm:$0xff]
        %v4582 = vld [vmem:[#allocation2 + $0x58] sm:$0xff]
        %v4583 = vld [vmem:[#allocation2 + $0x60] sm:$0xff]
        %v4584 = vld [vmem:[#allocation2 + $0x68] sm:$0xff]
        %v4585 = vld [vmem:[#allocation2 + $0x70] sm:$0xff]
        %v4586 = vld [vmem:[#allocation2 + $0x78] sm:$0xff]
        %v4587 = vld [vmem:[#allocation2 + $0x80] sm:$0xff]
        %v4588 = vld [vmem:[#allocation2 + $0x88] sm:$0xff]
        %v4589 = vld [vmem:[#allocation2 + $0x90] sm:$0xff]
        %v4590 = vld [vmem:[#allocation2 + $0x98] sm:$0xff]
        %v4591 = vld [vmem:[#allocation2 + $0xa0] sm:$0xff]
        %v4592 = vld [vmem:[#allocation2 + $0xa8] sm:$0xff]
        %v4593 = vld [vmem:[#allocation2 + $0xb0] sm:$0xff]
        %v4594 = vld [vmem:[#allocation2 + $0xb8] sm:$0xff]
        %v4595 = vld [vmem:[#allocation2 + $0xc0] sm:$0xff]
        %v4596 = vld [vmem:[#allocation2 + $0xc8] sm:$0xff]
        %v4597 = vld [vmem:[#allocation2 + $0xd0] sm:$0xff]
        %v4598 = vld [vmem:[#allocation2 + $0xd8] sm:$0xff]
        %v4599 = vld [vmem:[#allocation2 + $0xe0] sm:$0xff]
        %v4600 = vld [vmem:[#allocation2 + $0xe8] sm:$0xff]
        %v4601 = vld [vmem:[#allocation2 + $0xf0] sm:$0xff]
        %v4602 = vld [vmem:[#allocation2 + $0xf8] sm:$0xff]
        %v4603 = vld [vmem:[#allocation2 + $0x100] sm:$0xff]
        %v4604 = vld [vmem:[#allocation2 + $0x108] sm:$0xff]
        %v4605 = vld [vmem:[#allocation2 + $0x110] sm:$0xff]
        %v4606 = vld [vmem:[#allocation2 + $0x118] sm:$0xff]
        %v4607 = vld [vmem:[#allocation2 + $0x120] sm:$0xff]
        %v4608 = vld [vmem:[#allocation2 + $0x128] sm:$0xff]
        %v4609 = vld [vmem:[#allocation2 + $0x130] sm:$0xff]
        %v4610 = vld [vmem:[#allocation2 + $0x138] sm:$0xff]
        %v4611 = vld [vmem:[#allocation2 + $0x140] sm:$0xff]
        %v4612 = vld [vmem:[#allocation2 + $0x148] sm:$0xff]
        %v4613 = vld [vmem:[#allocation2 + $0x150] sm:$0xff]
        %v4614 = vld [vmem:[#allocation2 + $0x158] sm:$0xff]
        %v4615 = vld [vmem:[#allocation2 + $0x160] sm:$0xff]
        %v4616 = vld [vmem:[#allocation2 + $0x168] sm:$0xff]
        %v4617 = vld [vmem:[#allocation2 + $0x170] sm:$0xff]
        %v4618 = vld [vmem:[#allocation2 + $0x178] sm:$0xff]
        %v4619 = vld [vmem:[#allocation2 + $0x180] sm:$0xff]
        %v4620 = vld [vmem:[#allocation2 + $0x188] sm:$0xff]
        %v4621 = vld [vmem:[#allocation2 + $0x190] sm:$0xff]
        %v4622 = vld [vmem:[#allocation2 + $0x198] sm:$0xff]
        %v4623 = vld [vmem:[#allocation2 + $0x1a0] sm:$0xff]
        %v4624 = vld [vmem:[#allocation2 + $0x1a8] sm:$0xff]
        %v4625 = vld [vmem:[#allocation2 + $0x1b0] sm:$0xff]
        %v4626 = vld [vmem:[#allocation2 + $0x1b8] sm:$0xff]
        %v4627 = vld [vmem:[#allocation2 + $0x1c0] sm:$0xff]
        %v4628 = vld [vmem:[#allocation2 + $0x1c8] sm:$0xff]
        %v4629 = vld [vmem:[#allocation2 + $0x1d0] sm:$0xff]
        %v4630 = vld [vmem:[#allocation2 + $0x1d8] sm:$0xff]
        %v4631 = vld [vmem:[#allocation2 + $0x1e0] sm:$0xff]
        %v4632 = vld [vmem:[#allocation2 + $0x1e8] sm:$0xff]
        %v4633 = vld [vmem:[#allocation2 + $0x1f0] sm:$0xff]
        %v4634 = vld [vmem:[#allocation2 + $0x1f8] sm:$0xff]
        %v4635 = vld [vmem:[#allocation2 + $0x200] sm:$0xff]
        %v4636 = vld [vmem:[#allocation2 + $0x208] sm:$0xff]
        %v4637 = vld [vmem:[#allocation2 + $0x210] sm:$0xff]
        %v4638 = vld [vmem:[#allocation2 + $0x218] sm:$0xff]
        %v4639 = vld [vmem:[#allocation2 + $0x220] sm:$0xff]
        %v4640 = vld [vmem:[#allocation2 + $0x228] sm:$0xff]
        %v4641 = vld [vmem:[#allocation2 + $0x230] sm:$0xff]
        %v4642 = vld [vmem:[#allocation2 + $0x238] sm:$0xff]
        %v4643 = vld [vmem:[#allocation2 + $0x240] sm:$0xff]
        %v4644 = vld [vmem:[#allocation2 + $0x248] sm:$0xff]
        %v4645 = vld [vmem:[#allocation2 + $0x250] sm:$0xff]
        %v4646 = vld [vmem:[#allocation2 + $0x258] sm:$0xff]
        %v4647 = vld [vmem:[#allocation2 + $0x260] sm:$0xff]
        %v4648 = vld [vmem:[#allocation2 + $0x268] sm:$0xff]
        %v4649 = vld [vmem:[#allocation2 + $0x270] sm:$0xff]
        %v4650 = vld [vmem:[#allocation2 + $0x278] sm:$0xff]
        %v4651 = vld [vmem:[#allocation2 + $0x280] sm:$0xff]
        %v4652 = vld [vmem:[#allocation2 + $0x288] sm:$0xff]
        %v4653 = vld [vmem:[#allocation2 + $0x290] sm:$0xff]
        %v4654 = vld [vmem:[#allocation2 + $0x298] sm:$0xff]
        %v4655 = vld [vmem:[#allocation2 + $0x2a0] sm:$0xff]
        %v4656 = vld [vmem:[#allocation2 + $0x2a8] sm:$0xff]
        %v4657 = vld [vmem:[#allocation2 + $0x2b0] sm:$0xff]
        %v4658 = vld [vmem:[#allocation2 + $0x2b8] sm:$0xff]
        %v4659 = vld [vmem:[#allocation2 + $0x2c0] sm:$0xff]
        %v4660 = vld [vmem:[#allocation2 + $0x2c8] sm:$0xff]
        %v4661 = vld [vmem:[#allocation2 + $0x2d0] sm:$0xff]
        %v4662 = vld [vmem:[#allocation2 + $0x2d8] sm:$0xff]
        %v4663 = vld [vmem:[#allocation2 + $0x2e0] sm:$0xff]
        %v4664 = vld [vmem:[#allocation2 + $0x2e8] sm:$0xff]
        %v4665 = vld [vmem:[#allocation2 + $0x2f0] sm:$0xff]
        %v4666 = vld [vmem:[#allocation2 + $0x2f8] sm:$0xff]
        %v4667 = vld [vmem:[#allocation2 + $0x300] sm:$0xff]
        %v4668 = vld [vmem:[#allocation2 + $0x308] sm:$0xff]
        %v4669 = vld [vmem:[#allocation2 + $0x310] sm:$0xff]
        %v4670 = vld [vmem:[#allocation2 + $0x318] sm:$0xff]
        %v4671 = vld [vmem:[#allocation2 + $0x320] sm:$0xff]
        %v4672 = vld [vmem:[#allocation2 + $0x328] sm:$0xff]
        %v4673 = vld [vmem:[#allocation2 + $0x330] sm:$0xff]
        %v4674 = vld [vmem:[#allocation2 + $0x338] sm:$0xff]
        %v4675 = vld [vmem:[#allocation2 + $0x340] sm:$0xff]
        %v4676 = vld [vmem:[#allocation2 + $0x348] sm:$0xff]
        %v4677 = vld [vmem:[#allocation2 + $0x350] sm:$0xff]
        %v4678 = vld [vmem:[#allocation2 + $0x358] sm:$0xff]
        %v4679 = vld [vmem:[#allocation2 + $0x360] sm:$0xff]
        %v4680 = vld [vmem:[#allocation2 + $0x368] sm:$0xff]
        %v4681 = vld [vmem:[#allocation2 + $0x370] sm:$0xff]
        %v4682 = vld [vmem:[#allocation2 + $0x378] sm:$0xff]
        %v4683 = vld [vmem:[#allocation2 + $0x380] sm:$0xff]
        %v4684 = vld [vmem:[#allocation2 + $0x388] sm:$0xff]
        %v4685 = vld [vmem:[#allocation2 + $0x390] sm:$0xff]
        %v4686 = vld [vmem:[#allocation2 + $0x398] sm:$0xff]
        %v4687 = vld [vmem:[#allocation2 + $0x3a0] sm:$0xff]
        %v4688 = vld [vmem:[#allocation2 + $0x3a8] sm:$0xff]
        %v4689 = vld [vmem:[#allocation2 + $0x3b0] sm:$0xff]
        %v4690 = vld [vmem:[#allocation2 + $0x3b8] sm:$0xff]
        %v4691 = vld [vmem:[#allocation2 + $0x3c0] sm:$0xff]
        %v4692 = vld [vmem:[#allocation2 + $0x3c8] sm:$0xff]
        %v4693 = vld [vmem:[#allocation2 + $0x3d0] sm:$0xff]
        %v4694 = vld [vmem:[#allocation2 + $0x3d8] sm:$0xff]
        %v4695 = vld [vmem:[#allocation2 + $0x3e0] sm:$0xff]
        %v4696 = vld [vmem:[#allocation2 + $0x3e8] sm:$0xff]
        %v4697 = vld [vmem:[#allocation2 + $0x3f0] sm:$0xff]
        %v4698 = vld [vmem:[#allocation2 + $0x3f8] sm:$0xff]
        %v4699 = vld [vmem:[#allocation2 + $0x400] sm:$0xff]
        %v4700 = vld [vmem:[#allocation2 + $0x408] sm:$0xff]
        %v4701 = vld [vmem:[#allocation2 + $0x410] sm:$0xff]
        %v4702 = vld [vmem:[#allocation2 + $0x418] sm:$0xff]
        %v4703 = vld [vmem:[#allocation2 + $0x420] sm:$0xff]
        %v4704 = vld [vmem:[#allocation2 + $0x428] sm:$0xff]
        %v4705 = vld [vmem:[#allocation2 + $0x430] sm:$0xff]
        %v4706 = vld [vmem:[#allocation2 + $0x438] sm:$0xff]
        %v4707 = vld [vmem:[#allocation2 + $0x440] sm:$0xff]
        %v4708 = vld [vmem:[#allocation2 + $0x448] sm:$0xff]
        %v4709 = vld [vmem:[#allocation2 + $0x450] sm:$0xff]
        %v4710 = vld [vmem:[#allocation2 + $0x458] sm:$0xff]
        %v4711 = vld [vmem:[#allocation2 + $0x460] sm:$0xff]
        %v4712 = vld [vmem:[#allocation2 + $0x468] sm:$0xff]
        %v4713 = vld [vmem:[#allocation2 + $0x470] sm:$0xff]
        %v4714 = vld [vmem:[#allocation2 + $0x478] sm:$0xff]
        %v4715 = vld [vmem:[#allocation2 + $0x480] sm:$0xff]
        %v4716 = vld [vmem:[#allocation2 + $0x488] sm:$0xff]
        %v4717 = vld [vmem:[#allocation2 + $0x490] sm:$0xff]
        %v4718 = vld [vmem:[#allocation2 + $0x498] sm:$0xff]
        %v4719 = vld [vmem:[#allocation2 + $0x4a0] sm:$0xff]
        %v4720 = vld [vmem:[#allocation2 + $0x4a8] sm:$0xff]
        %v4721 = vld [vmem:[#allocation2 + $0x4b0] sm:$0xff]
        %v4722 = vld [vmem:[#allocation2 + $0x4b8] sm:$0xff]
        %v4723 = vld [vmem:[#allocation2 + $0x4c0] sm:$0xff]
        %v4724 = vld [vmem:[#allocation2 + $0x4c8] sm:$0xff]
        %v4725 = vld [vmem:[#allocation2 + $0x4d0] sm:$0xff]
        %v4726 = vld [vmem:[#allocation2 + $0x4d8] sm:$0xff]
        %v4727 = vld [vmem:[#allocation2 + $0x4e0] sm:$0xff]
        %v4728 = vld [vmem:[#allocation2 + $0x4e8] sm:$0xff]
        %v4729 = vld [vmem:[#allocation2 + $0x4f0] sm:$0xff]
        %v4730 = vld [vmem:[#allocation2 + $0x4f8] sm:$0xff]
        %v4731 = vld [vmem:[#allocation2 + $0x500] sm:$0xff]
        %v4732 = vld [vmem:[#allocation2 + $0x508] sm:$0xff]
        %v4733 = vld [vmem:[#allocation2 + $0x510] sm:$0xff]
        %v4734 = vld [vmem:[#allocation2 + $0x518] sm:$0xff]
        %v4735 = vld [vmem:[#allocation2 + $0x520] sm:$0xff]
        %v4736 = vld [vmem:[#allocation2 + $0x528] sm:$0xff]
        %v4737 = vld [vmem:[#allocation2 + $0x530] sm:$0xff]
        %v4738 = vld [vmem:[#allocation2 + $0x538] sm:$0xff]
        %v4739 = vld [vmem:[#allocation2 + $0x540] sm:$0xff]
        %v4740 = vld [vmem:[#allocation2 + $0x548] sm:$0xff]
        %v4741 = vld [vmem:[#allocation2 + $0x550] sm:$0xff]
        %v4742 = vld [vmem:[#allocation2 + $0x558] sm:$0xff]
        %v4743 = vld [vmem:[#allocation2 + $0x560] sm:$0xff]
        %v4744 = vld [vmem:[#allocation2 + $0x568] sm:$0xff]
        %v4745 = vld [vmem:[#allocation2 + $0x570] sm:$0xff]
        %v4746 = vld [vmem:[#allocation2 + $0x578] sm:$0xff]
        %v4747 = vld [vmem:[#allocation2 + $0x580] sm:$0xff]
        %v4748 = vld [vmem:[#allocation2 + $0x588] sm:$0xff]
        %v4749 = vld [vmem:[#allocation2 + $0x590] sm:$0xff]
        %v4750 = vld [vmem:[#allocation2 + $0x598] sm:$0xff]
        %v4751 = vld [vmem:[#allocation2 + $0x5a0] sm:$0xff]
        %v4752 = vld [vmem:[#allocation2 + $0x5a8] sm:$0xff]
        %v4753 = vld [vmem:[#allocation2 + $0x5b0] sm:$0xff]
        %v4754 = vld [vmem:[#allocation2 + $0x5b8] sm:$0xff]
        %v4755 = vld [vmem:[#allocation2 + $0x5c0] sm:$0xff]
        %v4756 = vld [vmem:[#allocation2 + $0x5c8] sm:$0xff]
        %v4757 = vld [vmem:[#allocation2 + $0x5d0] sm:$0xff]
        %v4758 = vld [vmem:[#allocation2 + $0x5d8] sm:$0xff]
        %v4759 = vld [vmem:[#allocation2 + $0x5e0] sm:$0xff]
        %v4760 = vld [vmem:[#allocation2 + $0x5e8] sm:$0xff]
        %v4761 = vld [vmem:[#allocation2 + $0x5f0] sm:$0xff]
        %v4762 = vld [vmem:[#allocation2 + $0x5f8] sm:$0xff]
        %v4763 = vld [vmem:[#allocation2 + $0x600] sm:$0xff]
        %v4764 = vld [vmem:[#allocation2 + $0x608] sm:$0xff]
        %v4765 = vld [vmem:[#allocation2 + $0x610] sm:$0xff]
        %v4766 = vld [vmem:[#allocation2 + $0x618] sm:$0xff]
        %v4767 = vld [vmem:[#allocation2 + $0x620] sm:$0xff]
        %v4768 = vld [vmem:[#allocation2 + $0x628] sm:$0xff]
        %v4769 = vld [vmem:[#allocation2 + $0x630] sm:$0xff]
        %v4770 = vld [vmem:[#allocation2 + $0x638] sm:$0xff]
        %v4771 = vld [vmem:[#allocation2 + $0x640] sm:$0xff]
        %v4772 = vld [vmem:[#allocation2 + $0x648] sm:$0xff]
        %v4773 = vld [vmem:[#allocation2 + $0x650] sm:$0xff]
        %v4774 = vld [vmem:[#allocation2 + $0x658] sm:$0xff]
        %v4775 = vld [vmem:[#allocation2 + $0x660] sm:$0xff]
        %v4776 = vld [vmem:[#allocation2 + $0x668] sm:$0xff]
        %v4777 = vld [vmem:[#allocation2 + $0x670] sm:$0xff]
        %v4778 = vld [vmem:[#allocation2 + $0x678] sm:$0xff]
        %v4779 = vld [vmem:[#allocation2 + $0x680] sm:$0xff]
        %v4780 = vld [vmem:[#allocation2 + $0x688] sm:$0xff]
        %v4781 = vld [vmem:[#allocation2 + $0x690] sm:$0xff]
        %v4782 = vld [vmem:[#allocation2 + $0x698] sm:$0xff]
        %v4783 = vld [vmem:[#allocation2 + $0x6a0] sm:$0xff]
        %v4784 = vld [vmem:[#allocation2 + $0x6a8] sm:$0xff]
        %v4785 = vld [vmem:[#allocation2 + $0x6b0] sm:$0xff]
        %v4786 = vld [vmem:[#allocation2 + $0x6b8] sm:$0xff]
        %v4787 = vld [vmem:[%s2] sm:$0xff]
        %v4788 = vld [vmem:[%s2 + $0x8] sm:$0xff]
        %v4789 = vld [vmem:[%s2 + $0x10] sm:$0xff]
        %v4790 = vld [vmem:[%s2 + $0x18] sm:$0xff]
        %v4791 = vld [vmem:[%s2 + $0x20] sm:$0xff]
        %v4792 = vld [vmem:[%s2 + $0x28] sm:$0xff]
        %v4793 = vld [vmem:[%s2 + $0x30] sm:$0xff]
        %v4794 = vld [vmem:[%s2 + $0x38] sm:$0xff]
        %v4795 = vld [vmem:[%s2 + $0x40] sm:$0xff]
        %v4796 = vld [vmem:[%s2 + $0x48] sm:$0xff]
        %v4797 = vld [vmem:[%s2 + $0x50] sm:$0xff]
        %v4798 = vld [vmem:[%s2 + $0x58] sm:$0xff]
        %v4799 = vld [vmem:[%s2 + $0x60] sm:$0xff]
        %v4800 = vld [vmem:[%s2 + $0x68] sm:$0xff]
        %v4801 = vld [vmem:[%s2 + $0x70] sm:$0xff]
        %v4802 = vld [vmem:[%s2 + $0x78] sm:$0xff]
        %v4803 = vld [vmem:[%s2 + $0x80] sm:$0xff]
        %v4804 = vld [vmem:[%s2 + $0x88] sm:$0xff]
        %v4805 = vld [vmem:[%s2 + $0x90] sm:$0xff]
        %v4806 = vld [vmem:[%s2 + $0x98] sm:$0xff]
        %v4807 = vld [vmem:[%s2 + $0xa0] sm:$0xff]
        %v4808 = vld [vmem:[%s2 + $0xa8] sm:$0xff]
        %v4809 = vld [vmem:[%s2 + $0xb0] sm:$0xff]
        %v4810 = vld [vmem:[%s2 + $0xb8] sm:$0xff]
        %v4811 = vld [vmem:[%s2 + $0xc0] sm:$0xff]
        %v4812 = vld [vmem:[%s2 + $0xc8] sm:$0xff]
        %v4813 = vld [vmem:[%s2 + $0xd0] sm:$0xff]
        %v4814 = vld [vmem:[%s2 + $0xd8] sm:$0xff]
        %v4815 = vld [vmem:[%s2 + $0xe0] sm:$0xff]
        %v4816 = vld [vmem:[%s2 + $0xe8] sm:$0xff]
        %v4817 = vld [vmem:[%s2 + $0xf0] sm:$0xff]
        %v4818 = vld [vmem:[%s2 + $0xf8] sm:$0xff]
        %v4819 = vld [vmem:[%s2 + $0x100] sm:$0xff]
        %v4820 = vld [vmem:[%s2 + $0x108] sm:$0xff]
        %v4821 = vld [vmem:[%s2 + $0x110] sm:$0xff]
        %v4822 = vld [vmem:[%s2 + $0x118] sm:$0xff]
        %v4823 = vld [vmem:[%s2 + $0x120] sm:$0xff]
        %v4824 = vld [vmem:[%s2 + $0x128] sm:$0xff]
        %v4825 = vld [vmem:[%s2 + $0x130] sm:$0xff]
        %v4826 = vld [vmem:[%s2 + $0x138] sm:$0xff]
        %v4827 = vld [vmem:[%s2 + $0x140] sm:$0xff]
        %v4828 = vld [vmem:[%s2 + $0x148] sm:$0xff]
        %v4829 = vld [vmem:[%s2 + $0x150] sm:$0xff]
        %v4830 = vld [vmem:[%s2 + $0x158] sm:$0xff]
        %v4831 = vld [vmem:[%s2 + $0x160] sm:$0xff]
        %v4832 = vld [vmem:[%s2 + $0x168] sm:$0xff]
        %v4833 = vld [vmem:[%s2 + $0x170] sm:$0xff]
        %v4834 = vld [vmem:[%s2 + $0x178] sm:$0xff]
        %v4835 = vld [vmem:[%s2 + $0x180] sm:$0xff]
        %v4836 = vld [vmem:[%s2 + $0x188] sm:$0xff]
        %v4837 = vld [vmem:[%s2 + $0x190] sm:$0xff]
        %v4838 = vld [vmem:[%s2 + $0x198] sm:$0xff]
        %v4839 = vld [vmem:[%s2 + $0x1a0] sm:$0xff]
        %v4840 = vld [vmem:[%s2 + $0x1a8] sm:$0xff]
        %v4841 = vld [vmem:[%s2 + $0x1b0] sm:$0xff]
        %v4842 = vld [vmem:[%s2 + $0x1b8] sm:$0xff]
        %v4843 = vld [vmem:[%s2 + $0x1c0] sm:$0xff]
        %v4844 = vld [vmem:[%s2 + $0x1c8] sm:$0xff]
        %v4845 = vld [vmem:[%s2 + $0x1d0] sm:$0xff]
        %v4846 = vld [vmem:[%s2 + $0x1d8] sm:$0xff]
        %v4847 = vld [vmem:[%s2 + $0x1e0] sm:$0xff]
        %v4848 = vld [vmem:[%s2 + $0x1e8] sm:$0xff]
        %v4849 = vld [vmem:[%s2 + $0x1f0] sm:$0xff]
        %v4850 = vld [vmem:[%s2 + $0x1f8] sm:$0xff]
        %v4851 = vld [vmem:[%s2 + $0x200] sm:$0xff]
        %v4852 = vld [vmem:[%s2 + $0x208] sm:$0xff]
        %v4853 = vld [vmem:[%s2 + $0x210] sm:$0xff]
        %v4854 = vld [vmem:[%s2 + $0x218] sm:$0xff]
        %v4855 = vld [vmem:[%s2 + $0x220] sm:$0xff]
        %v4856 = vld [vmem:[%s2 + $0x228] sm:$0xff]
        %v4857 = vld [vmem:[%s2 + $0x230] sm:$0xff]
        %v4858 = vld [vmem:[%s2 + $0x238] sm:$0xff]
        %v4859 = vld [vmem:[%s2 + $0x240] sm:$0xff]
        %v4860 = vld [vmem:[%s2 + $0x248] sm:$0xff]
        %v4861 = vld [vmem:[%s2 + $0x250] sm:$0xff]
        %v4862 = vld [vmem:[%s2 + $0x258] sm:$0xff]
        %v4863 = vld [vmem:[%s2 + $0x260] sm:$0xff]
        %v4864 = vld [vmem:[%s2 + $0x268] sm:$0xff]
        %v4865 = vld [vmem:[%s2 + $0x270] sm:$0xff]
        %v4866 = vld [vmem:[%s2 + $0x278] sm:$0xff]
        %v4867 = vld [vmem:[%s2 + $0x280] sm:$0xff]
        %v4868 = vld [vmem:[%s2 + $0x288] sm:$0xff]
        %v4869 = vld [vmem:[%s2 + $0x290] sm:$0xff]
        %v4870 = vld [vmem:[%s2 + $0x298] sm:$0xff]
        %v4871 = vld [vmem:[%s2 + $0x2a0] sm:$0xff]
        %v4872 = vld [vmem:[%s2 + $0x2a8] sm:$0xff]
        %v4873 = vld [vmem:[%s2 + $0x2b0] sm:$0xff]
        %v4874 = vld [vmem:[%s2 + $0x2b8] sm:$0xff]
        %v4875 = vld [vmem:[%s2 + $0x2c0] sm:$0xff]
        %v4876 = vld [vmem:[%s2 + $0x2c8] sm:$0xff]
        %v4877 = vld [vmem:[%s2 + $0x2d0] sm:$0xff]
        %v4878 = vld [vmem:[%s2 + $0x2d8] sm:$0xff]
        %v4879 = vld [vmem:[%s2 + $0x2e0] sm:$0xff]
        %v4880 = vld [vmem:[%s2 + $0x2e8] sm:$0xff]
        %v4881 = vld [vmem:[%s2 + $0x2f0] sm:$0xff]
        %v4882 = vld [vmem:[%s2 + $0x2f8] sm:$0xff]
        %v4883 = vld [vmem:[%s2 + $0x300] sm:$0xff]
        %v4884 = vld [vmem:[%s2 + $0x308] sm:$0xff]
        %v4885 = vld [vmem:[%s2 + $0x310] sm:$0xff]
        %v4886 = vld [vmem:[%s2 + $0x318] sm:$0xff]
        %v4887 = vld [vmem:[%s2 + $0x320] sm:$0xff]
        %v4888 = vld [vmem:[%s2 + $0x328] sm:$0xff]
        %v4889 = vld [vmem:[%s2 + $0x330] sm:$0xff]
        %v4890 = vld [vmem:[%s2 + $0x338] sm:$0xff]
        %v4891 = vld [vmem:[%s2 + $0x340] sm:$0xff]
        %v4892 = vld [vmem:[%s2 + $0x348] sm:$0xff]
        %v4893 = vld [vmem:[%s2 + $0x350] sm:$0xff]
        %v4894 = vld [vmem:[%s2 + $0x358] sm:$0xff]
        %v4895 = vld [vmem:[%s2 + $0x360] sm:$0xff]
        %v4896 = vld [vmem:[%s2 + $0x368] sm:$0xff]
        %v4897 = vld [vmem:[%s2 + $0x370] sm:$0xff]
        %v4898 = vld [vmem:[%s2 + $0x378] sm:$0xff]
        %v4899 = vld [vmem:[%s2 + $0x380] sm:$0xff]
        %v4900 = vld [vmem:[%s2 + $0x388] sm:$0xff]
        %v4901 = vld [vmem:[%s2 + $0x390] sm:$0xff]
        %v4902 = vld [vmem:[%s2 + $0x398] sm:$0xff]
        %v4903 = vld [vmem:[%s2 + $0x3a0] sm:$0xff]
        %v4904 = vld [vmem:[%s2 + $0x3a8] sm:$0xff]
        %v4905 = vld [vmem:[%s2 + $0x3b0] sm:$0xff]
        %v4906 = vld [vmem:[%s2 + $0x3b8] sm:$0xff]
        %v4907 = vld [vmem:[%s2 + $0x3c0] sm:$0xff]
        %v4908 = vld [vmem:[%s2 + $0x3c8] sm:$0xff]
        %v4909 = vld [vmem:[%s2 + $0x3d0] sm:$0xff]
        %v4910 = vld [vmem:[%s2 + $0x3d8] sm:$0xff]
        %v4911 = vld [vmem:[%s2 + $0x3e0] sm:$0xff]
        %v4912 = vld [vmem:[%s2 + $0x3e8] sm:$0xff]
        %v4913 = vld [vmem:[%s2 + $0x3f0] sm:$0xff]
        %v4914 = vld [vmem:[%s2 + $0x3f8] sm:$0xff]
        %v4915 = vld [vmem:[%s3] sm:$0x1]
        %v4917 = vperm.slane %v4915, 0
        %4919 = vmatpush.msra.mxu0 %v4802
        %4920 = vmatpush.msra.mxu0 %v4801
        %4921 = vmatpush.msra.mxu0 %v4800
        %4922 = vmatpush.msra.mxu0 %v4799
        %4923 = vmatpush.msra.mxu0 %v4798
        %4924 = vmatpush.msra.mxu0 %v4797
        %4925 = vmatpush.msra.mxu0 %v4796
        %4926 = vmatpush.msra.mxu0 %v4795
        %4927 = vmatpush.msra.mxu0 %v4794
        %4928 = vmatpush.msra.mxu0 %v4793
        %4929 = vmatpush.msra.mxu0 %v4792
        %4930 = vmatpush.msra.mxu0 %v4791
        %4931 = vmatpush.msra.mxu0 %v4790
        %4932 = vmatpush.msra.mxu0 %v4789
        %4933 = vmatpush.msra.mxu0 %v4788
        %4934 = vmatpush.msra.mxu0 %v4787
        %4935 = vmatmul.f32.gmra.mxu0 %v4571
        %v4936 = vpop.f32.mrf.mxu0
        %v4937 = vadd.f32 %v4917, %v4936
        %4938 = vmatmul.f32.gmra.mxu0 %v4579
        %v4939 = vpop.f32.mrf.mxu0
        %v4940 = vadd.f32 %v4917, %v4939
        %4941 = vmatmul.f32.gmra.mxu0 %v4587
        %v4942 = vpop.f32.mrf.mxu0
        %v4943 = vadd.f32 %v4917, %v4942
        %4944 = vmatmul.f32.gmra.mxu0 %v4595
        %v4945 = vpop.f32.mrf.mxu0
        %v4946 = vadd.f32 %v4917, %v4945
        %4947 = vmatmul.f32.gmra.mxu0 %v4603
        %v4948 = vpop.f32.mrf.mxu0
        %v4949 = vadd.f32 %v4917, %v4948
        %4950 = vmatmul.f32.gmra.mxu0 %v4611
        %v4951 = vpop.f32.mrf.mxu0
        %v4952 = vadd.f32 %v4917, %v4951
        %4953 = vmatmul.f32.gmra.mxu0 %v4619
        %v4954 = vpop.f32.mrf.mxu0
        %v4955 = vadd.f32 %v4917, %v4954
        %4956 = vmatmul.f32.gmra.mxu0 %v4627
        %v4957 = vpop.f32.mrf.mxu0
        %v4958 = vadd.f32 %v4917, %v4957
        %4959 = vmatmul.f32.gmra.mxu0 %v4635
        %v4960 = vpop.f32.mrf.mxu0
        %v4961 = vadd.f32 %v4917, %v4960
        %4962 = vmatmul.f32.gmra.mxu0 %v4643
        %v4963 = vpop.f32.mrf.mxu0
        %v4964 = vadd.f32 %v4917, %v4963
        %4965 = vmatmul.f32.gmra.mxu0 %v4651
        %v4966 = vpop.f32.mrf.mxu0
        %v4967 = vadd.f32 %v4917, %v4966
        %4968 = vmatmul.f32.gmra.mxu0 %v4659
        %v4969 = vpop.f32.mrf.mxu0
        %v4970 = vadd.f32 %v4917, %v4969
        %4971 = vmatmul.f32.gmra.mxu0 %v4667
        %v4972 = vpop.f32.mrf.mxu0
        %v4973 = vadd.f32 %v4917, %v4972
        %4974 = vmatmul.f32.gmra.mxu0 %v4675
        %v4975 = vpop.f32.mrf.mxu0
        %v4976 = vadd.f32 %v4917, %v4975
        %4977 = vmatmul.f32.gmra.mxu0 %v4683
        %v4978 = vpop.f32.mrf.mxu0
        %v4979 = vadd.f32 %v4917, %v4978
        %4980 = vmatmul.f32.gmra.mxu0 %v4691
        %v4981 = vpop.f32.mrf.mxu0
        %v4982 = vadd.f32 %v4917, %v4981
        %4983 = vmatmul.f32.gmra.mxu0 %v4699
        %v4984 = vpop.f32.mrf.mxu0
        %v4985 = vadd.f32 %v4917, %v4984
        %4986 = vmatmul.f32.gmra.mxu0 %v4707
        %v4987 = vpop.f32.mrf.mxu0
        %v4988 = vadd.f32 %v4917, %v4987
        %4989 = vmatmul.f32.gmra.mxu0 %v4715
        %v4990 = vpop.f32.mrf.mxu0
        %v4991 = vadd.f32 %v4917, %v4990
        %4992 = vmatmul.f32.gmra.mxu0 %v4723
        %v4993 = vpop.f32.mrf.mxu0
        %v4994 = vadd.f32 %v4917, %v4993
        %4995 = vmatmul.f32.gmra.mxu0 %v4731
        %v4996 = vpop.f32.mrf.mxu0
        %v4997 = vadd.f32 %v4917, %v4996
        %4998 = vmatmul.f32.gmra.mxu0 %v4739
        %v4999 = vpop.f32.mrf.mxu0
        %v5000 = vadd.f32 %v4917, %v4999
        %5001 = vmatmul.f32.gmra.mxu0 %v4747
        %v5002 = vpop.f32.mrf.mxu0
        %v5003 = vadd.f32 %v4917, %v5002
        %5004 = vmatmul.f32.gmra.mxu0 %v4755
        %v5005 = vpop.f32.mrf.mxu0
        %v5006 = vadd.f32 %v4917, %v5005
        %5007 = vmatmul.f32.gmra.mxu0 %v4763
        %v5008 = vpop.f32.mrf.mxu0
        %v5009 = vadd.f32 %v4917, %v5008
        %5010 = vmatmul.f32.gmra.mxu0 %v4771
        %v5011 = vpop.f32.mrf.mxu0
        %v5012 = vadd.f32 %v4917, %v5011
        %5013 = vmatmul.f32.gmra.mxu0 %v4779
        %v5014 = vpop.f32.mrf.mxu0
        %v5015 = vadd.f32 %v4917, %v5014
        %5016 = vdwg.mxu0
        %5017 = vmatpush.msra.mxu0 %v4818
        %5018 = vmatpush.msra.mxu0 %v4817
        %5019 = vmatpush.msra.mxu0 %v4816
        %5020 = vmatpush.msra.mxu0 %v4815
        %5021 = vmatpush.msra.mxu0 %v4814
        %5022 = vmatpush.msra.mxu0 %v4813
        %5023 = vmatpush.msra.mxu0 %v4812
        %5024 = vmatpush.msra.mxu0 %v4811
        %5025 = vmatpush.msra.mxu0 %v4810
        %5026 = vmatpush.msra.mxu0 %v4809
        %5027 = vmatpush.msra.mxu0 %v4808
        %5028 = vmatpush.msra.mxu0 %v4807
        %5029 = vmatpush.msra.mxu0 %v4806
        %5030 = vmatpush.msra.mxu0 %v4805
        %5031 = vmatpush.msra.mxu0 %v4804
        %5032 = vmatpush.msra.mxu0 %v4803
        %5033 = vmatmul.f32.gmra.mxu0 %v4572
        %v5034 = vpop.f32.mrf.mxu0
        %v5035 = vadd.f32 %v4937, %v5034
        %5036 = vmatmul.f32.gmra.mxu0 %v4580
        %v5037 = vpop.f32.mrf.mxu0
        %v5038 = vadd.f32 %v4940, %v5037
        %5039 = vmatmul.f32.gmra.mxu0 %v4588
        %v5040 = vpop.f32.mrf.mxu0
        %v5041 = vadd.f32 %v4943, %v5040
        %5042 = vmatmul.f32.gmra.mxu0 %v4596
        %v5043 = vpop.f32.mrf.mxu0
        %v5044 = vadd.f32 %v4946, %v5043
        %5045 = vmatmul.f32.gmra.mxu0 %v4604
        %v5046 = vpop.f32.mrf.mxu0
        %v5047 = vadd.f32 %v4949, %v5046
        %5048 = vmatmul.f32.gmra.mxu0 %v4612
        %v5049 = vpop.f32.mrf.mxu0
        %v5050 = vadd.f32 %v4952, %v5049
        %5051 = vmatmul.f32.gmra.mxu0 %v4620
        %v5052 = vpop.f32.mrf.mxu0
        %v5053 = vadd.f32 %v4955, %v5052
        %5054 = vmatmul.f32.gmra.mxu0 %v4628
        %v5055 = vpop.f32.mrf.mxu0
        %v5056 = vadd.f32 %v4958, %v5055
        %5057 = vmatmul.f32.gmra.mxu0 %v4636
        %v5058 = vpop.f32.mrf.mxu0
        %v5059 = vadd.f32 %v4961, %v5058
        %5060 = vmatmul.f32.gmra.mxu0 %v4644
        %v5061 = vpop.f32.mrf.mxu0
        %v5062 = vadd.f32 %v4964, %v5061
        %5063 = vmatmul.f32.gmra.mxu0 %v4652
        %v5064 = vpop.f32.mrf.mxu0
        %v5065 = vadd.f32 %v4967, %v5064
        %5066 = vmatmul.f32.gmra.mxu0 %v4660
        %v5067 = vpop.f32.mrf.mxu0
        %v5068 = vadd.f32 %v4970, %v5067
        %5069 = vmatmul.f32.gmra.mxu0 %v4668
        %v5070 = vpop.f32.mrf.mxu0
        %v5071 = vadd.f32 %v4973, %v5070
        %5072 = vmatmul.f32.gmra.mxu0 %v4676
        %v5073 = vpop.f32.mrf.mxu0
        %v5074 = vadd.f32 %v4976, %v5073
        %5075 = vmatmul.f32.gmra.mxu0 %v4684
        %v5076 = vpop.f32.mrf.mxu0
        %v5077 = vadd.f32 %v4979, %v5076
        %5078 = vmatmul.f32.gmra.mxu0 %v4692
        %v5079 = vpop.f32.mrf.mxu0
        %v5080 = vadd.f32 %v4982, %v5079
        %5081 = vmatmul.f32.gmra.mxu0 %v4700
        %v5082 = vpop.f32.mrf.mxu0
        %v5083 = vadd.f32 %v4985, %v5082
        %5084 = vmatmul.f32.gmra.mxu0 %v4708
        %v5085 = vpop.f32.mrf.mxu0
        %v5086 = vadd.f32 %v4988, %v5085
        %5087 = vmatmul.f32.gmra.mxu0 %v4716
        %v5088 = vpop.f32.mrf.mxu0
        %v5089 = vadd.f32 %v4991, %v5088
        %5090 = vmatmul.f32.gmra.mxu0 %v4724
        %v5091 = vpop.f32.mrf.mxu0
        %v5092 = vadd.f32 %v4994, %v5091
        %5093 = vmatmul.f32.gmra.mxu0 %v4732
        %v5094 = vpop.f32.mrf.mxu0
        %v5095 = vadd.f32 %v4997, %v5094
        %5096 = vmatmul.f32.gmra.mxu0 %v4740
        %v5097 = vpop.f32.mrf.mxu0
        %v5098 = vadd.f32 %v5000, %v5097
        %5099 = vmatmul.f32.gmra.mxu0 %v4748
        %v5100 = vpop.f32.mrf.mxu0
        %v5101 = vadd.f32 %v5003, %v5100
        %5102 = vmatmul.f32.gmra.mxu0 %v4756
        %v5103 = vpop.f32.mrf.mxu0
        %v5104 = vadd.f32 %v5006, %v5103
        %5105 = vmatmul.f32.gmra.mxu0 %v4764
        %v5106 = vpop.f32.mrf.mxu0
        %v5107 = vadd.f32 %v5009, %v5106
        %5108 = vmatmul.f32.gmra.mxu0 %v4772
        %v5109 = vpop.f32.mrf.mxu0
        %v5110 = vadd.f32 %v5012, %v5109
        %5111 = vmatmul.f32.gmra.mxu0 %v4780
        %v5112 = vpop.f32.mrf.mxu0
        %v5113 = vadd.f32 %v5015, %v5112
        %5114 = vdwg.mxu0
        %5115 = vmatpush.msra.mxu0 %v4834
        %5116 = vmatpush.msra.mxu0 %v4833
        %5117 = vmatpush.msra.mxu0 %v4832
        %5118 = vmatpush.msra.mxu0 %v4831
        %5119 = vmatpush.msra.mxu0 %v4830
        %5120 = vmatpush.msra.mxu0 %v4829
        %5121 = vmatpush.msra.mxu0 %v4828
        %5122 = vmatpush.msra.mxu0 %v4827
        %5123 = vmatpush.msra.mxu0 %v4826
        %5124 = vmatpush.msra.mxu0 %v4825
        %5125 = vmatpush.msra.mxu0 %v4824
        %5126 = vmatpush.msra.mxu0 %v4823
        %5127 = vmatpush.msra.mxu0 %v4822
        %5128 = vmatpush.msra.mxu0 %v4821
        %5129 = vmatpush.msra.mxu0 %v4820
        %5130 = vmatpush.msra.mxu0 %v4819
        %5131 = vmatmul.f32.gmra.mxu0 %v4573
        %v5132 = vpop.f32.mrf.mxu0
        %v5133 = vadd.f32 %v5035, %v5132
        %5134 = vmatmul.f32.gmra.mxu0 %v4581
        %v5135 = vpop.f32.mrf.mxu0
        %v5136 = vadd.f32 %v5038, %v5135
        %5137 = vmatmul.f32.gmra.mxu0 %v4589
        %v5138 = vpop.f32.mrf.mxu0
        %v5139 = vadd.f32 %v5041, %v5138
        %5140 = vmatmul.f32.gmra.mxu0 %v4597
        %v5141 = vpop.f32.mrf.mxu0
        %v5142 = vadd.f32 %v5044, %v5141
        %5143 = vmatmul.f32.gmra.mxu0 %v4605
        %v5144 = vpop.f32.mrf.mxu0
        %v5145 = vadd.f32 %v5047, %v5144
        %5146 = vmatmul.f32.gmra.mxu0 %v4613
        %v5147 = vpop.f32.mrf.mxu0
        %v5148 = vadd.f32 %v5050, %v5147
        %5149 = vmatmul.f32.gmra.mxu0 %v4621
        %v5150 = vpop.f32.mrf.mxu0
        %v5151 = vadd.f32 %v5053, %v5150
        %5152 = vmatmul.f32.gmra.mxu0 %v4629
        %v5153 = vpop.f32.mrf.mxu0
        %v5154 = vadd.f32 %v5056, %v5153
        %5155 = vmatmul.f32.gmra.mxu0 %v4637
        %v5156 = vpop.f32.mrf.mxu0
        %v5157 = vadd.f32 %v5059, %v5156
        %5158 = vmatmul.f32.gmra.mxu0 %v4645
        %v5159 = vpop.f32.mrf.mxu0
        %v5160 = vadd.f32 %v5062, %v5159
        %5161 = vmatmul.f32.gmra.mxu0 %v4653
        %v5162 = vpop.f32.mrf.mxu0
        %v5163 = vadd.f32 %v5065, %v5162
        %5164 = vmatmul.f32.gmra.mxu0 %v4661
        %v5165 = vpop.f32.mrf.mxu0
        %v5166 = vadd.f32 %v5068, %v5165
        %5167 = vmatmul.f32.gmra.mxu0 %v4669
        %v5168 = vpop.f32.mrf.mxu0
        %v5169 = vadd.f32 %v5071, %v5168
        %5170 = vmatmul.f32.gmra.mxu0 %v4677
        %v5171 = vpop.f32.mrf.mxu0
        %v5172 = vadd.f32 %v5074, %v5171
        %5173 = vmatmul.f32.gmra.mxu0 %v4685
        %v5174 = vpop.f32.mrf.mxu0
        %v5175 = vadd.f32 %v5077, %v5174
        %5176 = vmatmul.f32.gmra.mxu0 %v4693
        %v5177 = vpop.f32.mrf.mxu0
        %v5178 = vadd.f32 %v5080, %v5177
        %5179 = vmatmul.f32.gmra.mxu0 %v4701
        %v5180 = vpop.f32.mrf.mxu0
        %v5181 = vadd.f32 %v5083, %v5180
        %5182 = vmatmul.f32.gmra.mxu0 %v4709
        %v5183 = vpop.f32.mrf.mxu0
        %v5184 = vadd.f32 %v5086, %v5183
        %5185 = vmatmul.f32.gmra.mxu0 %v4717
        %v5186 = vpop.f32.mrf.mxu0
        %v5187 = vadd.f32 %v5089, %v5186
        %5188 = vmatmul.f32.gmra.mxu0 %v4725
        %v5189 = vpop.f32.mrf.mxu0
        %v5190 = vadd.f32 %v5092, %v5189
        %5191 = vmatmul.f32.gmra.mxu0 %v4733
        %v5192 = vpop.f32.mrf.mxu0
        %v5193 = vadd.f32 %v5095, %v5192
        %5194 = vmatmul.f32.gmra.mxu0 %v4741
        %v5195 = vpop.f32.mrf.mxu0
        %v5196 = vadd.f32 %v5098, %v5195
        %5197 = vmatmul.f32.gmra.mxu0 %v4749
        %v5198 = vpop.f32.mrf.mxu0
        %v5199 = vadd.f32 %v5101, %v5198
        %5200 = vmatmul.f32.gmra.mxu0 %v4757
        %v5201 = vpop.f32.mrf.mxu0
        %v5202 = vadd.f32 %v5104, %v5201
        %5203 = vmatmul.f32.gmra.mxu0 %v4765
        %v5204 = vpop.f32.mrf.mxu0
        %v5205 = vadd.f32 %v5107, %v5204
        %5206 = vmatmul.f32.gmra.mxu0 %v4773
        %v5207 = vpop.f32.mrf.mxu0
        %v5208 = vadd.f32 %v5110, %v5207
        %5209 = vmatmul.f32.gmra.mxu0 %v4781
        %v5210 = vpop.f32.mrf.mxu0
        %v5211 = vadd.f32 %v5113, %v5210
        %5212 = vdwg.mxu0
        %5213 = vmatpush.msra.mxu0 %v4850
        %5214 = vmatpush.msra.mxu0 %v4849
        %5215 = vmatpush.msra.mxu0 %v4848
        %5216 = vmatpush.msra.mxu0 %v4847
        %5217 = vmatpush.msra.mxu0 %v4846
        %5218 = vmatpush.msra.mxu0 %v4845
        %5219 = vmatpush.msra.mxu0 %v4844
        %5220 = vmatpush.msra.mxu0 %v4843
        %5221 = vmatpush.msra.mxu0 %v4842
        %5222 = vmatpush.msra.mxu0 %v4841
        %5223 = vmatpush.msra.mxu0 %v4840
        %5224 = vmatpush.msra.mxu0 %v4839
        %5225 = vmatpush.msra.mxu0 %v4838
        %5226 = vmatpush.msra.mxu0 %v4837
        %5227 = vmatpush.msra.mxu0 %v4836
        %5228 = vmatpush.msra.mxu0 %v4835
        %5229 = vmatmul.f32.gmra.mxu0 %v4574
        %v5230 = vpop.f32.mrf.mxu0
        %v5231 = vadd.f32 %v5133, %v5230
        %5232 = vmatmul.f32.gmra.mxu0 %v4582
        %v5233 = vpop.f32.mrf.mxu0
        %v5234 = vadd.f32 %v5136, %v5233
        %5235 = vmatmul.f32.gmra.mxu0 %v4590
        %v5236 = vpop.f32.mrf.mxu0
        %v5237 = vadd.f32 %v5139, %v5236
        %5238 = vmatmul.f32.gmra.mxu0 %v4598
        %v5239 = vpop.f32.mrf.mxu0
        %v5240 = vadd.f32 %v5142, %v5239
        %5241 = vmatmul.f32.gmra.mxu0 %v4606
        %v5242 = vpop.f32.mrf.mxu0
        %v5243 = vadd.f32 %v5145, %v5242
        %5244 = vmatmul.f32.gmra.mxu0 %v4614
        %v5245 = vpop.f32.mrf.mxu0
        %v5246 = vadd.f32 %v5148, %v5245
        %5247 = vmatmul.f32.gmra.mxu0 %v4622
        %v5248 = vpop.f32.mrf.mxu0
        %v5249 = vadd.f32 %v5151, %v5248
        %5250 = vmatmul.f32.gmra.mxu0 %v4630
        %v5251 = vpop.f32.mrf.mxu0
        %v5252 = vadd.f32 %v5154, %v5251
        %5253 = vmatmul.f32.gmra.mxu0 %v4638
        %v5254 = vpop.f32.mrf.mxu0
        %v5255 = vadd.f32 %v5157, %v5254
        %5256 = vmatmul.f32.gmra.mxu0 %v4646
        %v5257 = vpop.f32.mrf.mxu0
        %v5258 = vadd.f32 %v5160, %v5257
        %5259 = vmatmul.f32.gmra.mxu0 %v4654
        %v5260 = vpop.f32.mrf.mxu0
        %v5261 = vadd.f32 %v5163, %v5260
        %5262 = vmatmul.f32.gmra.mxu0 %v4662
        %v5263 = vpop.f32.mrf.mxu0
        %v5264 = vadd.f32 %v5166, %v5263
        %5265 = vmatmul.f32.gmra.mxu0 %v4670
        %v5266 = vpop.f32.mrf.mxu0
        %v5267 = vadd.f32 %v5169, %v5266
        %5268 = vmatmul.f32.gmra.mxu0 %v4678
        %v5269 = vpop.f32.mrf.mxu0
        %v5270 = vadd.f32 %v5172, %v5269
        %5271 = vmatmul.f32.gmra.mxu0 %v4686
        %v5272 = vpop.f32.mrf.mxu0
        %v5273 = vadd.f32 %v5175, %v5272
        %5274 = vmatmul.f32.gmra.mxu0 %v4694
        %v5275 = vpop.f32.mrf.mxu0
        %v5276 = vadd.f32 %v5178, %v5275
        %5277 = vmatmul.f32.gmra.mxu0 %v4702
        %v5278 = vpop.f32.mrf.mxu0
        %v5279 = vadd.f32 %v5181, %v5278
        %5280 = vmatmul.f32.gmra.mxu0 %v4710
        %v5281 = vpop.f32.mrf.mxu0
        %v5282 = vadd.f32 %v5184, %v5281
        %5283 = vmatmul.f32.gmra.mxu0 %v4718
        %v5284 = vpop.f32.mrf.mxu0
        %v5285 = vadd.f32 %v5187, %v5284
        %5286 = vmatmul.f32.gmra.mxu0 %v4726
        %v5287 = vpop.f32.mrf.mxu0
        %v5288 = vadd.f32 %v5190, %v5287
        %5289 = vmatmul.f32.gmra.mxu0 %v4734
        %v5290 = vpop.f32.mrf.mxu0
        %v5291 = vadd.f32 %v5193, %v5290
        %5292 = vmatmul.f32.gmra.mxu0 %v4742
        %v5293 = vpop.f32.mrf.mxu0
        %v5294 = vadd.f32 %v5196, %v5293
        %5295 = vmatmul.f32.gmra.mxu0 %v4750
        %v5296 = vpop.f32.mrf.mxu0
        %v5297 = vadd.f32 %v5199, %v5296
        %5298 = vmatmul.f32.gmra.mxu0 %v4758
        %v5299 = vpop.f32.mrf.mxu0
        %v5300 = vadd.f32 %v5202, %v5299
        %5301 = vmatmul.f32.gmra.mxu0 %v4766
        %v5302 = vpop.f32.mrf.mxu0
        %v5303 = vadd.f32 %v5205, %v5302
        %5304 = vmatmul.f32.gmra.mxu0 %v4774
        %v5305 = vpop.f32.mrf.mxu0
        %v5306 = vadd.f32 %v5208, %v5305
        %5307 = vmatmul.f32.gmra.mxu0 %v4782
        %v5308 = vpop.f32.mrf.mxu0
        %v5309 = vadd.f32 %v5211, %v5308
        %5310 = vdwg.mxu0
        %5311 = vmatpush.msra.mxu0 %v4866
        %5312 = vmatpush.msra.mxu0 %v4865
        %5313 = vmatpush.msra.mxu0 %v4864
        %5314 = vmatpush.msra.mxu0 %v4863
        %5315 = vmatpush.msra.mxu0 %v4862
        %5316 = vmatpush.msra.mxu0 %v4861
        %5317 = vmatpush.msra.mxu0 %v4860
        %5318 = vmatpush.msra.mxu0 %v4859
        %5319 = vmatpush.msra.mxu0 %v4858
        %5320 = vmatpush.msra.mxu0 %v4857
        %5321 = vmatpush.msra.mxu0 %v4856
        %5322 = vmatpush.msra.mxu0 %v4855
        %5323 = vmatpush.msra.mxu0 %v4854
        %5324 = vmatpush.msra.mxu0 %v4853
        %5325 = vmatpush.msra.mxu0 %v4852
        %5326 = vmatpush.msra.mxu0 %v4851
        %5327 = vmatmul.f32.gmra.mxu0 %v4575
        %v5328 = vpop.f32.mrf.mxu0
        %v5329 = vadd.f32 %v5231, %v5328
        %5330 = vmatmul.f32.gmra.mxu0 %v4583
        %v5331 = vpop.f32.mrf.mxu0
        %v5332 = vadd.f32 %v5234, %v5331
        %5333 = vmatmul.f32.gmra.mxu0 %v4591
        %v5334 = vpop.f32.mrf.mxu0
        %v5335 = vadd.f32 %v5237, %v5334
        %5336 = vmatmul.f32.gmra.mxu0 %v4599
        %v5337 = vpop.f32.mrf.mxu0
        %v5338 = vadd.f32 %v5240, %v5337
        %5339 = vmatmul.f32.gmra.mxu0 %v4607
        %v5340 = vpop.f32.mrf.mxu0
        %v5341 = vadd.f32 %v5243, %v5340
        %5342 = vmatmul.f32.gmra.mxu0 %v4615
        %v5343 = vpop.f32.mrf.mxu0
        %v5344 = vadd.f32 %v5246, %v5343
        %5345 = vmatmul.f32.gmra.mxu0 %v4623
        %v5346 = vpop.f32.mrf.mxu0
        %v5347 = vadd.f32 %v5249, %v5346
        %5348 = vmatmul.f32.gmra.mxu0 %v4631
        %v5349 = vpop.f32.mrf.mxu0
        %v5350 = vadd.f32 %v5252, %v5349
        %5351 = vmatmul.f32.gmra.mxu0 %v4639
        %v5352 = vpop.f32.mrf.mxu0
        %v5353 = vadd.f32 %v5255, %v5352
        %5354 = vmatmul.f32.gmra.mxu0 %v4647
        %v5355 = vpop.f32.mrf.mxu0
        %v5356 = vadd.f32 %v5258, %v5355
        %5357 = vmatmul.f32.gmra.mxu0 %v4655
        %v5358 = vpop.f32.mrf.mxu0
        %v5359 = vadd.f32 %v5261, %v5358
        %5360 = vmatmul.f32.gmra.mxu0 %v4663
        %v5361 = vpop.f32.mrf.mxu0
        %v5362 = vadd.f32 %v5264, %v5361
        %5363 = vmatmul.f32.gmra.mxu0 %v4671
        %v5364 = vpop.f32.mrf.mxu0
        %v5365 = vadd.f32 %v5267, %v5364
        %5366 = vmatmul.f32.gmra.mxu0 %v4679
        %v5367 = vpop.f32.mrf.mxu0
        %v5368 = vadd.f32 %v5270, %v5367
        %5369 = vmatmul.f32.gmra.mxu0 %v4687
        %v5370 = vpop.f32.mrf.mxu0
        %v5371 = vadd.f32 %v5273, %v5370
        %5372 = vmatmul.f32.gmra.mxu0 %v4695
        %v5373 = vpop.f32.mrf.mxu0
        %v5374 = vadd.f32 %v5276, %v5373
        %5375 = vmatmul.f32.gmra.mxu0 %v4703
        %v5376 = vpop.f32.mrf.mxu0
        %v5377 = vadd.f32 %v5279, %v5376
        %5378 = vmatmul.f32.gmra.mxu0 %v4711
        %v5379 = vpop.f32.mrf.mxu0
        %v5380 = vadd.f32 %v5282, %v5379
        %5381 = vmatmul.f32.gmra.mxu0 %v4719
        %v5382 = vpop.f32.mrf.mxu0
        %v5383 = vadd.f32 %v5285, %v5382
        %5384 = vmatmul.f32.gmra.mxu0 %v4727
        %v5385 = vpop.f32.mrf.mxu0
        %v5386 = vadd.f32 %v5288, %v5385
        %5387 = vmatmul.f32.gmra.mxu0 %v4735
        %v5388 = vpop.f32.mrf.mxu0
        %v5389 = vadd.f32 %v5291, %v5388
        %5390 = vmatmul.f32.gmra.mxu0 %v4743
        %v5391 = vpop.f32.mrf.mxu0
        %v5392 = vadd.f32 %v5294, %v5391
        %5393 = vmatmul.f32.gmra.mxu0 %v4751
        %v5394 = vpop.f32.mrf.mxu0
        %v5395 = vadd.f32 %v5297, %v5394
        %5396 = vmatmul.f32.gmra.mxu0 %v4759
        %v5397 = vpop.f32.mrf.mxu0
        %v5398 = vadd.f32 %v5300, %v5397
        %5399 = vmatmul.f32.gmra.mxu0 %v4767
        %v5400 = vpop.f32.mrf.mxu0
        %v5401 = vadd.f32 %v5303, %v5400
        %5402 = vmatmul.f32.gmra.mxu0 %v4775
        %v5403 = vpop.f32.mrf.mxu0
        %v5404 = vadd.f32 %v5306, %v5403
        %5405 = vmatmul.f32.gmra.mxu0 %v4783
        %v5406 = vpop.f32.mrf.mxu0
        %v5407 = vadd.f32 %v5309, %v5406
        %5408 = vdwg.mxu0
        %5409 = vmatpush.msra.mxu0 %v4882
        %5410 = vmatpush.msra.mxu0 %v4881
        %5411 = vmatpush.msra.mxu0 %v4880
        %5412 = vmatpush.msra.mxu0 %v4879
        %5413 = vmatpush.msra.mxu0 %v4878
        %5414 = vmatpush.msra.mxu0 %v4877
        %5415 = vmatpush.msra.mxu0 %v4876
        %5416 = vmatpush.msra.mxu0 %v4875
        %5417 = vmatpush.msra.mxu0 %v4874
        %5418 = vmatpush.msra.mxu0 %v4873
        %5419 = vmatpush.msra.mxu0 %v4872
        %5420 = vmatpush.msra.mxu0 %v4871
        %5421 = vmatpush.msra.mxu0 %v4870
        %5422 = vmatpush.msra.mxu0 %v4869
        %5423 = vmatpush.msra.mxu0 %v4868
        %5424 = vmatpush.msra.mxu0 %v4867
        %5425 = vmatmul.f32.gmra.mxu0 %v4576
        %v5426 = vpop.f32.mrf.mxu0
        %v5427 = vadd.f32 %v5329, %v5426
        %5428 = vmatmul.f32.gmra.mxu0 %v4584
        %v5429 = vpop.f32.mrf.mxu0
        %v5430 = vadd.f32 %v5332, %v5429
        %5431 = vmatmul.f32.gmra.mxu0 %v4592
        %v5432 = vpop.f32.mrf.mxu0
        %v5433 = vadd.f32 %v5335, %v5432
        %5434 = vmatmul.f32.gmra.mxu0 %v4600
        %v5435 = vpop.f32.mrf.mxu0
        %v5436 = vadd.f32 %v5338, %v5435
        %5437 = vmatmul.f32.gmra.mxu0 %v4608
        %v5438 = vpop.f32.mrf.mxu0
        %v5439 = vadd.f32 %v5341, %v5438
        %5440 = vmatmul.f32.gmra.mxu0 %v4616
        %v5441 = vpop.f32.mrf.mxu0
        %v5442 = vadd.f32 %v5344, %v5441
        %5443 = vmatmul.f32.gmra.mxu0 %v4624
        %v5444 = vpop.f32.mrf.mxu0
        %v5445 = vadd.f32 %v5347, %v5444
        %5446 = vmatmul.f32.gmra.mxu0 %v4632
        %v5447 = vpop.f32.mrf.mxu0
        %v5448 = vadd.f32 %v5350, %v5447
        %5449 = vmatmul.f32.gmra.mxu0 %v4640
        %v5450 = vpop.f32.mrf.mxu0
        %v5451 = vadd.f32 %v5353, %v5450
        %5452 = vmatmul.f32.gmra.mxu0 %v4648
        %v5453 = vpop.f32.mrf.mxu0
        %v5454 = vadd.f32 %v5356, %v5453
        %5455 = vmatmul.f32.gmra.mxu0 %v4656
        %v5456 = vpop.f32.mrf.mxu0
        %v5457 = vadd.f32 %v5359, %v5456
        %5458 = vmatmul.f32.gmra.mxu0 %v4664
        %v5459 = vpop.f32.mrf.mxu0
        %v5460 = vadd.f32 %v5362, %v5459
        %5461 = vmatmul.f32.gmra.mxu0 %v4672
        %v5462 = vpop.f32.mrf.mxu0
        %v5463 = vadd.f32 %v5365, %v5462
        %5464 = vmatmul.f32.gmra.mxu0 %v4680
        %v5465 = vpop.f32.mrf.mxu0
        %v5466 = vadd.f32 %v5368, %v5465
        %5467 = vmatmul.f32.gmra.mxu0 %v4688
        %v5468 = vpop.f32.mrf.mxu0
        %v5469 = vadd.f32 %v5371, %v5468
        %5470 = vmatmul.f32.gmra.mxu0 %v4696
        %v5471 = vpop.f32.mrf.mxu0
        %v5472 = vadd.f32 %v5374, %v5471
        %5473 = vmatmul.f32.gmra.mxu0 %v4704
        %v5474 = vpop.f32.mrf.mxu0
        %v5475 = vadd.f32 %v5377, %v5474
        %5476 = vmatmul.f32.gmra.mxu0 %v4712
        %v5477 = vpop.f32.mrf.mxu0
        %v5478 = vadd.f32 %v5380, %v5477
        %5479 = vmatmul.f32.gmra.mxu0 %v4720
        %v5480 = vpop.f32.mrf.mxu0
        %v5481 = vadd.f32 %v5383, %v5480
        %5482 = vmatmul.f32.gmra.mxu0 %v4728
        %v5483 = vpop.f32.mrf.mxu0
        %v5484 = vadd.f32 %v5386, %v5483
        %5485 = vmatmul.f32.gmra.mxu0 %v4736
        %v5486 = vpop.f32.mrf.mxu0
        %v5487 = vadd.f32 %v5389, %v5486
        %5488 = vmatmul.f32.gmra.mxu0 %v4744
        %v5489 = vpop.f32.mrf.mxu0
        %v5490 = vadd.f32 %v5392, %v5489
        %5491 = vmatmul.f32.gmra.mxu0 %v4752
        %v5492 = vpop.f32.mrf.mxu0
        %v5493 = vadd.f32 %v5395, %v5492
        %5494 = vmatmul.f32.gmra.mxu0 %v4760
        %v5495 = vpop.f32.mrf.mxu0
        %v5496 = vadd.f32 %v5398, %v5495
        %5497 = vmatmul.f32.gmra.mxu0 %v4768
        %v5498 = vpop.f32.mrf.mxu0
        %v5499 = vadd.f32 %v5401, %v5498
        %5500 = vmatmul.f32.gmra.mxu0 %v4776
        %v5501 = vpop.f32.mrf.mxu0
        %v5502 = vadd.f32 %v5404, %v5501
        %5503 = vmatmul.f32.gmra.mxu0 %v4784
        %v5504 = vpop.f32.mrf.mxu0
        %v5505 = vadd.f32 %v5407, %v5504
        %5506 = vdwg.mxu0
        %5507 = vmatpush.msra.mxu0 %v4898
        %5508 = vmatpush.msra.mxu0 %v4897
        %5509 = vmatpush.msra.mxu0 %v4896
        %5510 = vmatpush.msra.mxu0 %v4895
        %5511 = vmatpush.msra.mxu0 %v4894
        %5512 = vmatpush.msra.mxu0 %v4893
        %5513 = vmatpush.msra.mxu0 %v4892
        %5514 = vmatpush.msra.mxu0 %v4891
        %5515 = vmatpush.msra.mxu0 %v4890
        %5516 = vmatpush.msra.mxu0 %v4889
        %5517 = vmatpush.msra.mxu0 %v4888
        %5518 = vmatpush.msra.mxu0 %v4887
        %5519 = vmatpush.msra.mxu0 %v4886
        %5520 = vmatpush.msra.mxu0 %v4885
        %5521 = vmatpush.msra.mxu0 %v4884
        %5522 = vmatpush.msra.mxu0 %v4883
        %5523 = vmatmul.f32.gmra.mxu0 %v4577
        %v5524 = vpop.f32.mrf.mxu0
        %v5525 = vadd.f32 %v5427, %v5524
        %5526 = vmatmul.f32.gmra.mxu0 %v4585
        %v5527 = vpop.f32.mrf.mxu0
        %v5528 = vadd.f32 %v5430, %v5527
        %5529 = vmatmul.f32.gmra.mxu0 %v4593
        %v5530 = vpop.f32.mrf.mxu0
        %v5531 = vadd.f32 %v5433, %v5530
        %5532 = vmatmul.f32.gmra.mxu0 %v4601
        %v5533 = vpop.f32.mrf.mxu0
        %v5534 = vadd.f32 %v5436, %v5533
        %5535 = vmatmul.f32.gmra.mxu0 %v4609
        %v5536 = vpop.f32.mrf.mxu0
        %v5537 = vadd.f32 %v5439, %v5536
        %5538 = vmatmul.f32.gmra.mxu0 %v4617
        %v5539 = vpop.f32.mrf.mxu0
        %v5540 = vadd.f32 %v5442, %v5539
        %5541 = vmatmul.f32.gmra.mxu0 %v4625
        %v5542 = vpop.f32.mrf.mxu0
        %v5543 = vadd.f32 %v5445, %v5542
        %5544 = vmatmul.f32.gmra.mxu0 %v4633
        %v5545 = vpop.f32.mrf.mxu0
        %v5546 = vadd.f32 %v5448, %v5545
        %5547 = vmatmul.f32.gmra.mxu0 %v4641
        %v5548 = vpop.f32.mrf.mxu0
        %v5549 = vadd.f32 %v5451, %v5548
        %5550 = vmatmul.f32.gmra.mxu0 %v4649
        %v5551 = vpop.f32.mrf.mxu0
        %v5552 = vadd.f32 %v5454, %v5551
        %5553 = vmatmul.f32.gmra.mxu0 %v4657
        %v5554 = vpop.f32.mrf.mxu0
        %v5555 = vadd.f32 %v5457, %v5554
        %5556 = vmatmul.f32.gmra.mxu0 %v4665
        %v5557 = vpop.f32.mrf.mxu0
        %v5558 = vadd.f32 %v5460, %v5557
        %5559 = vmatmul.f32.gmra.mxu0 %v4673
        %v5560 = vpop.f32.mrf.mxu0
        %v5561 = vadd.f32 %v5463, %v5560
        %5562 = vmatmul.f32.gmra.mxu0 %v4681
        %v5563 = vpop.f32.mrf.mxu0
        %v5564 = vadd.f32 %v5466, %v5563
        %5565 = vmatmul.f32.gmra.mxu0 %v4689
        %v5566 = vpop.f32.mrf.mxu0
        %v5567 = vadd.f32 %v5469, %v5566
        %5568 = vmatmul.f32.gmra.mxu0 %v4697
        %v5569 = vpop.f32.mrf.mxu0
        %v5570 = vadd.f32 %v5472, %v5569
        %5571 = vmatmul.f32.gmra.mxu0 %v4705
        %v5572 = vpop.f32.mrf.mxu0
        %v5573 = vadd.f32 %v5475, %v5572
        %5574 = vmatmul.f32.gmra.mxu0 %v4713
        %v5575 = vpop.f32.mrf.mxu0
        %v5576 = vadd.f32 %v5478, %v5575
        %5577 = vmatmul.f32.gmra.mxu0 %v4721
        %v5578 = vpop.f32.mrf.mxu0
        %v5579 = vadd.f32 %v5481, %v5578
        %5580 = vmatmul.f32.gmra.mxu0 %v4729
        %v5581 = vpop.f32.mrf.mxu0
        %v5582 = vadd.f32 %v5484, %v5581
        %5583 = vmatmul.f32.gmra.mxu0 %v4737
        %v5584 = vpop.f32.mrf.mxu0
        %v5585 = vadd.f32 %v5487, %v5584
        %5586 = vmatmul.f32.gmra.mxu0 %v4745
        %v5587 = vpop.f32.mrf.mxu0
        %v5588 = vadd.f32 %v5490, %v5587
        %5589 = vmatmul.f32.gmra.mxu0 %v4753
        %v5590 = vpop.f32.mrf.mxu0
        %v5591 = vadd.f32 %v5493, %v5590
        %5592 = vmatmul.f32.gmra.mxu0 %v4761
        %v5593 = vpop.f32.mrf.mxu0
        %v5594 = vadd.f32 %v5496, %v5593
        %5595 = vmatmul.f32.gmra.mxu0 %v4769
        %v5596 = vpop.f32.mrf.mxu0
        %v5597 = vadd.f32 %v5499, %v5596
        %5598 = vmatmul.f32.gmra.mxu0 %v4777
        %v5599 = vpop.f32.mrf.mxu0
        %v5600 = vadd.f32 %v5502, %v5599
        %5601 = vmatmul.f32.gmra.mxu0 %v4785
        %v5602 = vpop.f32.mrf.mxu0
        %v5603 = vadd.f32 %v5505, %v5602
        %5604 = vdwg.mxu0
        %5605 = vmatpush.msra.mxu0 %v4914
        %5606 = vmatpush.msra.mxu0 %v4913
        %5607 = vmatpush.msra.mxu0 %v4912
        %5608 = vmatpush.msra.mxu0 %v4911
        %5609 = vmatpush.msra.mxu0 %v4910
        %5610 = vmatpush.msra.mxu0 %v4909
        %5611 = vmatpush.msra.mxu0 %v4908
        %5612 = vmatpush.msra.mxu0 %v4907
        %5613 = vmatpush.msra.mxu0 %v4906
        %5614 = vmatpush.msra.mxu0 %v4905
        %5615 = vmatpush.msra.mxu0 %v4904
        %5616 = vmatpush.msra.mxu0 %v4903
        %5617 = vmatpush.msra.mxu0 %v4902
        %5618 = vmatpush.msra.mxu0 %v4901
        %5619 = vmatpush.msra.mxu0 %v4900
        %5620 = vmatpush.msra.mxu0 %v4899
        %5621 = vmatmul.f32.gmra.mxu0 %v4578
        %v5622 = vpop.f32.mrf.mxu0
        %v5623 = vadd.f32 %v5525, %v5622
        %5624 = vmatmul.f32.gmra.mxu0 %v4586
        %v5625 = vpop.f32.mrf.mxu0
        %v5626 = vadd.f32 %v5528, %v5625
        %5627 = vmatmul.f32.gmra.mxu0 %v4594
        %v5628 = vpop.f32.mrf.mxu0
        %v5629 = vadd.f32 %v5531, %v5628
        %5630 = vmatmul.f32.gmra.mxu0 %v4602
        %v5631 = vpop.f32.mrf.mxu0
        %v5632 = vadd.f32 %v5534, %v5631
        %5633 = vmatmul.f32.gmra.mxu0 %v4610
        %v5634 = vpop.f32.mrf.mxu0
        %v5635 = vadd.f32 %v5537, %v5634
        %5636 = vmatmul.f32.gmra.mxu0 %v4618
        %v5637 = vpop.f32.mrf.mxu0
        %v5638 = vadd.f32 %v5540, %v5637
        %5639 = vmatmul.f32.gmra.mxu0 %v4626
        %v5640 = vpop.f32.mrf.mxu0
        %v5641 = vadd.f32 %v5543, %v5640
        %5642 = vmatmul.f32.gmra.mxu0 %v4634
        %v5643 = vpop.f32.mrf.mxu0
        %v5644 = vadd.f32 %v5546, %v5643
        %5645 = vmatmul.f32.gmra.mxu0 %v4642
        %v5646 = vpop.f32.mrf.mxu0
        %v5647 = vadd.f32 %v5549, %v5646
        %5648 = vmatmul.f32.gmra.mxu0 %v4650
        %v5649 = vpop.f32.mrf.mxu0
        %v5650 = vadd.f32 %v5552, %v5649
        %5651 = vmatmul.f32.gmra.mxu0 %v4658
        %v5652 = vpop.f32.mrf.mxu0
        %v5653 = vadd.f32 %v5555, %v5652
        %5654 = vmatmul.f32.gmra.mxu0 %v4666
        %v5655 = vpop.f32.mrf.mxu0
        %v5656 = vadd.f32 %v5558, %v5655
        %5657 = vmatmul.f32.gmra.mxu0 %v4674
        %v5658 = vpop.f32.mrf.mxu0
        %v5659 = vadd.f32 %v5561, %v5658
        %5660 = vmatmul.f32.gmra.mxu0 %v4682
        %v5661 = vpop.f32.mrf.mxu0
        %v5662 = vadd.f32 %v5564, %v5661
        %5663 = vmatmul.f32.gmra.mxu0 %v4690
        %v5664 = vpop.f32.mrf.mxu0
        %v5665 = vadd.f32 %v5567, %v5664
        %5666 = vmatmul.f32.gmra.mxu0 %v4698
        %v5667 = vpop.f32.mrf.mxu0
        %v5668 = vadd.f32 %v5570, %v5667
        %5669 = vmatmul.f32.gmra.mxu0 %v4706
        %v5670 = vpop.f32.mrf.mxu0
        %v5671 = vadd.f32 %v5573, %v5670
        %5672 = vmatmul.f32.gmra.mxu0 %v4714
        %v5673 = vpop.f32.mrf.mxu0
        %v5674 = vadd.f32 %v5576, %v5673
        %5675 = vmatmul.f32.gmra.mxu0 %v4722
        %v5676 = vpop.f32.mrf.mxu0
        %v5677 = vadd.f32 %v5579, %v5676
        %5678 = vmatmul.f32.gmra.mxu0 %v4730
        %v5679 = vpop.f32.mrf.mxu0
        %v5680 = vadd.f32 %v5582, %v5679
        %5681 = vmatmul.f32.gmra.mxu0 %v4738
        %v5682 = vpop.f32.mrf.mxu0
        %v5683 = vadd.f32 %v5585, %v5682
        %5684 = vmatmul.f32.gmra.mxu0 %v4746
        %v5685 = vpop.f32.mrf.mxu0
        %v5686 = vadd.f32 %v5588, %v5685
        %5687 = vmatmul.f32.gmra.mxu0 %v4754
        %v5688 = vpop.f32.mrf.mxu0
        %v5689 = vadd.f32 %v5591, %v5688
        %5690 = vmatmul.f32.gmra.mxu0 %v4762
        %v5691 = vpop.f32.mrf.mxu0
        %v5692 = vadd.f32 %v5594, %v5691
        %5693 = vmatmul.f32.gmra.mxu0 %v4770
        %v5694 = vpop.f32.mrf.mxu0
        %v5695 = vadd.f32 %v5597, %v5694
        %5696 = vmatmul.f32.gmra.mxu0 %v4778
        %v5697 = vpop.f32.mrf.mxu0
        %v5698 = vadd.f32 %v5600, %v5697
        %5699 = vmatmul.f32.gmra.mxu0 %v4786
        %v5700 = vpop.f32.mrf.mxu0
        %v5701 = vadd.f32 %v5603, %v5700
        %5702 = vdwg.mxu0
        %vm5703 = vcmp.gt.f32.partialorder %v5623, 0.0
        %vm5704 = vcmp.gt.f32.partialorder %v5626, 0.0
        %vm5705 = vcmp.gt.f32.partialorder %v5629, 0.0
        %vm5706 = vcmp.gt.f32.partialorder %v5632, 0.0
        %vm5707 = vcmp.gt.f32.partialorder %v5635, 0.0
        %vm5708 = vcmp.gt.f32.partialorder %v5638, 0.0
        %vm5709 = vcmp.gt.f32.partialorder %v5641, 0.0
        %vm5710 = vcmp.gt.f32.partialorder %v5644, 0.0
        %vm5711 = vcmp.gt.f32.partialorder %v5647, 0.0
        %vm5712 = vcmp.gt.f32.partialorder %v5650, 0.0
        %vm5713 = vcmp.gt.f32.partialorder %v5653, 0.0
        %vm5714 = vcmp.gt.f32.partialorder %v5656, 0.0
        %vm5715 = vcmp.gt.f32.partialorder %v5659, 0.0
        %vm5716 = vcmp.gt.f32.partialorder %v5662, 0.0
        %vm5717 = vcmp.gt.f32.partialorder %v5665, 0.0
        %vm5718 = vcmp.gt.f32.partialorder %v5668, 0.0
        %vm5719 = vcmp.gt.f32.partialorder %v5671, 0.0
        %vm5720 = vcmp.gt.f32.partialorder %v5674, 0.0
        %vm5721 = vcmp.gt.f32.partialorder %v5677, 0.0
        %vm5722 = vcmp.gt.f32.partialorder %v5680, 0.0
        %vm5723 = vcmp.gt.f32.partialorder %v5683, 0.0
        %vm5724 = vcmp.gt.f32.partialorder %v5686, 0.0
        %vm5725 = vcmp.gt.f32.partialorder %v5689, 0.0
        %vm5726 = vcmp.gt.f32.partialorder %v5692, 0.0
        %vm5727 = vcmp.gt.f32.partialorder %v5695, 0.0
        %vm5728 = vcmp.gt.f32.partialorder %v5698, 0.0
        %vm5729 = vcmp.gt.f32.partialorder %v5701, 0.0
        %v5730 = vmul.f32 %v5623, 0.8664262
        %v5731 = vmul.f32 %v5626, 0.8664262
        %v5732 = vmul.f32 %v5629, 0.8664262
        %v5733 = vmul.f32 %v5632, 0.8664262
        %v5734 = vmul.f32 %v5635, 0.8664262
        %v5735 = vmul.f32 %v5638, 0.8664262
        %v5736 = vmul.f32 %v5641, 0.8664262
        %v5737 = vmul.f32 %v5644, 0.8664262
        %v5738 = vmul.f32 %v5647, 0.8664262
        %v5739 = vmul.f32 %v5650, 0.8664262
        %v5740 = vmul.f32 %v5653, 0.8664262
        %v5741 = vmul.f32 %v5656, 0.8664262
        %v5742 = vmul.f32 %v5659, 0.8664262
        %v5743 = vmul.f32 %v5662, 0.8664262
        %v5744 = vmul.f32 %v5665, 0.8664262
        %v5745 = vmul.f32 %v5668, 0.8664262
        %v5746 = vmul.f32 %v5671, 0.8664262
        %v5747 = vmul.f32 %v5674, 0.8664262
        %v5748 = vmul.f32 %v5677, 0.8664262
        %v5749 = vmul.f32 %v5680, 0.8664262
        %v5750 = vmul.f32 %v5683, 0.8664262
        %v5751 = vmul.f32 %v5686, 0.8664262
        %v5752 = vmul.f32 %v5689, 0.8664262
        %v5753 = vmul.f32 %v5692, 0.8664262
        %v5754 = vmul.f32 %v5695, 0.8664262
        %v5755 = vmul.f32 %v5698, 0.8664262
        %v5756 = vmul.f32 %v5701, 0.8664262
        %v5757 = vsel %vm5703, %v5623, %v5730
        %v5758 = vsel %vm5704, %v5626, %v5731
        %v5759 = vsel %vm5705, %v5629, %v5732
        %v5760 = vsel %vm5706, %v5632, %v5733
        %v5761 = vsel %vm5707, %v5635, %v5734
        %v5762 = vsel %vm5708, %v5638, %v5735
        %v5763 = vsel %vm5709, %v5641, %v5736
        %v5764 = vsel %vm5710, %v5644, %v5737
        %v5765 = vsel %vm5711, %v5647, %v5738
        %v5766 = vsel %vm5712, %v5650, %v5739
        %v5767 = vsel %vm5713, %v5653, %v5740
        %v5768 = vsel %vm5714, %v5656, %v5741
        %v5769 = vsel %vm5715, %v5659, %v5742
        %v5770 = vsel %vm5716, %v5662, %v5743
        %v5771 = vsel %vm5717, %v5665, %v5744
        %v5772 = vsel %vm5718, %v5668, %v5745
        %v5773 = vsel %vm5719, %v5671, %v5746
        %v5774 = vsel %vm5720, %v5674, %v5747
        %v5775 = vsel %vm5721, %v5677, %v5748
        %v5776 = vsel %vm5722, %v5680, %v5749
        %v5777 = vsel %vm5723, %v5683, %v5750
        %v5778 = vsel %vm5724, %v5686, %v5751
        %v5779 = vsel %vm5725, %v5689, %v5752
        %v5780 = vsel %vm5726, %v5692, %v5753
        %v5781 = vsel %vm5727, %v5695, %v5754
        %v5782 = vsel %vm5728, %v5698, %v5755
        %v5783 = vsel %vm5729, %v5701, %v5756
        %5784 = vst [vmem:[%s219] sm:$0xff] %v5757
        %5785 = vst [vmem:[%s219 + $0x8] sm:$0xff] %v5758
        %5786 = vst [vmem:[%s219 + $0x10] sm:$0xff] %v5759
        %5787 = vst [vmem:[%s219 + $0x18] sm:$0xff] %v5760
        %5788 = vst [vmem:[%s219 + $0x20] sm:$0xff] %v5761
        %5789 = vst [vmem:[%s219 + $0x28] sm:$0xff] %v5762
        %5790 = vst [vmem:[%s219 + $0x30] sm:$0xff] %v5763
        %5791 = vst [vmem:[%s219 + $0x38] sm:$0xff] %v5764
        %5792 = vst [vmem:[%s219 + $0x40] sm:$0xff] %v5765
        %5793 = vst [vmem:[%s219 + $0x48] sm:$0xff] %v5766
        %5794 = vst [vmem:[%s219 + $0x50] sm:$0xff] %v5767
        %5795 = vst [vmem:[%s219 + $0x58] sm:$0xff] %v5768
        %5796 = vst [vmem:[%s219 + $0x60] sm:$0xff] %v5769
        %5797 = vst [vmem:[%s219 + $0x68] sm:$0xff] %v5770
        %5798 = vst [vmem:[%s219 + $0x70] sm:$0xff] %v5771
        %5799 = vst [vmem:[%s219 + $0x78] sm:$0xff] %v5772
        %5800 = vst [vmem:[%s219 + $0x80] sm:$0xff] %v5773
        %5801 = vst [vmem:[%s219 + $0x88] sm:$0xff] %v5774
        %5802 = vst [vmem:[%s219 + $0x90] sm:$0xff] %v5775
        %5803 = vst [vmem:[%s219 + $0x98] sm:$0xff] %v5776
        %5804 = vst [vmem:[%s219 + $0xa0] sm:$0xff] %v5777
        %5805 = vst [vmem:[%s219 + $0xa8] sm:$0xff] %v5778
        %5806 = vst [vmem:[%s219 + $0xb0] sm:$0xff] %v5779
        %5807 = vst [vmem:[%s219 + $0xb8] sm:$0xff] %v5780
        %5808 = vst [vmem:[%s219 + $0xc0] sm:$0xff] %v5781
        %5809 = vst [vmem:[%s219 + $0xc8] sm:$0xff] %v5782
        %5810 = vst [vmem:[%s219 + $0xd0] sm:$0xff] %v5783
        %s5811 = sand.u32 %s134, 1
        %s5812 = scalar_lea.sflag [#allocation4], %s5811
        %s5813 = sand.u32 %s134, 1
        %s5814 = smul.addr %s5813, 216
        %s5815 = scalar_lea.vmem [#allocation3], %s5814
        // Predicated region
        $region37: #{tpu_custom_call.1} parent=35 // pred_check
          %p5816 = pneg %p144
        $region38: #{tpu_custom_call.1} parent=35 // pred_check_branch
          %5818 = sbr.rel (%p5816) target = $region40
        $region39: #{tpu_custom_call.1} parent=35 // pred_region
          %s5819 = smul.u32 9, %s23
          %5821 = vsyncadd %s5812, 0
          %s5822 = smul.addr %s5819, 3
          %s5823 = smul.addr %s22, 27
          %s5824 = sadd.s32 %s5822, %s5823
          %s5825 = smul.addr %s5824, 8
          %s5826 = scalar_lea.hbm %s4, %s5825
          %s5827 = sshll.u32 %s5815, 4
          %s5828 = int_to_ptr.vmem [resolvable:$true] %s5827
          %s5829 = sshll.u32 %s5826, 4
          %s5830 = int_to_ptr.hbm [resolvable:$true] %s5829
          %5835 = dma.vmem_to_hbm [thread:$0]  %s5828, 3456, %s5830, %s5812, 128, 128, 8
        $region40: #{tpu_custom_call.1} parent=35 // pred_fallthru
          _
      $region36: #{tpu_custom_call.1} parent=5 // pred_fallthru
        _
      %p5836 = scmp.le.s32.totalorder 2, %s13
      // Predicated region
      $region41: #{tpu_custom_call.1} parent=5 // pred_check
        %p5837 = pneg %p5836
      $region42: #{tpu_custom_call.1} parent=5 // pred_check_branch
        %5839 = sbr.rel (%p5837) target = $region44
      $region43: #{tpu_custom_call.1} parent=5 // pred_region
        %s5840 = ssub.s32 %s13, 2
        // Predicated region
        $region45: #{tpu_custom_call.1} parent=43 // pred_check
          %p5841 = pneg %p150
        $region46: #{tpu_custom_call.1} parent=43 // pred_check_branch
          %5843 = sbr.rel (%p5841) target = $region48
        $region47: #{tpu_custom_call.1} parent=43 // pred_region
          %s5844 = sand.u32 %s135, 1
          %s5845 = scalar_lea.sflag [#allocation4], %s5844
          %s5846 = sand.u32 %s135, 1
          %s5847 = smul.addr %s5846, 216
          %s5848 = scalar_lea.vmem [#allocation3], %s5847
          %5850 = dma.done %s5845, 3456
        $region48: #{tpu_custom_call.1} parent=43 // pred_fallthru
          _
      $region44: #{tpu_custom_call.1} parent=5 // pred_fallthru
        _
    $region6: #{tpu_custom_call.1} parent=1 // loop_footer
      %s17 = sadd.s32 1, %s13
    $region7: #{tpu_custom_call.1} parent=1 // loop_footer_branch
      %12 = sbr.rel target = $region3
    $region8: #{tpu_custom_call.1} parent=1 // loop_exit
      _
    %5851 = vsyncpa [#allocation4], 1
    %s5852 = scalar_lea.sflag [#allocation4], 1
    %5853 = vsyncpa %s5852, 1

</llo_original>
